<compile_context>
chip_gen: v7x
topology: tpu7x:2x2x1
jax: 0.10.0
libtpu: 0.0.40
codegen_flags: <defaults>
</compile_context>

<pallas_src>
import functools

import jax
import jax.numpy as jnp
from jax import lax
from jax.experimental import pallas as pl
from jax.experimental.pallas import tpu as pltpu

EPS = 1e-5        # InPlaceABNSync default
LANE = 128        # channel axis padded to a multiple of the lane width


def _round_up(x, m):
    return (x + m - 1) // m * m


# --------------------------------- kernel ------------------------------------
def _bottleneck_kernel(x_ref, w1_ref, b1_ref, w2_ref, b2_ref, w3_ref, b3_ref,
                       out_ref, t1_ref, *, H, dilation):
    """One (batch, row-tile) step of the fused bottleneck.

    x_ref : (TH+2*pad, WH, Cp)  f32  input rows incl. row halo, W pre-padded
    w*_ref: bf16 conv weights with the BN scale already folded in
    b*_ref: (1, C) f32 BN biases
    out   : (TH, W, C4p)        f32
    t1    : (TH+2*pad, WH, Pp)  bf16 scratch = conv2 input (zero-padded halo)
    """
    pad = dilation
    THp, WH, Cp = x_ref.shape
    TH, W, C4p = out_ref.shape
    Pp = w2_ref.shape[2]
    r = pl.program_id(1)

    # ---- conv1 (1x1) + bias + relu  (computed over the halo too) ------------
    xb = x_ref[...].astype(jnp.bfloat16)                    # not kept live
    c1 = jnp.dot(xb.reshape(THp * WH, Cp), w1_ref[...],
                 preferred_element_type=jnp.float32)
    h1 = jnp.maximum(c1 + b1_ref[...], 0.0).reshape(THp, WH, Pp)

    # conv2's zero padding lives in h1 space: mask out-of-image rows and the
    # W halo columns instead of zero-filling the whole scratch buffer.
    row = lax.broadcasted_iota(jnp.int32, (THp, WH, 1), 0)
    col = lax.broadcasted_iota(jnp.int32, (THp, WH, 1), 1)
    g = r * TH - pad + row
    valid = (g >= 0) & (g < H) & (col >= pad) & (col < pad + W)
    h1 = jnp.where(valid, h1, 0.0)
    t1_ref[...] = h1.astype(t1_ref.dtype)                   # one aligned store

    # ---- conv2 (3x3, stride=1, dilated) + bias + relu ------------------------
    acc = None
    for kh in range(3):
        for kw in range(3):
            patch = t1_ref[kh * dilation:kh * dilation + TH,
                           kw * dilation:kw * dilation + W, :]
            part = jnp.dot(patch.reshape(TH * W, Pp), w2_ref[kh, kw],
                           preferred_element_type=jnp.float32)
            acc = part if acc is None else acc + part       # seed from tap 0
    h2 = jnp.maximum(acc + b2_ref[...], 0.0).astype(jnp.bfloat16)

    # ---- conv3 (1x1) + bias + residual + relu --------------------------------
    c3 = jnp.dot(h2, w3_ref[...], preferred_element_type=jnp.float32)
    resid = x_ref[pad:pad + TH, pad:pad + W, :].reshape(TH * W, Cp)  # re-read
    out = jnp.maximum(c3 + b3_ref[...] + resid, 0.0)
    out_ref[...] = out.reshape(TH, W, C4p).astype(out_ref.dtype)


# ----------------------------- host-side wrapper ------------------------------
def _fold_and_pad_params(params, Cp, Pp, C4p):
    """Fold BN scales into conv weights, zero-pad channels to lane multiples,
    cast weights to bf16.  Done once on the host."""
    Cin, P = params["w1"].shape
    s1, b1 = params["s1"].reshape(-1), params["b1"].reshape(-1)
    s2, b2 = params["s2"].reshape(-1), params["b2"].reshape(-1)
    s3, b3 = params["s3"].reshape(-1), params["b3"].reshape(-1)

    w1 = params["w1"] * s1[None, :]                    # (Cin, P)
    w2 = params["w2"] * s2[None, None, None, :]        # (3, 3, P, P)  HWIO
    w3 = params["w3"] * s3[None, :]                    # (P, 4P)

    w1p = jnp.zeros((Cp, Pp), jnp.float32).at[:Cin, :P].set(w1)
    w2p = jnp.zeros((3, 3, Pp, Pp), jnp.float32).at[:, :, :P, :P].set(w2)
    w3p = jnp.zeros((Pp, C4p), jnp.float32).at[:P, :4 * P].set(w3)
    b1p = jnp.zeros((1, Pp), jnp.float32).at[0, :P].set(b1)
    b2p = jnp.zeros((1, Pp), jnp.float32).at[0, :P].set(b2)
    b3p = jnp.zeros((1, C4p), jnp.float32).at[0, :4 * P].set(b3)
    return (w1p.astype(jnp.bfloat16), b1p,
            w2p.astype(jnp.bfloat16), b2p,
            w3p.astype(jnp.bfloat16), b3p)


def bottleneck_forward(x_nchw, params, dilation=1, row_tile=8):
    """Bottleneck forward (stride=1, downsample=None => inplanes == 4*planes)."""
    N, Cin, H, W = x_nchw.shape
    P = params["w1"].shape[1]
    assert Cin == 4 * P, "residual add requires inplanes == 4*planes"

    pad = dilation
    Cp = _round_up(Cin, LANE)
    Pp = _round_up(P, LANE)
    C4p = _round_up(4 * P, LANE)
    assert Cp == C4p

    # Row tile: aim for >= ~256 spatial positions per step (MXU M dim), but
    # never below the caller's row_tile hint; largest divisor of H that fits.
    target = max(row_tile, -(-256 // W))
    TH = max(d for d in range(1, min(target, H) + 1) if H % d == 0)
    R = H // TH
    THp = TH + 2 * pad
    WH = _round_up(W + 2 * pad, 8)           # sublane-aligned padded width

    w1p, b1p, w2p, b2p, w3p, b3p = _fold_and_pad_params(params, Cp, Pp, C4p)

    # NCHW -> NHWC, channel pad, spatial zero pad, overlapping halo row tiles.
    # TODO(synk): in a fully-NHWC model this layout/halo prep would be fused
    # with the producing layer (or replaced by element-indexed reads).
    x = jnp.transpose(x_nchw, (0, 2, 3, 1))
    x = jnp.pad(x, ((0, 0), (pad, pad), (pad, WH - W - pad), (0, Cp - Cin)))
    x_tiles = jnp.stack([x[:, r * TH:r * TH + THp] for r in range(R)], axis=1)
    # x_tiles: (N, R, THp, WH, Cp)

    kernel = functools.partial(_bottleneck_kernel, H=H, dilation=dilation)

    # per-step VMEM estimate: double-buffered in/out tiles + resident weights
    # + bf16 staging scratch.  Cap at 64 MiB (v7x physical VMEM).
    est = (2 * (THp * WH * Cp * 4 + TH * W * C4p * 4)
           + 2 * ((Cp * Pp + 9 * Pp * Pp + Pp * C4p) * 2 + (2 * Pp + C4p) * 4)
           + THp * WH * Pp * 2)
    vmem_limit = int(min(64 * 2**20, max(32 * 2**20, 2 * est)))

    flops = 2 * N * H * W * (Cp * Pp + 9 * Pp * Pp + Pp * C4p)
    bytes_accessed = (int(x_tiles.size) * 4 + N * H * W * C4p * 4
                      + (Cp * Pp + 9 * Pp * Pp + Pp * C4p) * 2)

    out_nhwc = pl.pallas_call(
        kernel,
        out_shape=jax.ShapeDtypeStruct((N, H, W, C4p), x_nchw.dtype),
        grid_spec=pltpu.PrefetchScalarGridSpec(
            num_scalar_prefetch=0,
            grid=(N, R),
            in_specs=[
                pl.BlockSpec((None, None, THp, WH, Cp),
                             lambda n, r: (n, r, 0, 0, 0)),         # x tile
                pl.BlockSpec((Cp, Pp), lambda n, r: (0, 0)),        # w1
                pl.BlockSpec((1, Pp), lambda n, r: (0, 0)),         # b1
                pl.BlockSpec((3, 3, Pp, Pp),
                             lambda n, r: (0, 0, 0, 0)),            # w2
                pl.BlockSpec((1, Pp), lambda n, r: (0, 0)),         # b2
                pl.BlockSpec((Pp, C4p), lambda n, r: (0, 0)),       # w3
                pl.BlockSpec((1, C4p), lambda n, r: (0, 0)),        # b3
            ],
            out_specs=pl.BlockSpec((None, TH, W, C4p),
                                   lambda n, r: (n, r, 0, 0)),
            scratch_shapes=[pltpu.VMEM((THp, WH, Pp), jnp.bfloat16)],
        ),
        compiler_params=pltpu.CompilerParams(
            dimension_semantics=("parallel", "parallel"),
            vmem_limit_bytes=vmem_limit),
        cost_estimate=pl.CostEstimate(
            flops=int(flops), transcendentals=0,
            bytes_accessed=int(bytes_accessed)),
    )(x_tiles, w1p, b1p, w2p, b2p, w3p, b3p)

    out = out_nhwc[..., :4 * P]                    # drop channel padding
    return jnp.transpose(out, (0, 3, 1, 2))        # NHWC -> NCHW


# ----------------------- deterministic parameter setup ------------------------
def make_params(key, inplanes, planes):
    ks = jax.random.split(key, 12)

    def bn_affine(kg, kb, km, kv, c):
        gamma = 0.5 + jax.random.uniform(kg, (c,), jnp.float32)
        beta = 0.1 * jax.random.normal(kb, (c,), jnp.float32)
        mean = 0.1 * jax.random.normal(km, (c,), jnp.float32)
        var = 0.5 + jnp.abs(jax.random.normal(kv, (c,), jnp.float32))
        scale = gamma / jnp.sqrt(var + EPS)
        bias = beta - mean * scale
        return scale.reshape(1, c), bias.reshape(1, c)

    w1 = 0.1 * jax.random.normal(ks[0], (inplanes, planes), jnp.float32)
    w2 = 0.1 * jax.random.normal(ks[1], (3, 3, planes, planes), jnp.float32)
    w3 = 0.1 * jax.random.normal(ks[2], (planes, 4 * planes), jnp.float32)
    s1, b1 = bn_affine(ks[3], ks[4], ks[5], ks[6], planes)
    s2, b2 = bn_affine(ks[7], ks[8], ks[9], ks[10], planes)
    s3, b3 = bn_affine(ks[11], ks[3], ks[7], ks[0], 4 * planes)
    return dict(w1=w1, s1=s1, b1=b1, w2=w2, s2=s2, b2=b2, w3=w3, s3=s3, b3=b3)


# ------------------------------ pure-JAX reference ----------------------------
def reference(x_nchw, p, dilation=1):
    def conv(x, w_hwio, padding, dil):
        return jax.lax.conv_general_dilated(
            x, w_hwio, window_strides=(1, 1),
            padding=[(padding, padding), (padding, padding)],
            rhs_dilation=(dil, dil),
            dimension_numbers=("NCHW", "HWIO", "NCHW"))

    def bn(x, scale, bias):
        return x * scale.reshape(1, -1, 1, 1) + bias.reshape(1, -1, 1, 1)

    cin, planes_ = p["w1"].shape
    o = conv(x_nchw, p["w1"].reshape(1, 1, cin, planes_), 0, 1)
    o = jax.nn.relu(bn(o, p["s1"], p["b1"]))
    o = conv(o, p["w2"], dilation, dilation)
    o = jax.nn.relu(bn(o, p["s2"], p["b2"]))
    o = conv(o, p["w3"].reshape(1, 1, planes_, 4 * planes_), 0, 1)
    o = bn(o, p["s3"], p["b3"])
    return jax.nn.relu(o + x_nchw)


if __name__ == "__main__":
    planes = 4
    inplanes = planes * 4          # downsample=None => inplanes == planes*4
    N, H, W = 2, 16, 16
    dilation = 1                   # dilation * multi_grid

    key = jax.random.PRNGKey(0)
    kx, kp = jax.random.split(key)
    x = jax.random.normal(kx, (N, inplanes, H, W), jnp.float32)  # NCHW input
    params = make_params(kp, inplanes, planes)

    out = bottleneck_forward(x, params, dilation=dilation, row_tile=8)
    out = jax.block_until_ready(out)

    ref = reference(x, params, dilation=dilation)
    assert out.shape == (N, 4 * planes, H, W)
    err = jnp.max(jnp.abs(out - ref))
    # bf16 matmul operands (f32 accumulation) vs. a pure-f32 XLA reference.
    assert jnp.allclose(out, ref, atol=2e-2, rtol=2e-2), f"max abs err = {err}"
    print("KERNEL_OK")
</pallas_src>

<mosaic_0001>
module attributes {stable_mosaic.version = 11 : i64} {
  func.func @_bottleneck_kernel(%arg0: i32, %arg1: i32, %arg2: memref<1x1x18x24x128xf32, #tpu.memory_space<vmem>>, %arg3: memref<128x128xbf16, #tpu.memory_space<vmem>>, %arg4: memref<1x128xf32, #tpu.memory_space<vmem>>, %arg5: memref<3x3x128x128xbf16, #tpu.memory_space<vmem>>, %arg6: memref<1x128xf32, #tpu.memory_space<vmem>>, %arg7: memref<128x128xbf16, #tpu.memory_space<vmem>>, %arg8: memref<1x128xf32, #tpu.memory_space<vmem>>, %arg9: memref<1x16x16x128xf32, #tpu.memory_space<vmem>>, %arg10: memref<18x24x128xbf16, #tpu.memory_space<vmem>>) attributes {dimension_semantics = [#tpu.dimension_semantics<parallel>, #tpu.dimension_semantics<parallel>], iteration_bounds = array<i64: 2, 1>, scalar_prefetch = 0 : i64, scratch_operands = 1 : i64, tpu.core_type = #tpu.core_type<tc>, window_params = [{transform_indices = @transform_0, window_bounds = array<i64: 1, 1, 18, 24, 128>}, {pipeline_mode = #tpu.pipeline_mode<synchronous>, transform_indices = @transform_1, window_bounds = array<i64: 128, 128>}, {pipeline_mode = #tpu.pipeline_mode<synchronous>, transform_indices = @transform_2, window_bounds = array<i64: 1, 128>}, {pipeline_mode = #tpu.pipeline_mode<synchronous>, transform_indices = @transform_3, window_bounds = array<i64: 3, 3, 128, 128>}, {pipeline_mode = #tpu.pipeline_mode<synchronous>, transform_indices = @transform_4, window_bounds = array<i64: 1, 128>}, {pipeline_mode = #tpu.pipeline_mode<synchronous>, transform_indices = @transform_5, window_bounds = array<i64: 128, 128>}, {pipeline_mode = #tpu.pipeline_mode<synchronous>, transform_indices = @transform_6, window_bounds = array<i64: 1, 128>}, {transform_indices = @transform_7, window_bounds = array<i64: 1, 16, 16, 128>}]} {
    %c0 = arith.constant 0 : index
    %c0_0 = arith.constant 0 : index
    %c0_1 = arith.constant 0 : index
    %c0_2 = arith.constant 0 : index
    %c0_3 = arith.constant 0 : index
    %0 = vector.load %arg2[%c0, %c0_0, %c0_1, %c0_2, %c0_3] : memref<1x1x18x24x128xf32, #tpu.memory_space<vmem>>, vector<1x1x18x24x128xf32>
    %1 = vector.shape_cast %0 : vector<1x1x18x24x128xf32> to vector<18x24x128xf32>
    %2 = arith.truncf %1 : vector<18x24x128xf32> to vector<18x24x128xbf16>
    %3 = vector.shape_cast %2 : vector<18x24x128xbf16> to vector<432x128xbf16>
    %c0_4 = arith.constant 0 : index
    %c0_5 = arith.constant 0 : index
    %4 = vector.load %arg3[%c0_4, %c0_5] : memref<128x128xbf16, #tpu.memory_space<vmem>>, vector<128x128xbf16>
    %cst = arith.constant dense<0.000000e+00> : vector<432x128xf32>
    %5 = tpu.matmul %3, %4, %cst {dimension_numbers = #tpu.dot_dimension_numbers<[1], [0], [0], [1], [0, 0, 1, 1], [], []>} : vector<432x128xbf16>, vector<128x128xbf16>, vector<432x128xf32> -> vector<432x128xf32>
    %c0_6 = arith.constant 0 : index
    %c0_7 = arith.constant 0 : index
    %6 = vector.load %arg4[%c0_6, %c0_7] : memref<1x128xf32, #tpu.memory_space<vmem>>, vector<1x128xf32>
    %7 = vector.broadcast %6 : vector<1x128xf32> to vector<432x128xf32>
    %8 = arith.addf %5, %7 : vector<432x128xf32>
    %cst_8 = arith.constant 0.000000e+00 : f32
    %9 = vector.broadcast %cst_8 : f32 to vector<432x128xf32>
    %10 = arith.maximumf %8, %9 : vector<432x128xf32>
    %11 = vector.shape_cast %10 : vector<432x128xf32> to vector<18x24x128xf32>
    %12 = tpu.iota {dimensions = array<i32: 0>} : vector<18x24x1xi32>
    %13 = tpu.iota {dimensions = array<i32: 1>} : vector<18x24x1xi32>
    %c16_i32 = arith.constant 16 : i32
    %14 = arith.muli %arg1, %c16_i32 : i32
    %c1_i32 = arith.constant 1 : i32
    %15 = arith.subi %14, %c1_i32 : i32
    %16 = vector.broadcast %15 : i32 to vector<18x24x1xi32>
    %17 = arith.addi %16, %12 : vector<18x24x1xi32>
    %c0_i32 = arith.constant 0 : i32
    %18 = vector.broadcast %c0_i32 : i32 to vector<18x24x1xi32>
    %19 = arith.cmpi sge, %17, %18 : vector<18x24x1xi32>
    %c16_i32_9 = arith.constant 16 : i32
    %20 = vector.broadcast %c16_i32_9 : i32 to vector<18x24x1xi32>
    %21 = arith.cmpi slt, %17, %20 : vector<18x24x1xi32>
    %22 = arith.andi %19, %21 : vector<18x24x1xi1>
    %c1_i32_10 = arith.constant 1 : i32
    %23 = vector.broadcast %c1_i32_10 : i32 to vector<18x24x1xi32>
    %24 = arith.cmpi sge, %13, %23 : vector<18x24x1xi32>
    %25 = arith.andi %22, %24 : vector<18x24x1xi1>
    %c17_i32 = arith.constant 17 : i32
    %26 = vector.broadcast %c17_i32 : i32 to vector<18x24x1xi32>
    %27 = arith.cmpi slt, %13, %26 : vector<18x24x1xi32>
    %28 = arith.andi %25, %27 : vector<18x24x1xi1>
    %cst_11 = arith.constant 0.000000e+00 : f32
    %29 = vector.shape_cast %28 : vector<18x24x1xi1> to vector<18x24x1xi1>
    %30 = vector.broadcast %29 : vector<18x24x1xi1> to vector<18x24x128xi1>
    %31 = vector.broadcast %cst_11 : f32 to vector<18x24x128xf32>
    %32 = arith.select %30, %11, %31 : vector<18x24x128xi1>, vector<18x24x128xf32>
    %33 = arith.truncf %32 : vector<18x24x128xf32> to vector<18x24x128xbf16>
    %c0_12 = arith.constant 0 : index
    %c0_13 = arith.constant 0 : index
    %c0_14 = arith.constant 0 : index
    %34 = vector.load %arg10[%c0_12, %c0_13, %c0_14] : memref<18x24x128xbf16, #tpu.memory_space<vmem>>, vector<18x24x128xbf16>
    tpu.vector_store %arg10[%c0_12, %c0_13, %c0_14], %33 {strides = array<i32>} : memref<18x24x128xbf16, #tpu.memory_space<vmem>>, vector<18x24x128xbf16>,
    %c0_15 = arith.constant 0 : index
    %c0_16 = arith.constant 0 : index
    %c0_17 = arith.constant 0 : index
    %35 = vector.load %arg10[%c0_15, %c0_16, %c0_17] : memref<18x24x128xbf16, #tpu.memory_space<vmem>>, vector<16x16x128xbf16>
    %36 = vector.shape_cast %35 : vector<16x16x128xbf16> to vector<256x128xbf16>
    %c0_18 = arith.constant 0 : index
    %c0_19 = arith.constant 0 : index
    %c0_20 = arith.constant 0 : index
    %c0_21 = arith.constant 0 : index
    %37 = vector.load %arg5[%c0_18, %c0_19, %c0_20, %c0_21] : memref<3x3x128x128xbf16, #tpu.memory_space<vmem>>, vector<1x1x128x128xbf16>
    %38 = vector.shape_cast %37 : vector<1x1x128x128xbf16> to vector<128x128xbf16>
    %cst_22 = arith.constant dense<0.000000e+00> : vector<256x128xf32>
    %39 = tpu.matmul %36, %38, %cst_22 {dimension_numbers = #tpu.dot_dimension_numbers<[1], [0], [0], [1], [0, 0, 1, 1], [], []>} : vector<256x128xbf16>, vector<128x128xbf16>, vector<256x128xf32> -> vector<256x128xf32>
    %c0_23 = arith.constant 0 : index
    %c1 = arith.constant 1 : index
    %c0_24 = arith.constant 0 : index
    %40 = vector.load %arg10[%c0_23, %c1, %c0_24] : memref<18x24x128xbf16, #tpu.memory_space<vmem>>, vector<16x16x128xbf16>
    %41 = vector.shape_cast %40 : vector<16x16x128xbf16> to vector<256x128xbf16>
    %c0_25 = arith.constant 0 : index
    %c1_26 = arith.constant 1 : index
    %c0_27 = arith.constant 0 : index
    %c0_28 = arith.constant 0 : index
    %42 = vector.load %arg5[%c0_25, %c1_26, %c0_27, %c0_28] : memref<3x3x128x128xbf16, #tpu.memory_space<vmem>>, vector<1x1x128x128xbf16>
    %43 = vector.shape_cast %42 : vector<1x1x128x128xbf16> to vector<128x128xbf16>
    %cst_29 = arith.constant dense<0.000000e+00> : vector<256x128xf32>
    %44 = tpu.matmul %41, %43, %cst_29 {dimension_numbers = #tpu.dot_dimension_numbers<[1], [0], [0], [1], [0, 0, 1, 1], [], []>} : vector<256x128xbf16>, vector<128x128xbf16>, vector<256x128xf32> -> vector<256x128xf32>
    %45 = arith.addf %39, %44 : vector<256x128xf32>
    %c0_30 = arith.constant 0 : index
    %c2 = arith.constant 2 : index
    %c0_31 = arith.constant 0 : index
    %46 = vector.load %arg10[%c0_30, %c2, %c0_31] : memref<18x24x128xbf16, #tpu.memory_space<vmem>>, vector<16x16x128xbf16>
    %47 = vector.shape_cast %46 : vector<16x16x128xbf16> to vector<256x128xbf16>
    %c0_32 = arith.constant 0 : index
    %c2_33 = arith.constant 2 : index
    %c0_34 = arith.constant 0 : index
    %c0_35 = arith.constant 0 : index
    %48 = vector.load %arg5[%c0_32, %c2_33, %c0_34, %c0_35] : memref<3x3x128x128xbf16, #tpu.memory_space<vmem>>, vector<1x1x128x128xbf16>
    %49 = vector.shape_cast %48 : vector<1x1x128x128xbf16> to vector<128x128xbf16>
    %cst_36 = arith.constant dense<0.000000e+00> : vector<256x128xf32>
    %50 = tpu.matmul %47, %49, %cst_36 {dimension_numbers = #tpu.dot_dimension_numbers<[1], [0], [0], [1], [0, 0, 1, 1], [], []>} : vector<256x128xbf16>, vector<128x128xbf16>, vector<256x128xf32> -> vector<256x128xf32>
    %51 = arith.addf %45, %50 : vector<256x128xf32>
    %c1_37 = arith.constant 1 : index
    %c0_38 = arith.constant 0 : index
    %c0_39 = arith.constant 0 : index
    %52 = vector.load %arg10[%c1_37, %c0_38, %c0_39] : memref<18x24x128xbf16, #tpu.memory_space<vmem>>, vector<16x16x128xbf16>
    %53 = vector.shape_cast %52 : vector<16x16x128xbf16> to vector<256x128xbf16>
    %c1_40 = arith.constant 1 : index
    %c0_41 = arith.constant 0 : index
    %c0_42 = arith.constant 0 : index
    %c0_43 = arith.constant 0 : index
    %54 = vector.load %arg5[%c1_40, %c0_41, %c0_42, %c0_43] : memref<3x3x128x128xbf16, #tpu.memory_space<vmem>>, vector<1x1x128x128xbf16>
    %55 = vector.shape_cast %54 : vector<1x1x128x128xbf16> to vector<128x128xbf16>
    %cst_44 = arith.constant dense<0.000000e+00> : vector<256x128xf32>
    %56 = tpu.matmul %53, %55, %cst_44 {dimension_numbers = #tpu.dot_dimension_numbers<[1], [0], [0], [1], [0, 0, 1, 1], [], []>} : vector<256x128xbf16>, vector<128x128xbf16>, vector<256x128xf32> -> vector<256x128xf32>
    %57 = arith.addf %51, %56 : vector<256x128xf32>
    %c1_45 = arith.constant 1 : index
    %c1_46 = arith.constant 1 : index
    %c0_47 = arith.constant 0 : index
    %58 = vector.load %arg10[%c1_45, %c1_46, %c0_47] : memref<18x24x128xbf16, #tpu.memory_space<vmem>>, vector<16x16x128xbf16>
    %59 = vector.shape_cast %58 : vector<16x16x128xbf16> to vector<256x128xbf16>
    %c1_48 = arith.constant 1 : index
    %c1_49 = arith.constant 1 : index
    %c0_50 = arith.constant 0 : index
    %c0_51 = arith.constant 0 : index
    %60 = vector.load %arg5[%c1_48, %c1_49, %c0_50, %c0_51] : memref<3x3x128x128xbf16, #tpu.memory_space<vmem>>, vector<1x1x128x128xbf16>
    %61 = vector.shape_cast %60 : vector<1x1x128x128xbf16> to vector<128x128xbf16>
    %cst_52 = arith.constant dense<0.000000e+00> : vector<256x128xf32>
    %62 = tpu.matmul %59, %61, %cst_52 {dimension_numbers = #tpu.dot_dimension_numbers<[1], [0], [0], [1], [0, 0, 1, 1], [], []>} : vector<256x128xbf16>, vector<128x128xbf16>, vector<256x128xf32> -> vector<256x128xf32>
    %63 = arith.addf %57, %62 : vector<256x128xf32>
    %c1_53 = arith.constant 1 : index
    %c2_54 = arith.constant 2 : index
    %c0_55 = arith.constant 0 : index
    %64 = vector.load %arg10[%c1_53, %c2_54, %c0_55] : memref<18x24x128xbf16, #tpu.memory_space<vmem>>, vector<16x16x128xbf16>
    %65 = vector.shape_cast %64 : vector<16x16x128xbf16> to vector<256x128xbf16>
    %c1_56 = arith.constant 1 : index
    %c2_57 = arith.constant 2 : index
    %c0_58 = arith.constant 0 : index
    %c0_59 = arith.constant 0 : index
    %66 = vector.load %arg5[%c1_56, %c2_57, %c0_58, %c0_59] : memref<3x3x128x128xbf16, #tpu.memory_space<vmem>>, vector<1x1x128x128xbf16>
    %67 = vector.shape_cast %66 : vector<1x1x128x128xbf16> to vector<128x128xbf16>
    %cst_60 = arith.constant dense<0.000000e+00> : vector<256x128xf32>
    %68 = tpu.matmul %65, %67, %cst_60 {dimension_numbers = #tpu.dot_dimension_numbers<[1], [0], [0], [1], [0, 0, 1, 1], [], []>} : vector<256x128xbf16>, vector<128x128xbf16>, vector<256x128xf32> -> vector<256x128xf32>
    %69 = arith.addf %63, %68 : vector<256x128xf32>
    %c2_61 = arith.constant 2 : index
    %c0_62 = arith.constant 0 : index
    %c0_63 = arith.constant 0 : index
    %70 = vector.load %arg10[%c2_61, %c0_62, %c0_63] : memref<18x24x128xbf16, #tpu.memory_space<vmem>>, vector<16x16x128xbf16>
    %71 = vector.shape_cast %70 : vector<16x16x128xbf16> to vector<256x128xbf16>
    %c2_64 = arith.constant 2 : index
    %c0_65 = arith.constant 0 : index
    %c0_66 = arith.constant 0 : index
    %c0_67 = arith.constant 0 : index
    %72 = vector.load %arg5[%c2_64, %c0_65, %c0_66, %c0_67] : memref<3x3x128x128xbf16, #tpu.memory_space<vmem>>, vector<1x1x128x128xbf16>
    %73 = vector.shape_cast %72 : vector<1x1x128x128xbf16> to vector<128x128xbf16>
    %cst_68 = arith.constant dense<0.000000e+00> : vector<256x128xf32>
    %74 = tpu.matmul %71, %73, %cst_68 {dimension_numbers = #tpu.dot_dimension_numbers<[1], [0], [0], [1], [0, 0, 1, 1], [], []>} : vector<256x128xbf16>, vector<128x128xbf16>, vector<256x128xf32> -> vector<256x128xf32>
    %75 = arith.addf %69, %74 : vector<256x128xf32>
    %c2_69 = arith.constant 2 : index
    %c1_70 = arith.constant 1 : index
    %c0_71 = arith.constant 0 : index
    %76 = vector.load %arg10[%c2_69, %c1_70, %c0_71] : memref<18x24x128xbf16, #tpu.memory_space<vmem>>, vector<16x16x128xbf16>
    %77 = vector.shape_cast %76 : vector<16x16x128xbf16> to vector<256x128xbf16>
    %c2_72 = arith.constant 2 : index
    %c1_73 = arith.constant 1 : index
    %c0_74 = arith.constant 0 : index
    %c0_75 = arith.constant 0 : index
    %78 = vector.load %arg5[%c2_72, %c1_73, %c0_74, %c0_75] : memref<3x3x128x128xbf16, #tpu.memory_space<vmem>>, vector<1x1x128x128xbf16>
    %79 = vector.shape_cast %78 : vector<1x1x128x128xbf16> to vector<128x128xbf16>
    %cst_76 = arith.constant dense<0.000000e+00> : vector<256x128xf32>
    %80 = tpu.matmul %77, %79, %cst_76 {dimension_numbers = #tpu.dot_dimension_numbers<[1], [0], [0], [1], [0, 0, 1, 1], [], []>} : vector<256x128xbf16>, vector<128x128xbf16>, vector<256x128xf32> -> vector<256x128xf32>
    %81 = arith.addf %75, %80 : vector<256x128xf32>
    %c2_77 = arith.constant 2 : index
    %c2_78 = arith.constant 2 : index
    %c0_79 = arith.constant 0 : index
    %82 = vector.load %arg10[%c2_77, %c2_78, %c0_79] : memref<18x24x128xbf16, #tpu.memory_space<vmem>>, vector<16x16x128xbf16>
    %83 = vector.shape_cast %82 : vector<16x16x128xbf16> to vector<256x128xbf16>
    %c2_80 = arith.constant 2 : index
    %c2_81 = arith.constant 2 : index
    %c0_82 = arith.constant 0 : index
    %c0_83 = arith.constant 0 : index
    %84 = vector.load %arg5[%c2_80, %c2_81, %c0_82, %c0_83] : memref<3x3x128x128xbf16, #tpu.memory_space<vmem>>, vector<1x1x128x128xbf16>
    %85 = vector.shape_cast %84 : vector<1x1x128x128xbf16> to vector<128x128xbf16>
    %cst_84 = arith.constant dense<0.000000e+00> : vector<256x128xf32>
    %86 = tpu.matmul %83, %85, %cst_84 {dimension_numbers = #tpu.dot_dimension_numbers<[1], [0], [0], [1], [0, 0, 1, 1], [], []>} : vector<256x128xbf16>, vector<128x128xbf16>, vector<256x128xf32> -> vector<256x128xf32>
    %87 = arith.addf %81, %86 : vector<256x128xf32>
    %c0_85 = arith.constant 0 : index
    %c0_86 = arith.constant 0 : index
    %88 = vector.load %arg6[%c0_85, %c0_86] : memref<1x128xf32, #tpu.memory_space<vmem>>, vector<1x128xf32>
    %89 = vector.broadcast %88 : vector<1x128xf32> to vector<256x128xf32>
    %90 = arith.addf %87, %89 : vector<256x128xf32>
    %cst_87 = arith.constant 0.000000e+00 : f32
    %91 = vector.broadcast %cst_87 : f32 to vector<256x128xf32>
    %92 = arith.maximumf %90, %91 : vector<256x128xf32>
    %93 = arith.truncf %92 : vector<256x128xf32> to vector<256x128xbf16>
    %c0_88 = arith.constant 0 : index
    %c0_89 = arith.constant 0 : index
    %94 = vector.load %arg7[%c0_88, %c0_89] : memref<128x128xbf16, #tpu.memory_space<vmem>>, vector<128x128xbf16>
    %cst_90 = arith.constant dense<0.000000e+00> : vector<256x128xf32>
    %95 = tpu.matmul %93, %94, %cst_90 {dimension_numbers = #tpu.dot_dimension_numbers<[1], [0], [0], [1], [0, 0, 1, 1], [], []>} : vector<256x128xbf16>, vector<128x128xbf16>, vector<256x128xf32> -> vector<256x128xf32>
    %c0_91 = arith.constant 0 : index
    %c0_92 = arith.constant 0 : index
    %c1_93 = arith.constant 1 : index
    %c1_94 = arith.constant 1 : index
    %c0_95 = arith.constant 0 : index
    %96 = vector.load %arg2[%c0_91, %c0_92, %c1_93, %c1_94, %c0_95] : memref<1x1x18x24x128xf32, #tpu.memory_space<vmem>>, vector<1x1x16x16x128xf32>
    %97 = vector.shape_cast %96 : vector<1x1x16x16x128xf32> to vector<16x16x128xf32>
    %98 = vector.shape_cast %97 : vector<16x16x128xf32> to vector<256x128xf32>
    %c0_96 = arith.constant 0 : index
    %c0_97 = arith.constant 0 : index
    %99 = vector.load %arg8[%c0_96, %c0_97] : memref<1x128xf32, #tpu.memory_space<vmem>>, vector<1x128xf32>
    %100 = vector.broadcast %99 : vector<1x128xf32> to vector<256x128xf32>
    %101 = arith.addf %95, %100 : vector<256x128xf32>
    %102 = arith.addf %101, %98 : vector<256x128xf32>
    %cst_98 = arith.constant 0.000000e+00 : f32
    %103 = vector.broadcast %cst_98 : f32 to vector<256x128xf32>
    %104 = arith.maximumf %102, %103 : vector<256x128xf32>
    %105 = vector.shape_cast %104 : vector<256x128xf32> to vector<16x16x128xf32>
    %c0_99 = arith.constant 0 : index
    %c0_100 = arith.constant 0 : index
    %c0_101 = arith.constant 0 : index
    %c0_102 = arith.constant 0 : index
    %106 = vector.load %arg9[%c0_99, %c0_100, %c0_101, %c0_102] : memref<1x16x16x128xf32, #tpu.memory_space<vmem>>, vector<1x16x16x128xf32>
    %107 = vector.shape_cast %106 : vector<1x16x16x128xf32> to vector<16x16x128xf32>
    %108 = vector.shape_cast %105 : vector<16x16x128xf32> to vector<1x16x16x128xf32>
    tpu.vector_store %arg9[%c0_99, %c0_100, %c0_101, %c0_102], %108 {strides = array<i32>} : memref<1x16x16x128xf32, #tpu.memory_space<vmem>>, vector<1x16x16x128xf32>,
    return
  }
  func.func @transform_0(%arg0: i32, %arg1: i32) -> (i32, i32, i32, i32, i32) {
    %c0_i32 = arith.constant 0 : i32
    %c0_i32_0 = arith.constant 0 : i32
    %c0_i32_1 = arith.constant 0 : i32
    %c0_i32_2 = arith.constant 0 : i32
    return %arg0, %arg1, %c0_i32, %c0_i32_0, %c0_i32_1 : i32, i32, i32, i32, i32
  }
  func.func @transform_1(%arg0: i32, %arg1: i32) -> (i32, i32) {
    %c0_i32 = arith.constant 0 : i32
    %c0_i32_0 = arith.constant 0 : i32
    %c0_i32_1 = arith.constant 0 : i32
    return %c0_i32, %c0_i32_0 : i32, i32
  }
  func.func @transform_2(%arg0: i32, %arg1: i32) -> (i32, i32) {
    %c0_i32 = arith.constant 0 : i32
    %c0_i32_0 = arith.constant 0 : i32
    %c0_i32_1 = arith.constant 0 : i32
    return %c0_i32, %c0_i32_0 : i32, i32
  }
  func.func @transform_3(%arg0: i32, %arg1: i32) -> (i32, i32, i32, i32) {
    %c0_i32 = arith.constant 0 : i32
    %c0_i32_0 = arith.constant 0 : i32
    %c0_i32_1 = arith.constant 0 : i32
    %c0_i32_2 = arith.constant 0 : i32
    %c0_i32_3 = arith.constant 0 : i32
    return %c0_i32, %c0_i32_0, %c0_i32_1, %c0_i32_2 : i32, i32, i32, i32
  }
  func.func @transform_4(%arg0: i32, %arg1: i32) -> (i32, i32) {
    %c0_i32 = arith.constant 0 : i32
    %c0_i32_0 = arith.constant 0 : i32
    %c0_i32_1 = arith.constant 0 : i32
    return %c0_i32, %c0_i32_0 : i32, i32
  }
  func.func @transform_5(%arg0: i32, %arg1: i32) -> (i32, i32) {
    %c0_i32 = arith.constant 0 : i32
    %c0_i32_0 = arith.constant 0 : i32
    %c0_i32_1 = arith.constant 0 : i32
    return %c0_i32, %c0_i32_0 : i32, i32
  }
  func.func @transform_6(%arg0: i32, %arg1: i32) -> (i32, i32) {
    %c0_i32 = arith.constant 0 : i32
    %c0_i32_0 = arith.constant 0 : i32
    %c0_i32_1 = arith.constant 0 : i32
    return %c0_i32, %c0_i32_0 : i32, i32
  }
  func.func @transform_7(%arg0: i32, %arg1: i32) -> (i32, i32, i32, i32) {
    %c0_i32 = arith.constant 0 : i32
    %c0_i32_0 = arith.constant 0 : i32
    %c0_i32_1 = arith.constant 0 : i32
    return %arg0, %arg1, %c0_i32, %c0_i32_0 : i32, i32, i32, i32
  }
}

</mosaic_0001>

<llo_original>
// kernel: tpu_custom_call.1
$region0: #{tpu_custom_call.1}
  #allocation0 [shape = 'u32[]', space=smem, size = 0x4, offset = 0x4, fixed_abs, tag = 'smem constant byte address 0x4 - core index']
  #allocation1 [shape = 'u32[144,128]{1,0:T(1,128)}', space=vmem, size = 0x12000, scoped, tag = 'internal scratch']
  #allocation2 [shape = 'bf16[18,24,128]{2,1,0:T(8,128)(2,1)}', space=vmem, size = 0x1b000, scoped, tag = 'scratch operand']
  %s0 = inlined_call_operand.hbm [shape: f32[2,1,18,24,128], index: 0, kind: input, shape index: {}]
  %s1 = inlined_call_operand.hbm [shape: bf16[128,128], index: 1, kind: input, shape index: {}]
  %s2 = inlined_call_operand.vmem [shape: f32[1,128], index: 2, kind: input, shape index: {}]
  %s3 = inlined_call_operand.hbm [shape: bf16[3,3,128,128], index: 3, kind: input, shape index: {}]
  %s4 = inlined_call_operand.vmem [shape: f32[1,128], index: 4, kind: input, shape index: {}]
  %s5 = inlined_call_operand.hbm [shape: bf16[128,128], index: 5, kind: input, shape index: {}]
  %s6 = inlined_call_operand.vmem [shape: f32[1,128], index: 6, kind: input, shape index: {}]
  %s7 = inlined_call_operand.hbm [shape: f32[2,16,16,128], index: 7, kind: output, shape index: {}]
  %s8 = sld [smem:[#allocation0]]
  $region77: #{tpu_custom_call.1} parent=0
    _
  %s10 = ssub.s32 1, %s8
  %s11 = scalar_select 0, %s10, %s8
  $region1: #{tpu_custom_call.1} parent=0
    #allocation3 [shape = 'u8[442368]{0}', space=vmem, size = 0x6c000, scoped, tag = 'input window, operand 0']
    #allocation4 [shape = 's32[2]{0}', space=sflag, size = 0x8, scoped, tag = 'scoped memory for tpu_custom_call.1']
    #allocation5 [shape = 's32[2]{0}', space=sflag, size = 0x8, scoped, tag = 'scoped memory for tpu_custom_call.1']
    #allocation6 [shape = 'u8[32768]{0}', space=vmem, size = 0x8000, scoped, tag = 'input window, operand 1, single buffered']
    #allocation7 [shape = 's32[1]{0}', space=sflag, size = 0x4, scoped, tag = 'scoped memory for tpu_custom_call.1']
    #allocation8 [shape = 'u8[294912]{0}', space=vmem, size = 0x48000, scoped, tag = 'input window, operand 3, single buffered']
    #allocation9 [shape = 'u8[32768]{0}', space=vmem, size = 0x8000, scoped, tag = 'input window, operand 5, single buffered']
    #allocation10 [shape = 's32[1]{0}', space=sflag, size = 0x4, scoped, tag = 'scoped memory for tpu_custom_call.1']
    #allocation11 [shape = 'u8[262144]{0}', space=vmem, size = 0x40000, scoped, tag = 'output window, operand 0']
    %12 = vsyncpa [#allocation4], 0
    %s13 = scalar_lea.sflag [#allocation4], 1
    %14 = vsyncpa %s13, 0
    %15 = vsyncpa [#allocation7], 0
    %16 = vsyncpa [#allocation10], 0
    %17 = vsyncpa [#allocation5], 0
    %s18 = scalar_lea.sflag [#allocation5], 1
    %19 = vsyncpa %s18, 0
    loop: start=0, step=1, limit=4
    $region2: #{tpu_custom_call.1} parent=1 // loop_pre_header
      _
    $region3: #{tpu_custom_call.1} parent=1 // loop_header
      %s21 = sphi 0, %s25
      %p22 = scmp.ge.s32.totalorder %s21, 4
      %s28 = sphi 0, %s40
      %s29 = sphi 0, %s36
      %s30 = sphi 0, %s28
      %s31 = sphi 0, %s29
      %s32 = sphi 0, %s30
      %s33 = sphi 0, %s31
      %s45 = sphi 0, %s47
      %s48 = sphi 0, %s45
      %s49 = sphi 0, %s48
      %s65 = sphi 0, %s49
      %s69 = sphi 0, %s69
      %s71 = sphi 0, %s69
      %s72 = sphi 0, %s71
      %s86 = sphi 0, %s72
      %s90 = sphi 0, %s90
      %s92 = sphi 0, %s90
      %s93 = sphi 0, %s92
      %s107 = sphi 0, %s93
      %s111 = sphi 0, %s111
      %s113 = sphi 0, %s111
      %s114 = sphi 0, %s113
      %s128 = sphi 0, %s114
      %s132 = sphi 0, %s132
      %s134 = sphi 0, %s132
      %s135 = sphi 0, %s134
      %s149 = sphi 0, %s135
      %s153 = sphi 0, %s153
      %s155 = sphi 0, %s153
      %s156 = sphi 0, %s155
      %s170 = sphi 0, %s156
      %s174 = sphi 0, %s174
      %s176 = sphi 0, %s174
      %s177 = sphi 0, %s176
      %s191 = sphi 0, %s177
      %s199 = sphi 0, %s201
      %s202 = sphi 0, %s199
      %s203 = sphi 0, %s202
      %s219 = sphi 0, %s203
    $region4: #{tpu_custom_call.1} parent=1 // loop_header_branch
      %24 = sbr.rel (%p22) target = $region8
    $region5: #{tpu_custom_call.1} parent=1 // loop_body
      %s26 = ssub.s32 %s21, 1
      %s27 = ssub.s32 %s21, 2
      %s34 = sadd.s32 1, %s29
      %p35 = scmp.ge.s32.totalorder %s34, 1
      %s36 = scalar_select %p35, 0, %s34
      %s37 = sadd.s32 1, %s28
      %s38 = scalar_select %p35, %s37, %s28
      %p39 = scmp.ge.s32.totalorder %s38, 2
      %s40 = scalar_select %p39, 0, %s38
      %s41 = ssub.s32 %s28, %s40
      %s42 = ssub.s32 %s29, %s36
      %s43 = sor.u32 %s41, %s42
      %p44 = scmp.eq.s32.totalorder %s43, 0
      %s46 = sadd.s32 %s45, 1
      %s47 = scalar_select %p44, %s45, %s46
      %p50 = pneg %p44
      %p51 = scmp.eq.s32.totalorder %s21, 1
      %p52 = por %p50, %p51
      %p53 = scmp.ne.s32.totalorder %s45, %s48
      %p54 = scmp.eq.s32.totalorder %s21, 0
      %p55 = por %p53, %p54
      %p56 = scmp.ne.s32.totalorder %s45, %s48
      %p57 = scmp.eq.s32.totalorder %s26, 1
      %p58 = por %p56, %p57
      %p59 = scmp.ne.s32.totalorder %s48, %s49
      %p60 = scmp.eq.s32.totalorder %s26, 0
      %p61 = por %p59, %p60
      %p62 = scmp.ne.s32.totalorder %s48, %s49
      %p63 = scmp.eq.s32.totalorder %s27, 1
      %p64 = por %p62, %p63
      %p66 = scmp.ne.s32.totalorder %s49, %s65
      %p67 = scmp.eq.s32.totalorder %s27, 0
      %p68 = por %p66, %p67
      %s70 = sadd.s32 %s69, 1
      %p73 = scmp.eq.s32.totalorder %s21, 1
      %p74 = scmp.ne.s32.totalorder %s69, %s71
      %p75 = scmp.eq.s32.totalorder %s21, 0
      %p76 = por %p74, %p75
      %p77 = scmp.ne.s32.totalorder %s69, %s71
      %p78 = scmp.eq.s32.totalorder %s26, 1
      %p79 = por %p77, %p78
      %p80 = scmp.ne.s32.totalorder %s71, %s72
      %p81 = scmp.eq.s32.totalorder %s26, 0
      %p82 = por %p80, %p81
      %p83 = scmp.ne.s32.totalorder %s71, %s72
      %p84 = scmp.eq.s32.totalorder %s27, 1
      %p85 = por %p83, %p84
      %p87 = scmp.ne.s32.totalorder %s72, %s86
      %p88 = scmp.eq.s32.totalorder %s27, 0
      %p89 = por %p87, %p88
      %s91 = sadd.s32 %s90, 1
      %p94 = scmp.eq.s32.totalorder %s21, 1
      %p95 = scmp.ne.s32.totalorder %s90, %s92
      %p96 = scmp.eq.s32.totalorder %s21, 0
      %p97 = por %p95, %p96
      %p98 = scmp.ne.s32.totalorder %s90, %s92
      %p99 = scmp.eq.s32.totalorder %s26, 1
      %p100 = por %p98, %p99
      %p101 = scmp.ne.s32.totalorder %s92, %s93
      %p102 = scmp.eq.s32.totalorder %s26, 0
      %p103 = por %p101, %p102
      %p104 = scmp.ne.s32.totalorder %s92, %s93
      %p105 = scmp.eq.s32.totalorder %s27, 1
      %p106 = por %p104, %p105
      %p108 = scmp.ne.s32.totalorder %s93, %s107
      %p109 = scmp.eq.s32.totalorder %s27, 0
      %p110 = por %p108, %p109
      %s112 = sadd.s32 %s111, 1
      %p115 = scmp.eq.s32.totalorder %s21, 1
      %p116 = scmp.ne.s32.totalorder %s111, %s113
      %p117 = scmp.eq.s32.totalorder %s21, 0
      %p118 = por %p116, %p117
      %p119 = scmp.ne.s32.totalorder %s111, %s113
      %p120 = scmp.eq.s32.totalorder %s26, 1
      %p121 = por %p119, %p120
      %p122 = scmp.ne.s32.totalorder %s113, %s114
      %p123 = scmp.eq.s32.totalorder %s26, 0
      %p124 = por %p122, %p123
      %p125 = scmp.ne.s32.totalorder %s113, %s114
      %p126 = scmp.eq.s32.totalorder %s27, 1
      %p127 = por %p125, %p126
      %p129 = scmp.ne.s32.totalorder %s114, %s128
      %p130 = scmp.eq.s32.totalorder %s27, 0
      %p131 = por %p129, %p130
      %s133 = sadd.s32 %s132, 1
      %p136 = scmp.eq.s32.totalorder %s21, 1
      %p137 = scmp.ne.s32.totalorder %s132, %s134
      %p138 = scmp.eq.s32.totalorder %s21, 0
      %p139 = por %p137, %p138
      %p140 = scmp.ne.s32.totalorder %s132, %s134
      %p141 = scmp.eq.s32.totalorder %s26, 1
      %p142 = por %p140, %p141
      %p143 = scmp.ne.s32.totalorder %s134, %s135
      %p144 = scmp.eq.s32.totalorder %s26, 0
      %p145 = por %p143, %p144
      %p146 = scmp.ne.s32.totalorder %s134, %s135
      %p147 = scmp.eq.s32.totalorder %s27, 1
      %p148 = por %p146, %p147
      %p150 = scmp.ne.s32.totalorder %s135, %s149
      %p151 = scmp.eq.s32.totalorder %s27, 0
      %p152 = por %p150, %p151
      %s154 = sadd.s32 %s153, 1
      %p157 = scmp.eq.s32.totalorder %s21, 1
      %p158 = scmp.ne.s32.totalorder %s153, %s155
      %p159 = scmp.eq.s32.totalorder %s21, 0
      %p160 = por %p158, %p159
      %p161 = scmp.ne.s32.totalorder %s153, %s155
      %p162 = scmp.eq.s32.totalorder %s26, 1
      %p163 = por %p161, %p162
      %p164 = scmp.ne.s32.totalorder %s155, %s156
      %p165 = scmp.eq.s32.totalorder %s26, 0
      %p166 = por %p164, %p165
      %p167 = scmp.ne.s32.totalorder %s155, %s156
      %p168 = scmp.eq.s32.totalorder %s27, 1
      %p169 = por %p167, %p168
      %p171 = scmp.ne.s32.totalorder %s156, %s170
      %p172 = scmp.eq.s32.totalorder %s27, 0
      %p173 = por %p171, %p172
      %s175 = sadd.s32 %s174, 1
      %p178 = scmp.eq.s32.totalorder %s21, 1
      %p179 = scmp.ne.s32.totalorder %s174, %s176
      %p180 = scmp.eq.s32.totalorder %s21, 0
      %p181 = por %p179, %p180
      %p182 = scmp.ne.s32.totalorder %s174, %s176
      %p183 = scmp.eq.s32.totalorder %s26, 1
      %p184 = por %p182, %p183
      %p185 = scmp.ne.s32.totalorder %s176, %s177
      %p186 = scmp.eq.s32.totalorder %s26, 0
      %p187 = por %p185, %p186
      %p188 = scmp.ne.s32.totalorder %s176, %s177
      %p189 = scmp.eq.s32.totalorder %s27, 1
      %p190 = por %p188, %p189
      %p192 = scmp.ne.s32.totalorder %s177, %s191
      %p193 = scmp.eq.s32.totalorder %s27, 0
      %p194 = por %p192, %p193
      %s195 = ssub.s32 %s28, %s40
      %s196 = ssub.s32 %s29, %s36
      %s197 = sor.u32 %s195, %s196
      %p198 = scmp.eq.s32.totalorder %s197, 0
      %s200 = sadd.s32 %s199, 1
      %s201 = scalar_select %p198, %s199, %s200
      %p204 = pneg %p198
      %p205 = scmp.eq.s32.totalorder %s21, 1
      %p206 = por %p204, %p205
      %p207 = scmp.ne.s32.totalorder %s199, %s202
      %p208 = scmp.eq.s32.totalorder %s21, 0
      %p209 = por %p207, %p208
      %p210 = scmp.ne.s32.totalorder %s199, %s202
      %p211 = scmp.eq.s32.totalorder %s26, 1
      %p212 = por %p210, %p211
      %p213 = scmp.ne.s32.totalorder %s202, %s203
      %p214 = scmp.eq.s32.totalorder %s26, 0
      %p215 = por %p213, %p214
      %p216 = scmp.ne.s32.totalorder %s202, %s203
      %p217 = scmp.eq.s32.totalorder %s27, 1
      %p218 = por %p216, %p217
      %p220 = scmp.ne.s32.totalorder %s203, %s219
      %p221 = scmp.eq.s32.totalorder %s27, 0
      %p222 = por %p220, %p221
      %p223 = scmp.le.s32.totalorder 1, %s21
      %p224 = scmp.lt.s32.totalorder %s21, 3
      %p225 = pnand %p223, %p224
      %p226 = pneg %p225
      // Predicated region
      $region9: #{tpu_custom_call.1} parent=5 // pred_check
        _
      $region10: #{tpu_custom_call.1} parent=5 // pred_check_branch
        %228 = sbr.rel (%p225) target = $region12
      $region11: #{tpu_custom_call.1} parent=5 // pred_region
        %s229 = ssub.s32 %s21, 1
        // Predicated region
        $region13: #{tpu_custom_call.1} parent=11 // pred_check
          %p230 = pneg %p82
        $region14: #{tpu_custom_call.1} parent=11 // pred_check_branch
          %232 = sbr.rel (%p230) target = $region16
        $region15: #{tpu_custom_call.1} parent=11 // pred_region
          %s234 = ssub.s32 1024, 1024
          %235 = vsyncadd [#allocation7], %s234
          %s236 = sshll.u32 [#allocation6], 4
          %s237 = int_to_ptr.vmem [resolvable:$true] %s236
          %242 = dma.hbm_to_vmem [thread:$0]  %s1, 1024, %s237, [#allocation7], 64, 64, 4
        $region16: #{tpu_custom_call.1} parent=11 // pred_fallthru
          _
        // Predicated region
        $region17: #{tpu_custom_call.1} parent=11 // pred_check
          %p243 = pneg %p103
        $region18: #{tpu_custom_call.1} parent=11 // pred_check_branch
          %245 = sbr.rel (%p243) target = $region20
        $region19: #{tpu_custom_call.1} parent=11 // pred_region
          _
        $region20: #{tpu_custom_call.1} parent=11 // pred_fallthru
          _
        // Predicated region
        $region21: #{tpu_custom_call.1} parent=11 // pred_check
          %p246 = pneg %p124
        $region22: #{tpu_custom_call.1} parent=11 // pred_check_branch
          %248 = sbr.rel (%p246) target = $region24
        $region23: #{tpu_custom_call.1} parent=11 // pred_region
          %s250 = ssub.s32 9216, 9216
          %251 = vsyncadd [#allocation7], %s250
          %s252 = sshll.u32 [#allocation8], 4
          %s253 = int_to_ptr.vmem [resolvable:$true] %s252
          %258 = dma.hbm_to_vmem [thread:$0]  %s3, 9216, %s253, [#allocation7], 64, 64, 4
        $region24: #{tpu_custom_call.1} parent=11 // pred_fallthru
          _
        // Predicated region
        $region25: #{tpu_custom_call.1} parent=11 // pred_check
          %p259 = pneg %p145
        $region26: #{tpu_custom_call.1} parent=11 // pred_check_branch
          %261 = sbr.rel (%p259) target = $region28
        $region27: #{tpu_custom_call.1} parent=11 // pred_region
          _
        $region28: #{tpu_custom_call.1} parent=11 // pred_fallthru
          _
        // Predicated region
        $region29: #{tpu_custom_call.1} parent=11 // pred_check
          %p262 = pneg %p166
        $region30: #{tpu_custom_call.1} parent=11 // pred_check_branch
          %264 = sbr.rel (%p262) target = $region32
        $region31: #{tpu_custom_call.1} parent=11 // pred_region
          %s266 = ssub.s32 1024, 1024
          %267 = vsyncadd [#allocation10], %s266
          %s268 = sshll.u32 [#allocation9], 4
          %s269 = int_to_ptr.vmem [resolvable:$true] %s268
          %274 = dma.hbm_to_vmem [thread:$0]  %s5, 1024, %s269, [#allocation10], 64, 64, 4
        $region32: #{tpu_custom_call.1} parent=11 // pred_fallthru
          _
        // Predicated region
        $region33: #{tpu_custom_call.1} parent=11 // pred_check
          %p275 = pneg %p187
        $region34: #{tpu_custom_call.1} parent=11 // pred_check_branch
          %277 = sbr.rel (%p275) target = $region36
        $region35: #{tpu_custom_call.1} parent=11 // pred_region
          _
        $region36: #{tpu_custom_call.1} parent=11 // pred_fallthru
          _
      $region12: #{tpu_custom_call.1} parent=5 // pred_fallthru
        _
      %p278 = scmp.lt.s32.totalorder %s21, 2
      // Predicated region
      $region37: #{tpu_custom_call.1} parent=5 // pred_check
        %p279 = pneg %p278
      $region38: #{tpu_custom_call.1} parent=5 // pred_check_branch
        %281 = sbr.rel (%p279) target = $region40
      $region39: #{tpu_custom_call.1} parent=5 // pred_region
        // Predicated region
        $region41: #{tpu_custom_call.1} parent=39 // pred_check
          %p282 = pneg %p55
        $region42: #{tpu_custom_call.1} parent=39 // pred_check_branch
          %284 = sbr.rel (%p282) target = $region44
        $region43: #{tpu_custom_call.1} parent=39 // pred_region
          %s285 = sand.u32 %s45, 1
          %s286 = scalar_lea.sflag [#allocation4], %s285
          %s287 = sand.u32 %s45, 1
          %s288 = smul.addr %s287, 432
          %s289 = scalar_lea.vmem [#allocation3], %s288
          %s291 = ssub.s32 6912, 6912
          %292 = vsyncadd %s286, %s291
          %s293 = smul.addr %s29, 54
          %s294 = smul.addr %s28, 54
          %s295 = sadd.s32 %s293, %s294
          %s296 = smul.addr %s295, 128
          %s297 = scalar_lea.hbm %s0, %s296
          %s298 = sshll.u32 %s289, 4
          %s299 = int_to_ptr.vmem [resolvable:$true] %s298
          %304 = dma.hbm_to_vmem [thread:$0]  %s297, 6912, %s299, %s286, 128, 128, 8
        $region44: #{tpu_custom_call.1} parent=39 // pred_fallthru
          _
      $region40: #{tpu_custom_call.1} parent=5 // pred_fallthru
        _
      %p305 = scmp.le.s32.totalorder 1, %s21
      %p306 = scmp.lt.s32.totalorder %s21, 3
      %p307 = pnand %p305, %p306
      %p308 = pneg %p307
      // Predicated region
      $region45: #{tpu_custom_call.1} parent=5 // pred_check
        _
      $region46: #{tpu_custom_call.1} parent=5 // pred_check_branch
        %310 = sbr.rel (%p307) target = $region48
      $region47: #{tpu_custom_call.1} parent=5 // pred_region
        %s311 = ssub.s32 %s21, 1
        %s312 = sand.u32 %s48, 1
        %s313 = scalar_lea.sflag [#allocation4], %s312
        %s314 = sand.u32 %s48, 1
        %s315 = smul.addr %s314, 432
        %s316 = scalar_lea.vmem [#allocation3], %s315
        // Predicated region
        $region49: #{tpu_custom_call.1} parent=47 // pred_check
          %p317 = pneg %p61
        $region50: #{tpu_custom_call.1} parent=47 // pred_check_branch
          %319 = sbr.rel (%p317) target = $region52
        $region51: #{tpu_custom_call.1} parent=47 // pred_region
          %320 = dma.done %s313, 6912
        $region52: #{tpu_custom_call.1} parent=47 // pred_fallthru
          _
        // Predicated region
        $region53: #{tpu_custom_call.1} parent=47 // pred_check
          %p321 = pneg %p82
        $region54: #{tpu_custom_call.1} parent=47 // pred_check_branch
          %323 = sbr.rel (%p321) target = $region56
        $region55: #{tpu_custom_call.1} parent=47 // pred_region
          %324 = dma.done [#allocation7], 1024
        $region56: #{tpu_custom_call.1} parent=47 // pred_fallthru
          _
        // Predicated region
        $region57: #{tpu_custom_call.1} parent=47 // pred_check
          %p325 = pneg %p124
        $region58: #{tpu_custom_call.1} parent=47 // pred_check_branch
          %327 = sbr.rel (%p325) target = $region60
        $region59: #{tpu_custom_call.1} parent=47 // pred_region
          %328 = dma.done [#allocation7], 9216
        $region60: #{tpu_custom_call.1} parent=47 // pred_fallthru
          _
        // Predicated region
        $region61: #{tpu_custom_call.1} parent=47 // pred_check
          %p329 = pneg %p166
        $region62: #{tpu_custom_call.1} parent=47 // pred_check_branch
          %331 = sbr.rel (%p329) target = $region64
        $region63: #{tpu_custom_call.1} parent=47 // pred_region
          %332 = dma.done [#allocation10], 1024
        $region64: #{tpu_custom_call.1} parent=47 // pred_fallthru
          _
        %s333 = sand.u32 %s48, 1
        %s334 = scalar_lea.sflag [#allocation4], %s333
        %s335 = sand.u32 %s48, 1
        %s336 = smul.addr %s335, 432
        %s337 = scalar_lea.vmem [#allocation3], %s336
        %p338 = pneg %p61
        %p339 = pneg %p58
        %p340 = pneg %p82
        %p341 = pneg %p79
        %p342 = pneg %p103
        %p343 = pneg %p100
        %p344 = pneg %p124
        %p345 = pneg %p121
        %p346 = pneg %p145
        %p347 = pneg %p142
        %p348 = pneg %p166
        %p349 = pneg %p163
        %p350 = pneg %p187
        %p351 = pneg %p184
        %p352 = pneg %p215
        %p353 = pneg %p212
        %s354 = sand.u32 %s202, 1
        %s355 = scalar_lea.sflag [#allocation5], %s354
        %s356 = sand.u32 %s202, 1
        %s357 = smul.addr %s356, 256
        %s358 = scalar_lea.vmem [#allocation11], %s357
        %s359 = smul.u32 16, %s31
        %v361 = vld [vmem:[%s316] sm:$0xff]
        %v362 = vld [vmem:[%s316 + $0x8] sm:$0xff]
        %v363 = vld [vmem:[%s316 + $0x10] sm:$0xff]
        %v364 = vld [vmem:[%s316 + $0x18] sm:$0xff]
        %v365 = vld [vmem:[%s316 + $0x20] sm:$0xff]
        %v366 = vld [vmem:[%s316 + $0x28] sm:$0xff]
        %v367 = vld [vmem:[%s316 + $0x30] sm:$0xff]
        %v368 = vld [vmem:[%s316 + $0x38] sm:$0xff]
        %v369 = vld [vmem:[%s316 + $0x40] sm:$0xff]
        %v370 = vld [vmem:[%s316 + $0x48] sm:$0xff]
        %v371 = vld [vmem:[%s316 + $0x50] sm:$0xff]
        %v372 = vld [vmem:[%s316 + $0x58] sm:$0xff]
        %v373 = vld [vmem:[%s316 + $0x60] sm:$0xff]
        %v374 = vld [vmem:[%s316 + $0x68] sm:$0xff]
        %v375 = vld [vmem:[%s316 + $0x70] sm:$0xff]
        %v376 = vld [vmem:[%s316 + $0x78] sm:$0xff]
        %v377 = vld [vmem:[%s316 + $0x80] sm:$0xff]
        %v378 = vld [vmem:[%s316 + $0x88] sm:$0xff]
        %v379 = vld [vmem:[%s316 + $0x90] sm:$0xff]
        %v380 = vld [vmem:[%s316 + $0x98] sm:$0xff]
        %v381 = vld [vmem:[%s316 + $0xa0] sm:$0xff]
        %v382 = vld [vmem:[%s316 + $0xa8] sm:$0xff]
        %v383 = vld [vmem:[%s316 + $0xb0] sm:$0xff]
        %v384 = vld [vmem:[%s316 + $0xb8] sm:$0xff]
        %v385 = vld [vmem:[%s316 + $0xc0] sm:$0xff]
        %v386 = vld [vmem:[%s316 + $0xc8] sm:$0xff]
        %v387 = vld [vmem:[%s316 + $0xd0] sm:$0xff]
        %v388 = vld [vmem:[%s316 + $0xd8] sm:$0xff]
        %v389 = vld [vmem:[%s316 + $0xe0] sm:$0xff]
        %v390 = vld [vmem:[%s316 + $0xe8] sm:$0xff]
        %v391 = vld [vmem:[%s316 + $0xf0] sm:$0xff]
        %v392 = vld [vmem:[%s316 + $0xf8] sm:$0xff]
        %v393 = vld [vmem:[%s316 + $0x100] sm:$0xff]
        %v394 = vld [vmem:[%s316 + $0x108] sm:$0xff]
        %v395 = vld [vmem:[%s316 + $0x110] sm:$0xff]
        %v396 = vld [vmem:[%s316 + $0x118] sm:$0xff]
        %v397 = vld [vmem:[%s316 + $0x120] sm:$0xff]
        %v398 = vld [vmem:[%s316 + $0x128] sm:$0xff]
        %v399 = vld [vmem:[%s316 + $0x130] sm:$0xff]
        %v400 = vld [vmem:[%s316 + $0x138] sm:$0xff]
        %v401 = vld [vmem:[%s316 + $0x140] sm:$0xff]
        %v402 = vld [vmem:[%s316 + $0x148] sm:$0xff]
        %v403 = vld [vmem:[%s316 + $0x150] sm:$0xff]
        %v404 = vld [vmem:[%s316 + $0x158] sm:$0xff]
        %v405 = vld [vmem:[%s316 + $0x160] sm:$0xff]
        %v406 = vld [vmem:[%s316 + $0x168] sm:$0xff]
        %v407 = vld [vmem:[%s316 + $0x170] sm:$0xff]
        %v408 = vld [vmem:[%s316 + $0x178] sm:$0xff]
        %v409 = vld [vmem:[%s316 + $0x180] sm:$0xff]
        %v410 = vld [vmem:[%s316 + $0x188] sm:$0xff]
        %v411 = vld [vmem:[%s316 + $0x190] sm:$0xff]
        %v412 = vld [vmem:[%s316 + $0x198] sm:$0xff]
        %v413 = vld [vmem:[%s316 + $0x1a0] sm:$0xff]
        %v414 = vld [vmem:[%s316 + $0x1a8] sm:$0xff]
        %v415 = vpack.c.bf16 %v362, %v361
        %v416 = vpack.c.bf16 %v363, %v363
        %v417 = vpack.c.bf16 %v365, %v364
        %v418 = vpack.c.bf16 %v366, %v366
        %v419 = vpack.c.bf16 %v368, %v367
        %v420 = vpack.c.bf16 %v369, %v369
        %v421 = vpack.c.bf16 %v371, %v370
        %v422 = vpack.c.bf16 %v372, %v372
        %v423 = vpack.c.bf16 %v374, %v373
        %v424 = vpack.c.bf16 %v375, %v375
        %v425 = vpack.c.bf16 %v377, %v376
        %v426 = vpack.c.bf16 %v378, %v378
        %v427 = vpack.c.bf16 %v380, %v379
        %v428 = vpack.c.bf16 %v381, %v381
        %v429 = vpack.c.bf16 %v383, %v382
        %v430 = vpack.c.bf16 %v384, %v384
        %v431 = vpack.c.bf16 %v386, %v385
        %v432 = vpack.c.bf16 %v387, %v387
        %v433 = vpack.c.bf16 %v389, %v388
        %v434 = vpack.c.bf16 %v390, %v390
        %v435 = vpack.c.bf16 %v392, %v391
        %v436 = vpack.c.bf16 %v393, %v393
        %v437 = vpack.c.bf16 %v395, %v394
        %v438 = vpack.c.bf16 %v396, %v396
        %v439 = vpack.c.bf16 %v398, %v397
        %v440 = vpack.c.bf16 %v399, %v399
        %v441 = vpack.c.bf16 %v401, %v400
        %v442 = vpack.c.bf16 %v402, %v402
        %v443 = vpack.c.bf16 %v404, %v403
        %v444 = vpack.c.bf16 %v405, %v405
        %v445 = vpack.c.bf16 %v407, %v406
        %v446 = vpack.c.bf16 %v408, %v408
        %v447 = vpack.c.bf16 %v410, %v409
        %v448 = vpack.c.bf16 %v411, %v411
        %v449 = vpack.c.bf16 %v413, %v412
        %v450 = vpack.c.bf16 %v414, %v414
        %v487 = vunpack.c.l.b16 %v415
        %v488 = vunpack.c.h.b16 %v415
        %v489 = vunpack.c.l.b16 %v416
        %v490 = vunpack.c.l.b16 %v417
        %v491 = vunpack.c.h.b16 %v417
        %v492 = vunpack.c.l.b16 %v418
        %v493 = vunpack.c.l.b16 %v419
        %v494 = vunpack.c.h.b16 %v419
        %v495 = vunpack.c.l.b16 %v420
        %v496 = vunpack.c.l.b16 %v421
        %v497 = vunpack.c.h.b16 %v421
        %v498 = vunpack.c.l.b16 %v422
        %v499 = vunpack.c.l.b16 %v423
        %v500 = vunpack.c.h.b16 %v423
        %v501 = vunpack.c.l.b16 %v424
        %v502 = vunpack.c.l.b16 %v425
        %v503 = vunpack.c.h.b16 %v425
        %v504 = vunpack.c.l.b16 %v426
        %v505 = vunpack.c.l.b16 %v427
        %v506 = vunpack.c.h.b16 %v427
        %v507 = vunpack.c.l.b16 %v428
        %v508 = vunpack.c.l.b16 %v429
        %v509 = vunpack.c.h.b16 %v429
        %v510 = vunpack.c.l.b16 %v430
        %v511 = vunpack.c.l.b16 %v431
        %v512 = vunpack.c.h.b16 %v431
        %v513 = vunpack.c.l.b16 %v432
        %v514 = vunpack.c.l.b16 %v433
        %v515 = vunpack.c.h.b16 %v433
        %v516 = vunpack.c.l.b16 %v434
        %v517 = vunpack.c.l.b16 %v435
        %v518 = vunpack.c.h.b16 %v435
        %v519 = vunpack.c.l.b16 %v436
        %v520 = vunpack.c.l.b16 %v437
        %v521 = vunpack.c.h.b16 %v437
        %v522 = vunpack.c.l.b16 %v438
        %v523 = vunpack.c.l.b16 %v439
        %v524 = vunpack.c.h.b16 %v439
        %v525 = vunpack.c.l.b16 %v440
        %v526 = vunpack.c.l.b16 %v441
        %v527 = vunpack.c.h.b16 %v441
        %v528 = vunpack.c.l.b16 %v442
        %v529 = vunpack.c.l.b16 %v443
        %v530 = vunpack.c.h.b16 %v443
        %v531 = vunpack.c.l.b16 %v444
        %v532 = vunpack.c.l.b16 %v445
        %v533 = vunpack.c.h.b16 %v445
        %v534 = vunpack.c.l.b16 %v446
        %v535 = vunpack.c.l.b16 %v447
        %v536 = vunpack.c.h.b16 %v447
        %v537 = vunpack.c.l.b16 %v448
        %v538 = vunpack.c.l.b16 %v449
        %v539 = vunpack.c.h.b16 %v449
        %v540 = vunpack.c.l.b16 %v450
        %v541 = vld [vmem:[#allocation6] sm:$0xf]
        %v542 = vld [vmem:[#allocation6 + $0x4] sm:$0xf]
        %v543 = vld [vmem:[#allocation6 + $0x8] sm:$0xf]
        %v544 = vld [vmem:[#allocation6 + $0xc] sm:$0xf]
        %v545 = vld [vmem:[#allocation6 + $0x10] sm:$0xf]
        %v546 = vld [vmem:[#allocation6 + $0x14] sm:$0xf]
        %v547 = vld [vmem:[#allocation6 + $0x18] sm:$0xf]
        %v548 = vld [vmem:[#allocation6 + $0x1c] sm:$0xf]
        %v549 = vld [vmem:[#allocation6 + $0x20] sm:$0xf]
        %v550 = vld [vmem:[#allocation6 + $0x24] sm:$0xf]
        %v551 = vld [vmem:[#allocation6 + $0x28] sm:$0xf]
        %v552 = vld [vmem:[#allocation6 + $0x2c] sm:$0xf]
        %v553 = vld [vmem:[#allocation6 + $0x30] sm:$0xf]
        %v554 = vld [vmem:[#allocation6 + $0x34] sm:$0xf]
        %v555 = vld [vmem:[#allocation6 + $0x38] sm:$0xf]
        %v556 = vld [vmem:[#allocation6 + $0x3c] sm:$0xf]
        %v557 = vld [vmem:[%s2] sm:$0x1]
        %v559 = vlaneseq
        %v560 = vshrl.u32 %v559, 7
        %v561 = vsub.s32 0, %v560
        %v562 = vrot.slane %v557, %v561
        %v564 = vpack.c.b16 %v488, %v487
        %v565 = vpack.c.b16 %v490, %v489
        %v566 = vpack.c.b16 %v492, %v491
        %v567 = vpack.c.b16 %v494, %v493
        %v568 = vpack.c.b16 %v496, %v495
        %v569 = vpack.c.b16 %v498, %v497
        %v570 = vpack.c.b16 %v500, %v499
        %v571 = vpack.c.b16 %v502, %v501
        %v572 = vpack.c.b16 %v504, %v503
        %v573 = vpack.c.b16 %v506, %v505
        %v574 = vpack.c.b16 %v508, %v507
        %v575 = vpack.c.b16 %v510, %v509
        %v576 = vpack.c.b16 %v512, %v511
        %v577 = vpack.c.b16 %v514, %v513
        %v578 = vpack.c.b16 %v516, %v515
        %v579 = vpack.c.b16 %v518, %v517
        %v580 = vpack.c.b16 %v520, %v519
        %v581 = vpack.c.b16 %v522, %v521
        %v582 = vpack.c.b16 %v524, %v523
        %v583 = vpack.c.b16 %v526, %v525
        %v584 = vpack.c.b16 %v528, %v527
        %v585 = vpack.c.b16 %v530, %v529
        %v586 = vpack.c.b16 %v532, %v531
        %v587 = vpack.c.b16 %v534, %v533
        %v588 = vpack.c.b16 %v536, %v535
        %v589 = vpack.c.b16 %v538, %v537
        %v590 = vpack.c.b16 %v540, %v539
        %v634 = vunpack.c.l.b16 %v541
        %v635 = vunpack.c.l.b16 %v542
        %v636 = vunpack.c.l.b16 %v543
        %v637 = vunpack.c.l.b16 %v544
        %v638 = vunpack.c.l.b16 %v545
        %v639 = vunpack.c.l.b16 %v546
        %v640 = vunpack.c.l.b16 %v547
        %v641 = vunpack.c.l.b16 %v548
        %v642 = vunpack.c.l.b16 %v549
        %v643 = vunpack.c.l.b16 %v550
        %v644 = vunpack.c.l.b16 %v551
        %v645 = vunpack.c.l.b16 %v552
        %v646 = vunpack.c.l.b16 %v553
        %v647 = vunpack.c.l.b16 %v554
        %v648 = vunpack.c.l.b16 %v555
        %v649 = vunpack.c.l.b16 %v556
        %v650 = vpack.c.b16 %v635, %v634
        %v651 = vpack.c.b16 %v637, %v636
        %v652 = vpack.c.b16 %v639, %v638
        %v653 = vpack.c.b16 %v641, %v640
        %v654 = vpack.c.b16 %v643, %v642
        %v655 = vpack.c.b16 %v645, %v644
        %v656 = vpack.c.b16 %v647, %v646
        %v657 = vpack.c.b16 %v649, %v648
        %666 = vmatprep.subr.bf16.mxu0 0
        %667 = vmatpush1.bf16.msra.mxu0 %v650
        %668 = vmatprep.subr.bf16.mxu0 0
        %669 = vmatpush1.bf16.msra.mxu0 %v651
        %670 = vmatprep.subr.bf16.mxu0 0
        %671 = vmatpush1.bf16.msra.mxu0 %v652
        %672 = vmatprep.subr.bf16.mxu0 0
        %673 = vmatpush1.bf16.msra.mxu0 %v653
        %674 = vmatprep.subr.bf16.mxu0 0
        %675 = vmatpush1.bf16.msra.mxu0 %v654
        %676 = vmatprep.subr.bf16.mxu0 0
        %677 = vmatpush1.bf16.msra.mxu0 %v655
        %678 = vmatprep.subr.bf16.mxu0 0
        %679 = vmatpush1.bf16.msra.mxu0 %v656
        %680 = vmatprep.subr.bf16.mxu0 0
        %681 = vmatpush1.bf16.msra.mxu0 %v657
        %682 = vmatprep.subr.bf16.mxu0 0
        %683 = vmatpush1.bf16.msra.mxu0 0
        %684 = vmatprep.subr.bf16.mxu0 0
        %685 = vmatpush1.bf16.msra.mxu0 0
        %686 = vmatprep.subr.bf16.mxu0 0
        %687 = vmatpush1.bf16.msra.mxu0 0
        %688 = vmatprep.subr.bf16.mxu0 0
        %689 = vmatpush1.bf16.msra.mxu0 0
        %690 = vmatprep.subr.bf16.mxu0 0
        %691 = vmatpush1.bf16.msra.mxu0 0
        %692 = vmatprep.subr.bf16.mxu0 0
        %693 = vmatpush1.bf16.msra.mxu0 0
        %694 = vmatprep.subr.bf16.mxu0 0
        %695 = vmatpush1.bf16.msra.mxu0 0
        %696 = vmatprep.subr.bf16.mxu0 0
        %697 = vmatpush1.bf16.msra.mxu0 0
        %698 = vmatprep.mubr.bf16.mxu0 0
        %699 = vmatmul.mubr.bf16.gmra.mrb[0].mxu0 %v564
        %v700 = vpop.f32.mrb[0].mxu0
        %v701 = vadd.f32 %v562, %v700
        %v702 = vpop.f32.mrb[0].mxu0
        %v703 = vpop.f32.mrb[0].mxu0
        %v704 = vadd.f32 %v562, %v703
        %v705 = vpop.f32.mrb[0].mxu0
        %706 = vmatprep.mubr.bf16.mxu0 0
        %707 = vmatmul.mubr.bf16.gmra.mrb[0].mxu0 %v565
        %v708 = vpop.f32.mrb[0].mxu0
        %v709 = vadd.f32 %v562, %v708
        %v710 = vpop.f32.mrb[0].mxu0
        %v711 = vpop.f32.mrb[0].mxu0
        %v712 = vadd.f32 %v562, %v711
        %v713 = vpop.f32.mrb[0].mxu0
        %714 = vmatprep.mubr.bf16.mxu0 0
        %715 = vmatmul.mubr.bf16.gmra.mrb[0].mxu0 %v566
        %v716 = vpop.f32.mrb[0].mxu0
        %v717 = vadd.f32 %v562, %v716
        %v718 = vpop.f32.mrb[0].mxu0
        %v719 = vpop.f32.mrb[0].mxu0
        %v720 = vadd.f32 %v562, %v719
        %v721 = vpop.f32.mrb[0].mxu0
        %722 = vmatprep.mubr.bf16.mxu0 0
        %723 = vmatmul.mubr.bf16.gmra.mrb[0].mxu0 %v567
        %v724 = vpop.f32.mrb[0].mxu0
        %v725 = vadd.f32 %v562, %v724
        %v726 = vpop.f32.mrb[0].mxu0
        %v727 = vpop.f32.mrb[0].mxu0
        %v728 = vadd.f32 %v562, %v727
        %v729 = vpop.f32.mrb[0].mxu0
        %730 = vmatprep.mubr.bf16.mxu0 0
        %731 = vmatmul.mubr.bf16.gmra.mrb[0].mxu0 %v568
        %v732 = vpop.f32.mrb[0].mxu0
        %v733 = vadd.f32 %v562, %v732
        %v734 = vpop.f32.mrb[0].mxu0
        %v735 = vpop.f32.mrb[0].mxu0
        %v736 = vadd.f32 %v562, %v735
        %v737 = vpop.f32.mrb[0].mxu0
        %738 = vmatprep.mubr.bf16.mxu0 0
        %739 = vmatmul.mubr.bf16.gmra.mrb[0].mxu0 %v569
        %v740 = vpop.f32.mrb[0].mxu0
        %v741 = vadd.f32 %v562, %v740
        %v742 = vpop.f32.mrb[0].mxu0
        %v743 = vpop.f32.mrb[0].mxu0
        %v744 = vadd.f32 %v562, %v743
        %v745 = vpop.f32.mrb[0].mxu0
        %746 = vmatprep.mubr.bf16.mxu0 0
        %747 = vmatmul.mubr.bf16.gmra.mrb[0].mxu0 %v570
        %v748 = vpop.f32.mrb[0].mxu0
        %v749 = vadd.f32 %v562, %v748
        %v750 = vpop.f32.mrb[0].mxu0
        %v751 = vpop.f32.mrb[0].mxu0
        %v752 = vadd.f32 %v562, %v751
        %v753 = vpop.f32.mrb[0].mxu0
        %754 = vmatprep.mubr.bf16.mxu0 0
        %755 = vmatmul.mubr.bf16.gmra.mrb[0].mxu0 %v571
        %v756 = vpop.f32.mrb[0].mxu0
        %v757 = vadd.f32 %v562, %v756
        %v758 = vpop.f32.mrb[0].mxu0
        %v759 = vpop.f32.mrb[0].mxu0
        %v760 = vadd.f32 %v562, %v759
        %v761 = vpop.f32.mrb[0].mxu0
        %762 = vmatprep.mubr.bf16.mxu0 0
        %763 = vmatmul.mubr.bf16.gmra.mrb[0].mxu0 %v572
        %v764 = vpop.f32.mrb[0].mxu0
        %v765 = vadd.f32 %v562, %v764
        %v766 = vpop.f32.mrb[0].mxu0
        %v767 = vpop.f32.mrb[0].mxu0
        %v768 = vadd.f32 %v562, %v767
        %v769 = vpop.f32.mrb[0].mxu0
        %770 = vmatprep.mubr.bf16.mxu0 0
        %771 = vmatmul.mubr.bf16.gmra.mrb[0].mxu0 %v573
        %v772 = vpop.f32.mrb[0].mxu0
        %v773 = vadd.f32 %v562, %v772
        %v774 = vpop.f32.mrb[0].mxu0
        %v775 = vpop.f32.mrb[0].mxu0
        %v776 = vadd.f32 %v562, %v775
        %v777 = vpop.f32.mrb[0].mxu0
        %778 = vmatprep.mubr.bf16.mxu0 0
        %779 = vmatmul.mubr.bf16.gmra.mrb[0].mxu0 %v574
        %v780 = vpop.f32.mrb[0].mxu0
        %v781 = vadd.f32 %v562, %v780
        %v782 = vpop.f32.mrb[0].mxu0
        %v783 = vpop.f32.mrb[0].mxu0
        %v784 = vadd.f32 %v562, %v783
        %v785 = vpop.f32.mrb[0].mxu0
        %786 = vmatprep.mubr.bf16.mxu0 0
        %787 = vmatmul.mubr.bf16.gmra.mrb[0].mxu0 %v575
        %v788 = vpop.f32.mrb[0].mxu0
        %v789 = vadd.f32 %v562, %v788
        %v790 = vpop.f32.mrb[0].mxu0
        %v791 = vpop.f32.mrb[0].mxu0
        %v792 = vadd.f32 %v562, %v791
        %v793 = vpop.f32.mrb[0].mxu0
        %794 = vmatprep.mubr.bf16.mxu0 0
        %795 = vmatmul.mubr.bf16.gmra.mrb[0].mxu0 %v576
        %v796 = vpop.f32.mrb[0].mxu0
        %v797 = vadd.f32 %v562, %v796
        %v798 = vpop.f32.mrb[0].mxu0
        %v799 = vpop.f32.mrb[0].mxu0
        %v800 = vadd.f32 %v562, %v799
        %v801 = vpop.f32.mrb[0].mxu0
        %802 = vmatprep.mubr.bf16.mxu0 0
        %803 = vmatmul.mubr.bf16.gmra.mrb[0].mxu0 %v577
        %v804 = vpop.f32.mrb[0].mxu0
        %v805 = vadd.f32 %v562, %v804
        %v806 = vpop.f32.mrb[0].mxu0
        %v807 = vpop.f32.mrb[0].mxu0
        %v808 = vadd.f32 %v562, %v807
        %v809 = vpop.f32.mrb[0].mxu0
        %810 = vmatprep.mubr.bf16.mxu0 0
        %811 = vmatmul.mubr.bf16.gmra.mrb[0].mxu0 %v578
        %v812 = vpop.f32.mrb[0].mxu0
        %v813 = vadd.f32 %v562, %v812
        %v814 = vpop.f32.mrb[0].mxu0
        %v815 = vpop.f32.mrb[0].mxu0
        %v816 = vadd.f32 %v562, %v815
        %v817 = vpop.f32.mrb[0].mxu0
        %818 = vmatprep.mubr.bf16.mxu0 0
        %819 = vmatmul.mubr.bf16.gmra.mrb[0].mxu0 %v579
        %v820 = vpop.f32.mrb[0].mxu0
        %v821 = vadd.f32 %v562, %v820
        %v822 = vpop.f32.mrb[0].mxu0
        %v823 = vpop.f32.mrb[0].mxu0
        %v824 = vadd.f32 %v562, %v823
        %v825 = vpop.f32.mrb[0].mxu0
        %826 = vmatprep.mubr.bf16.mxu0 0
        %827 = vmatmul.mubr.bf16.gmra.mrb[0].mxu0 %v580
        %v828 = vpop.f32.mrb[0].mxu0
        %v829 = vadd.f32 %v562, %v828
        %v830 = vpop.f32.mrb[0].mxu0
        %v831 = vpop.f32.mrb[0].mxu0
        %v832 = vadd.f32 %v562, %v831
        %v833 = vpop.f32.mrb[0].mxu0
        %834 = vmatprep.mubr.bf16.mxu0 0
        %835 = vmatmul.mubr.bf16.gmra.mrb[0].mxu0 %v581
        %v836 = vpop.f32.mrb[0].mxu0
        %v837 = vadd.f32 %v562, %v836
        %v838 = vpop.f32.mrb[0].mxu0
        %v839 = vpop.f32.mrb[0].mxu0
        %v840 = vadd.f32 %v562, %v839
        %v841 = vpop.f32.mrb[0].mxu0
        %842 = vmatprep.mubr.bf16.mxu0 0
        %843 = vmatmul.mubr.bf16.gmra.mrb[0].mxu0 %v582
        %v844 = vpop.f32.mrb[0].mxu0
        %v845 = vadd.f32 %v562, %v844
        %v846 = vpop.f32.mrb[0].mxu0
        %v847 = vpop.f32.mrb[0].mxu0
        %v848 = vadd.f32 %v562, %v847
        %v849 = vpop.f32.mrb[0].mxu0
        %850 = vmatprep.mubr.bf16.mxu0 0
        %851 = vmatmul.mubr.bf16.gmra.mrb[0].mxu0 %v583
        %v852 = vpop.f32.mrb[0].mxu0
        %v853 = vadd.f32 %v562, %v852
        %v854 = vpop.f32.mrb[0].mxu0
        %v855 = vpop.f32.mrb[0].mxu0
        %v856 = vadd.f32 %v562, %v855
        %v857 = vpop.f32.mrb[0].mxu0
        %858 = vmatprep.mubr.bf16.mxu0 0
        %859 = vmatmul.mubr.bf16.gmra.mrb[0].mxu0 %v584
        %v860 = vpop.f32.mrb[0].mxu0
        %v861 = vadd.f32 %v562, %v860
        %v862 = vpop.f32.mrb[0].mxu0
        %v863 = vpop.f32.mrb[0].mxu0
        %v864 = vadd.f32 %v562, %v863
        %v865 = vpop.f32.mrb[0].mxu0
        %866 = vmatprep.mubr.bf16.mxu0 0
        %867 = vmatmul.mubr.bf16.gmra.mrb[0].mxu0 %v585
        %v868 = vpop.f32.mrb[0].mxu0
        %v869 = vadd.f32 %v562, %v868
        %v870 = vpop.f32.mrb[0].mxu0
        %v871 = vpop.f32.mrb[0].mxu0
        %v872 = vadd.f32 %v562, %v871
        %v873 = vpop.f32.mrb[0].mxu0
        %874 = vmatprep.mubr.bf16.mxu0 0
        %875 = vmatmul.mubr.bf16.gmra.mrb[0].mxu0 %v586
        %v876 = vpop.f32.mrb[0].mxu0
        %v877 = vadd.f32 %v562, %v876
        %v878 = vpop.f32.mrb[0].mxu0
        %v879 = vpop.f32.mrb[0].mxu0
        %v880 = vadd.f32 %v562, %v879
        %v881 = vpop.f32.mrb[0].mxu0
        %882 = vmatprep.mubr.bf16.mxu0 0
        %883 = vmatmul.mubr.bf16.gmra.mrb[0].mxu0 %v587
        %v884 = vpop.f32.mrb[0].mxu0
        %v885 = vadd.f32 %v562, %v884
        %v886 = vpop.f32.mrb[0].mxu0
        %v887 = vpop.f32.mrb[0].mxu0
        %v888 = vadd.f32 %v562, %v887
        %v889 = vpop.f32.mrb[0].mxu0
        %890 = vmatprep.mubr.bf16.mxu0 0
        %891 = vmatmul.mubr.bf16.gmra.mrb[0].mxu0 %v588
        %v892 = vpop.f32.mrb[0].mxu0
        %v893 = vadd.f32 %v562, %v892
        %v894 = vpop.f32.mrb[0].mxu0
        %v895 = vpop.f32.mrb[0].mxu0
        %v896 = vadd.f32 %v562, %v895
        %v897 = vpop.f32.mrb[0].mxu0
        %898 = vmatprep.mubr.bf16.mxu0 0
        %899 = vmatmul.mubr.bf16.gmra.mrb[0].mxu0 %v589
        %v900 = vpop.f32.mrb[0].mxu0
        %v901 = vadd.f32 %v562, %v900
        %v902 = vpop.f32.mrb[0].mxu0
        %v903 = vpop.f32.mrb[0].mxu0
        %v904 = vadd.f32 %v562, %v903
        %v905 = vpop.f32.mrb[0].mxu0
        %906 = vmatprep.mubr.bf16.mxu0 0
        %907 = vmatmul.mubr.bf16.gmra.mrb[0].mxu0 %v590
        %v908 = vpop.f32.mrb[0].mxu0
        %v909 = vadd.f32 %v562, %v908
        %v910 = vpop.f32.mrb[0].mxu0
        %v911 = vpop.f32.mrb[0].mxu0
        %v912 = vadd.f32 %v562, %v911
        %v913 = vpop.f32.mrb[0].mxu0
        %914 = vdwg.mxu0
        %v915 = vmax.f32 %v701, 0.0
        %v916 = vmax.f32 %v704, 0.0
        %v917 = vmax.f32 %v709, 0.0
        %v918 = vmax.f32 %v712, 0.0
        %v919 = vmax.f32 %v717, 0.0
        %v920 = vmax.f32 %v720, 0.0
        %v921 = vmax.f32 %v725, 0.0
        %v922 = vmax.f32 %v728, 0.0
        %v923 = vmax.f32 %v733, 0.0
        %v924 = vmax.f32 %v736, 0.0
        %v925 = vmax.f32 %v741, 0.0
        %v926 = vmax.f32 %v744, 0.0
        %v927 = vmax.f32 %v749, 0.0
        %v928 = vmax.f32 %v752, 0.0
        %v929 = vmax.f32 %v757, 0.0
        %v930 = vmax.f32 %v760, 0.0
        %v931 = vmax.f32 %v765, 0.0
        %v932 = vmax.f32 %v768, 0.0
        %v933 = vmax.f32 %v773, 0.0
        %v934 = vmax.f32 %v776, 0.0
        %v935 = vmax.f32 %v781, 0.0
        %v936 = vmax.f32 %v784, 0.0
        %v937 = vmax.f32 %v789, 0.0
        %v938 = vmax.f32 %v792, 0.0
        %v939 = vmax.f32 %v797, 0.0
        %v940 = vmax.f32 %v800, 0.0
        %v941 = vmax.f32 %v805, 0.0
        %v942 = vmax.f32 %v808, 0.0
        %v943 = vmax.f32 %v813, 0.0
        %v944 = vmax.f32 %v816, 0.0
        %v945 = vmax.f32 %v821, 0.0
        %v946 = vmax.f32 %v824, 0.0
        %v947 = vmax.f32 %v829, 0.0
        %v948 = vmax.f32 %v832, 0.0
        %v949 = vmax.f32 %v837, 0.0
        %v950 = vmax.f32 %v840, 0.0
        %v951 = vmax.f32 %v845, 0.0
        %v952 = vmax.f32 %v848, 0.0
        %v953 = vmax.f32 %v853, 0.0
        %v954 = vmax.f32 %v856, 0.0
        %v955 = vmax.f32 %v861, 0.0
        %v956 = vmax.f32 %v864, 0.0
        %v957 = vmax.f32 %v869, 0.0
        %v958 = vmax.f32 %v872, 0.0
        %v959 = vmax.f32 %v877, 0.0
        %v960 = vmax.f32 %v880, 0.0
        %v961 = vmax.f32 %v885, 0.0
        %v962 = vmax.f32 %v888, 0.0
        %v963 = vmax.f32 %v893, 0.0
        %v964 = vmax.f32 %v896, 0.0
        %v965 = vmax.f32 %v901, 0.0
        %v966 = vmax.f32 %v904, 0.0
        %v967 = vmax.f32 %v909, 0.0
        %v968 = vmax.f32 %v912, 0.0
        %v969 = vlaneseq
        %v970 = vshrl.u32 %v969, 7
        %v971 = vadd.s32 %v970, 8
        %v972 = vadd.s32 %v970, 16
        %s973 = smul.u32 %s31, 16
        %s974 = ssub.s32 %s973, 1
        %v975 = vstv %s974
        %v976 = vadd.s32 %v975, 1
        %v977 = vadd.s32 %v975, 2
        %v978 = vadd.s32 %v975, 3
        %v979 = vadd.s32 %v975, 4
        %v980 = vadd.s32 %v975, 5
        %v981 = vadd.s32 %v975, 6
        %v982 = vadd.s32 %v975, 7
        %v983 = vadd.s32 %v975, 8
        %v984 = vadd.s32 %v975, 9
        %v985 = vadd.s32 %v975, 10
        %v986 = vadd.s32 %v975, 11
        %v987 = vadd.s32 %v975, 12
        %v988 = vadd.s32 %v975, 13
        %v989 = vadd.s32 %v975, 14
        %v990 = vadd.s32 %v975, 15
        %v991 = vadd.s32 %v975, 16
        %v992 = vadd.s32 %v975, 17
        %vm993 = vcmp.ge.s32.totalorder %v975, 0
        %vm994 = vcmp.ge.s32.totalorder %v976, 0
        %vm995 = vcmp.ge.s32.totalorder %v977, 0
        %vm996 = vcmp.ge.s32.totalorder %v978, 0
        %vm997 = vcmp.ge.s32.totalorder %v979, 0
        %vm998 = vcmp.ge.s32.totalorder %v980, 0
        %vm999 = vcmp.ge.s32.totalorder %v981, 0
        %vm1000 = vcmp.ge.s32.totalorder %v982, 0
        %vm1001 = vcmp.ge.s32.totalorder %v983, 0
        %vm1002 = vcmp.ge.s32.totalorder %v984, 0
        %vm1003 = vcmp.ge.s32.totalorder %v985, 0
        %vm1004 = vcmp.ge.s32.totalorder %v986, 0
        %vm1005 = vcmp.ge.s32.totalorder %v987, 0
        %vm1006 = vcmp.ge.s32.totalorder %v988, 0
        %vm1007 = vcmp.ge.s32.totalorder %v989, 0
        %vm1008 = vcmp.ge.s32.totalorder %v990, 0
        %vm1009 = vcmp.ge.s32.totalorder %v991, 0
        %vm1010 = vcmp.ge.s32.totalorder %v992, 0
        %vm1011 = vcmp.lt.s32.totalorder %v975, 16
        %vm1012 = vcmp.lt.s32.totalorder %v976, 16
        %vm1013 = vcmp.lt.s32.totalorder %v977, 16
        %vm1014 = vcmp.lt.s32.totalorder %v978, 16
        %vm1015 = vcmp.lt.s32.totalorder %v979, 16
        %vm1016 = vcmp.lt.s32.totalorder %v980, 16
        %vm1017 = vcmp.lt.s32.totalorder %v981, 16
        %vm1018 = vcmp.lt.s32.totalorder %v982, 16
        %vm1019 = vcmp.lt.s32.totalorder %v983, 16
        %vm1020 = vcmp.lt.s32.totalorder %v984, 16
        %vm1021 = vcmp.lt.s32.totalorder %v985, 16
        %vm1022 = vcmp.lt.s32.totalorder %v986, 16
        %vm1023 = vcmp.lt.s32.totalorder %v987, 16
        %vm1024 = vcmp.lt.s32.totalorder %v988, 16
        %vm1025 = vcmp.lt.s32.totalorder %v989, 16
        %vm1026 = vcmp.lt.s32.totalorder %v990, 16
        %vm1027 = vcmp.lt.s32.totalorder %v991, 16
        %vm1028 = vcmp.lt.s32.totalorder %v992, 16
        %vm1029 = vmand %vm993, %vm1011
        %vm1030 = vmand %vm994, %vm1012
        %vm1031 = vmand %vm995, %vm1013
        %vm1032 = vmand %vm996, %vm1014
        %vm1033 = vmand %vm997, %vm1015
        %vm1034 = vmand %vm998, %vm1016
        %vm1035 = vmand %vm999, %vm1017
        %vm1036 = vmand %vm1000, %vm1018
        %vm1037 = vmand %vm1001, %vm1019
        %vm1038 = vmand %vm1002, %vm1020
        %vm1039 = vmand %vm1003, %vm1021
        %vm1040 = vmand %vm1004, %vm1022
        %vm1041 = vmand %vm1005, %vm1023
        %vm1042 = vmand %vm1006, %vm1024
        %vm1043 = vmand %vm1007, %vm1025
        %vm1044 = vmand %vm1008, %vm1026
        %vm1045 = vmand %vm1009, %vm1027
        %vm1046 = vmand %vm1010, %vm1028
        %vm1047 = vcmp.ge.s32.totalorder %v970, 1
        %vm1048 = vcmp.ge.s32.totalorder %v971, 1
        %vm1049 = vcmp.ge.s32.totalorder %v972, 1
        %vm1050 = vmand %vm1029, %vm1047
        %vm1051 = vmand %vm1029, %vm1048
        %vm1052 = vmand %vm1029, %vm1049
        %vm1053 = vmand %vm1030, %vm1047
        %vm1054 = vmand %vm1030, %vm1048
        %vm1055 = vmand %vm1030, %vm1049
        %vm1056 = vmand %vm1031, %vm1047
        %vm1057 = vmand %vm1031, %vm1048
        %vm1058 = vmand %vm1031, %vm1049
        %vm1059 = vmand %vm1032, %vm1047
        %vm1060 = vmand %vm1032, %vm1048
        %vm1061 = vmand %vm1032, %vm1049
        %vm1062 = vmand %vm1033, %vm1047
        %vm1063 = vmand %vm1033, %vm1048
        %vm1064 = vmand %vm1033, %vm1049
        %vm1065 = vmand %vm1034, %vm1047
        %vm1066 = vmand %vm1034, %vm1048
        %vm1067 = vmand %vm1034, %vm1049
        %vm1068 = vmand %vm1035, %vm1047
        %vm1069 = vmand %vm1035, %vm1048
        %vm1070 = vmand %vm1035, %vm1049
        %vm1071 = vmand %vm1036, %vm1047
        %vm1072 = vmand %vm1036, %vm1048
        %vm1073 = vmand %vm1036, %vm1049
        %vm1074 = vmand %vm1037, %vm1047
        %vm1075 = vmand %vm1037, %vm1048
        %vm1076 = vmand %vm1037, %vm1049
        %vm1077 = vmand %vm1038, %vm1047
        %vm1078 = vmand %vm1038, %vm1048
        %vm1079 = vmand %vm1038, %vm1049
        %vm1080 = vmand %vm1039, %vm1047
        %vm1081 = vmand %vm1039, %vm1048
        %vm1082 = vmand %vm1039, %vm1049
        %vm1083 = vmand %vm1040, %vm1047
        %vm1084 = vmand %vm1040, %vm1048
        %vm1085 = vmand %vm1040, %vm1049
        %vm1086 = vmand %vm1041, %vm1047
        %vm1087 = vmand %vm1041, %vm1048
        %vm1088 = vmand %vm1041, %vm1049
        %vm1089 = vmand %vm1042, %vm1047
        %vm1090 = vmand %vm1042, %vm1048
        %vm1091 = vmand %vm1042, %vm1049
        %vm1092 = vmand %vm1043, %vm1047
        %vm1093 = vmand %vm1043, %vm1048
        %vm1094 = vmand %vm1043, %vm1049
        %vm1095 = vmand %vm1044, %vm1047
        %vm1096 = vmand %vm1044, %vm1048
        %vm1097 = vmand %vm1044, %vm1049
        %vm1098 = vmand %vm1045, %vm1047
        %vm1099 = vmand %vm1045, %vm1048
        %vm1100 = vmand %vm1045, %vm1049
        %vm1101 = vmand %vm1046, %vm1047
        %vm1102 = vmand %vm1046, %vm1048
        %vm1103 = vmand %vm1046, %vm1049
        %vm1104 = vcmp.lt.s32.totalorder %v970, 17
        %vm1105 = vcmp.lt.s32.totalorder %v971, 17
        %vm1106 = vcmp.lt.s32.totalorder %v972, 17
        %vm1107 = vmand %vm1050, %vm1104
        %vm1108 = vmand %vm1051, %vm1105
        %vm1109 = vmand %vm1052, %vm1106
        %vm1110 = vmand %vm1053, %vm1104
        %vm1111 = vmand %vm1054, %vm1105
        %vm1112 = vmand %vm1055, %vm1106
        %vm1113 = vmand %vm1056, %vm1104
        %vm1114 = vmand %vm1057, %vm1105
        %vm1115 = vmand %vm1058, %vm1106
        %vm1116 = vmand %vm1059, %vm1104
        %vm1117 = vmand %vm1060, %vm1105
        %vm1118 = vmand %vm1061, %vm1106
        %vm1119 = vmand %vm1062, %vm1104
        %vm1120 = vmand %vm1063, %vm1105
        %vm1121 = vmand %vm1064, %vm1106
        %vm1122 = vmand %vm1065, %vm1104
        %vm1123 = vmand %vm1066, %vm1105
        %vm1124 = vmand %vm1067, %vm1106
        %vm1125 = vmand %vm1068, %vm1104
        %vm1126 = vmand %vm1069, %vm1105
        %vm1127 = vmand %vm1070, %vm1106
        %vm1128 = vmand %vm1071, %vm1104
        %vm1129 = vmand %vm1072, %vm1105
        %vm1130 = vmand %vm1073, %vm1106
        %vm1131 = vmand %vm1074, %vm1104
        %vm1132 = vmand %vm1075, %vm1105
        %vm1133 = vmand %vm1076, %vm1106
        %vm1134 = vmand %vm1077, %vm1104
        %vm1135 = vmand %vm1078, %vm1105
        %vm1136 = vmand %vm1079, %vm1106
        %vm1137 = vmand %vm1080, %vm1104
        %vm1138 = vmand %vm1081, %vm1105
        %vm1139 = vmand %vm1082, %vm1106
        %vm1140 = vmand %vm1083, %vm1104
        %vm1141 = vmand %vm1084, %vm1105
        %vm1142 = vmand %vm1085, %vm1106
        %vm1143 = vmand %vm1086, %vm1104
        %vm1144 = vmand %vm1087, %vm1105
        %vm1145 = vmand %vm1088, %vm1106
        %vm1146 = vmand %vm1089, %vm1104
        %vm1147 = vmand %vm1090, %vm1105
        %vm1148 = vmand %vm1091, %vm1106
        %vm1149 = vmand %vm1092, %vm1104
        %vm1150 = vmand %vm1093, %vm1105
        %vm1151 = vmand %vm1094, %vm1106
        %vm1152 = vmand %vm1095, %vm1104
        %vm1153 = vmand %vm1096, %vm1105
        %vm1154 = vmand %vm1097, %vm1106
        %vm1155 = vmand %vm1098, %vm1104
        %vm1156 = vmand %vm1099, %vm1105
        %vm1157 = vmand %vm1100, %vm1106
        %vm1158 = vmand %vm1101, %vm1104
        %vm1159 = vmand %vm1102, %vm1105
        %vm1160 = vmand %vm1103, %vm1106
        %v1161 = vsel %vm1107, 1, 0
        %v1162 = vsel %vm1108, 1, 0
        %v1163 = vsel %vm1109, 1, 0
        %v1164 = vsel %vm1110, 1, 0
        %v1165 = vsel %vm1111, 1, 0
        %v1166 = vsel %vm1112, 1, 0
        %v1167 = vsel %vm1113, 1, 0
        %v1168 = vsel %vm1114, 1, 0
        %v1169 = vsel %vm1115, 1, 0
        %v1170 = vsel %vm1116, 1, 0
        %v1171 = vsel %vm1117, 1, 0
        %v1172 = vsel %vm1118, 1, 0
        %v1173 = vsel %vm1119, 1, 0
        %v1174 = vsel %vm1120, 1, 0
        %v1175 = vsel %vm1121, 1, 0
        %v1176 = vsel %vm1122, 1, 0
        %v1177 = vsel %vm1123, 1, 0
        %v1178 = vsel %vm1124, 1, 0
        %v1179 = vsel %vm1125, 1, 0
        %v1180 = vsel %vm1126, 1, 0
        %v1181 = vsel %vm1127, 1, 0
        %v1182 = vsel %vm1128, 1, 0
        %v1183 = vsel %vm1129, 1, 0
        %v1184 = vsel %vm1130, 1, 0
        %v1185 = vsel %vm1131, 1, 0
        %v1186 = vsel %vm1132, 1, 0
        %v1187 = vsel %vm1133, 1, 0
        %v1188 = vsel %vm1134, 1, 0
        %v1189 = vsel %vm1135, 1, 0
        %v1190 = vsel %vm1136, 1, 0
        %v1191 = vsel %vm1137, 1, 0
        %v1192 = vsel %vm1138, 1, 0
        %v1193 = vsel %vm1139, 1, 0
        %v1194 = vsel %vm1140, 1, 0
        %v1195 = vsel %vm1141, 1, 0
        %v1196 = vsel %vm1142, 1, 0
        %v1197 = vsel %vm1143, 1, 0
        %v1198 = vsel %vm1144, 1, 0
        %v1199 = vsel %vm1145, 1, 0
        %v1200 = vsel %vm1146, 1, 0
        %v1201 = vsel %vm1147, 1, 0
        %v1202 = vsel %vm1148, 1, 0
        %v1203 = vsel %vm1149, 1, 0
        %v1204 = vsel %vm1150, 1, 0
        %v1205 = vsel %vm1151, 1, 0
        %v1206 = vsel %vm1152, 1, 0
        %v1207 = vsel %vm1153, 1, 0
        %v1208 = vsel %vm1154, 1, 0
        %v1209 = vsel %vm1155, 1, 0
        %v1210 = vsel %vm1156, 1, 0
        %v1211 = vsel %vm1157, 1, 0
        %v1212 = vsel %vm1158, 1, 0
        %v1213 = vsel %vm1159, 1, 0
        %v1214 = vsel %vm1160, 1, 0
        %vm1215 = vcmp.eq.s32.totalorder %v1161, 1
        %vm1216 = vcmp.eq.s32.totalorder %v1162, 1
        %vm1217 = vcmp.eq.s32.totalorder %v1163, 1
        %vm1218 = vcmp.eq.s32.totalorder %v1164, 1
        %vm1219 = vcmp.eq.s32.totalorder %v1165, 1
        %vm1220 = vcmp.eq.s32.totalorder %v1166, 1
        %vm1221 = vcmp.eq.s32.totalorder %v1167, 1
        %vm1222 = vcmp.eq.s32.totalorder %v1168, 1
        %vm1223 = vcmp.eq.s32.totalorder %v1169, 1
        %vm1224 = vcmp.eq.s32.totalorder %v1170, 1
        %vm1225 = vcmp.eq.s32.totalorder %v1171, 1
        %vm1226 = vcmp.eq.s32.totalorder %v1172, 1
        %vm1227 = vcmp.eq.s32.totalorder %v1173, 1
        %vm1228 = vcmp.eq.s32.totalorder %v1174, 1
        %vm1229 = vcmp.eq.s32.totalorder %v1175, 1
        %vm1230 = vcmp.eq.s32.totalorder %v1176, 1
        %vm1231 = vcmp.eq.s32.totalorder %v1177, 1
        %vm1232 = vcmp.eq.s32.totalorder %v1178, 1
        %vm1233 = vcmp.eq.s32.totalorder %v1179, 1
        %vm1234 = vcmp.eq.s32.totalorder %v1180, 1
        %vm1235 = vcmp.eq.s32.totalorder %v1181, 1
        %vm1236 = vcmp.eq.s32.totalorder %v1182, 1
        %vm1237 = vcmp.eq.s32.totalorder %v1183, 1
        %vm1238 = vcmp.eq.s32.totalorder %v1184, 1
        %vm1239 = vcmp.eq.s32.totalorder %v1185, 1
        %vm1240 = vcmp.eq.s32.totalorder %v1186, 1
        %vm1241 = vcmp.eq.s32.totalorder %v1187, 1
        %vm1242 = vcmp.eq.s32.totalorder %v1188, 1
        %vm1243 = vcmp.eq.s32.totalorder %v1189, 1
        %vm1244 = vcmp.eq.s32.totalorder %v1190, 1
        %vm1245 = vcmp.eq.s32.totalorder %v1191, 1
        %vm1246 = vcmp.eq.s32.totalorder %v1192, 1
        %vm1247 = vcmp.eq.s32.totalorder %v1193, 1
        %vm1248 = vcmp.eq.s32.totalorder %v1194, 1
        %vm1249 = vcmp.eq.s32.totalorder %v1195, 1
        %vm1250 = vcmp.eq.s32.totalorder %v1196, 1
        %vm1251 = vcmp.eq.s32.totalorder %v1197, 1
        %vm1252 = vcmp.eq.s32.totalorder %v1198, 1
        %vm1253 = vcmp.eq.s32.totalorder %v1199, 1
        %vm1254 = vcmp.eq.s32.totalorder %v1200, 1
        %vm1255 = vcmp.eq.s32.totalorder %v1201, 1
        %vm1256 = vcmp.eq.s32.totalorder %v1202, 1
        %vm1257 = vcmp.eq.s32.totalorder %v1203, 1
        %vm1258 = vcmp.eq.s32.totalorder %v1204, 1
        %vm1259 = vcmp.eq.s32.totalorder %v1205, 1
        %vm1260 = vcmp.eq.s32.totalorder %v1206, 1
        %vm1261 = vcmp.eq.s32.totalorder %v1207, 1
        %vm1262 = vcmp.eq.s32.totalorder %v1208, 1
        %vm1263 = vcmp.eq.s32.totalorder %v1209, 1
        %vm1264 = vcmp.eq.s32.totalorder %v1210, 1
        %vm1265 = vcmp.eq.s32.totalorder %v1211, 1
        %vm1266 = vcmp.eq.s32.totalorder %v1212, 1
        %vm1267 = vcmp.eq.s32.totalorder %v1213, 1
        %vm1268 = vcmp.eq.s32.totalorder %v1214, 1
        %v1269 = vsel %vm1215, %v915, 0.0
        %v1270 = vsel %vm1216, %v916, 0.0
        %v1271 = vsel %vm1217, %v917, 0.0
        %v1272 = vsel %vm1218, %v918, 0.0
        %v1273 = vsel %vm1219, %v919, 0.0
        %v1274 = vsel %vm1220, %v920, 0.0
        %v1275 = vsel %vm1221, %v921, 0.0
        %v1276 = vsel %vm1222, %v922, 0.0
        %v1277 = vsel %vm1223, %v923, 0.0
        %v1278 = vsel %vm1224, %v924, 0.0
        %v1279 = vsel %vm1225, %v925, 0.0
        %v1280 = vsel %vm1226, %v926, 0.0
        %v1281 = vsel %vm1227, %v927, 0.0
        %v1282 = vsel %vm1228, %v928, 0.0
        %v1283 = vsel %vm1229, %v929, 0.0
        %v1284 = vsel %vm1230, %v930, 0.0
        %v1285 = vsel %vm1231, %v931, 0.0
        %v1286 = vsel %vm1232, %v932, 0.0
        %v1287 = vsel %vm1233, %v933, 0.0
        %v1288 = vsel %vm1234, %v934, 0.0
        %v1289 = vsel %vm1235, %v935, 0.0
        %v1290 = vsel %vm1236, %v936, 0.0
        %v1291 = vsel %vm1237, %v937, 0.0
        %v1292 = vsel %vm1238, %v938, 0.0
        %v1293 = vsel %vm1239, %v939, 0.0
        %v1294 = vsel %vm1240, %v940, 0.0
        %v1295 = vsel %vm1241, %v941, 0.0
        %v1296 = vsel %vm1242, %v942, 0.0
        %v1297 = vsel %vm1243, %v943, 0.0
        %v1298 = vsel %vm1244, %v944, 0.0
        %v1299 = vsel %vm1245, %v945, 0.0
        %v1300 = vsel %vm1246, %v946, 0.0
        %v1301 = vsel %vm1247, %v947, 0.0
        %v1302 = vsel %vm1248, %v948, 0.0
        %v1303 = vsel %vm1249, %v949, 0.0
        %v1304 = vsel %vm1250, %v950, 0.0
        %v1305 = vsel %vm1251, %v951, 0.0
        %v1306 = vsel %vm1252, %v952, 0.0
        %v1307 = vsel %vm1253, %v953, 0.0
        %v1308 = vsel %vm1254, %v954, 0.0
        %v1309 = vsel %vm1255, %v955, 0.0
        %v1310 = vsel %vm1256, %v956, 0.0
        %v1311 = vsel %vm1257, %v957, 0.0
        %v1312 = vsel %vm1258, %v958, 0.0
        %v1313 = vsel %vm1259, %v959, 0.0
        %v1314 = vsel %vm1260, %v960, 0.0
        %v1315 = vsel %vm1261, %v961, 0.0
        %v1316 = vsel %vm1262, %v962, 0.0
        %v1317 = vsel %vm1263, %v963, 0.0
        %v1318 = vsel %vm1264, %v964, 0.0
        %v1319 = vsel %vm1265, %v965, 0.0
        %v1320 = vsel %vm1266, %v966, 0.0
        %v1321 = vsel %vm1267, %v967, 0.0
        %v1322 = vsel %vm1268, %v968, 0.0
        %v1323 = vpack.c.bf16 %v1270, %v1269
        %v1324 = vpack.c.bf16 %v1271, %v1271
        %v1325 = vpack.c.bf16 %v1273, %v1272
        %v1326 = vpack.c.bf16 %v1274, %v1274
        %v1327 = vpack.c.bf16 %v1276, %v1275
        %v1328 = vpack.c.bf16 %v1277, %v1277
        %v1329 = vpack.c.bf16 %v1279, %v1278
        %v1330 = vpack.c.bf16 %v1280, %v1280
        %v1331 = vpack.c.bf16 %v1282, %v1281
        %v1332 = vpack.c.bf16 %v1283, %v1283
        %v1333 = vpack.c.bf16 %v1285, %v1284
        %v1334 = vpack.c.bf16 %v1286, %v1286
        %v1335 = vpack.c.bf16 %v1288, %v1287
        %v1336 = vpack.c.bf16 %v1289, %v1289
        %v1337 = vpack.c.bf16 %v1291, %v1290
        %v1338 = vpack.c.bf16 %v1292, %v1292
        %v1339 = vpack.c.bf16 %v1294, %v1293
        %v1340 = vpack.c.bf16 %v1295, %v1295
        %v1341 = vpack.c.bf16 %v1297, %v1296
        %v1342 = vpack.c.bf16 %v1298, %v1298
        %v1343 = vpack.c.bf16 %v1300, %v1299
        %v1344 = vpack.c.bf16 %v1301, %v1301
        %v1345 = vpack.c.bf16 %v1303, %v1302
        %v1346 = vpack.c.bf16 %v1304, %v1304
        %v1347 = vpack.c.bf16 %v1306, %v1305
        %v1348 = vpack.c.bf16 %v1307, %v1307
        %v1349 = vpack.c.bf16 %v1309, %v1308
        %v1350 = vpack.c.bf16 %v1310, %v1310
        %v1351 = vpack.c.bf16 %v1312, %v1311
        %v1352 = vpack.c.bf16 %v1313, %v1313
        %v1353 = vpack.c.bf16 %v1315, %v1314
        %v1354 = vpack.c.bf16 %v1316, %v1316
        %v1355 = vpack.c.bf16 %v1318, %v1317
        %v1356 = vpack.c.bf16 %v1319, %v1319
        %v1357 = vpack.c.bf16 %v1321, %v1320
        %v1358 = vpack.c.bf16 %v1322, %v1322
        %v1395 = vunpack.c.l.b16 %v1323
        %v1396 = vunpack.c.h.b16 %v1323
        %v1397 = vunpack.c.l.b16 %v1324
        %v1398 = vunpack.c.l.b16 %v1325
        %v1399 = vunpack.c.h.b16 %v1325
        %v1400 = vunpack.c.l.b16 %v1326
        %v1401 = vunpack.c.l.b16 %v1327
        %v1402 = vunpack.c.h.b16 %v1327
        %v1403 = vunpack.c.l.b16 %v1328
        %v1404 = vunpack.c.l.b16 %v1329
        %v1405 = vunpack.c.h.b16 %v1329
        %v1406 = vunpack.c.l.b16 %v1330
        %v1407 = vunpack.c.l.b16 %v1331
        %v1408 = vunpack.c.h.b16 %v1331
        %v1409 = vunpack.c.l.b16 %v1332
        %v1410 = vunpack.c.l.b16 %v1333
        %v1411 = vunpack.c.h.b16 %v1333
        %v1412 = vunpack.c.l.b16 %v1334
        %v1413 = vunpack.c.l.b16 %v1335
        %v1414 = vunpack.c.h.b16 %v1335
        %v1415 = vunpack.c.l.b16 %v1336
        %v1416 = vunpack.c.l.b16 %v1337
        %v1417 = vunpack.c.h.b16 %v1337
        %v1418 = vunpack.c.l.b16 %v1338
        %v1419 = vunpack.c.l.b16 %v1339
        %v1420 = vunpack.c.h.b16 %v1339
        %v1421 = vunpack.c.l.b16 %v1340
        %v1422 = vunpack.c.l.b16 %v1341
        %v1423 = vunpack.c.h.b16 %v1341
        %v1424 = vunpack.c.l.b16 %v1342
        %v1425 = vunpack.c.l.b16 %v1343
        %v1426 = vunpack.c.h.b16 %v1343
        %v1427 = vunpack.c.l.b16 %v1344
        %v1428 = vunpack.c.l.b16 %v1345
        %v1429 = vunpack.c.h.b16 %v1345
        %v1430 = vunpack.c.l.b16 %v1346
        %v1431 = vunpack.c.l.b16 %v1347
        %v1432 = vunpack.c.h.b16 %v1347
        %v1433 = vunpack.c.l.b16 %v1348
        %v1434 = vunpack.c.l.b16 %v1349
        %v1435 = vunpack.c.h.b16 %v1349
        %v1436 = vunpack.c.l.b16 %v1350
        %v1437 = vunpack.c.l.b16 %v1351
        %v1438 = vunpack.c.h.b16 %v1351
        %v1439 = vunpack.c.l.b16 %v1352
        %v1440 = vunpack.c.l.b16 %v1353
        %v1441 = vunpack.c.h.b16 %v1353
        %v1442 = vunpack.c.l.b16 %v1354
        %v1443 = vunpack.c.l.b16 %v1355
        %v1444 = vunpack.c.h.b16 %v1355
        %v1445 = vunpack.c.l.b16 %v1356
        %v1446 = vunpack.c.l.b16 %v1357
        %v1447 = vunpack.c.h.b16 %v1357
        %v1448 = vunpack.c.l.b16 %v1358
        %v1449 = vpack.c.b16 %v1395, %v1395
        %v1450 = vpack.c.b16 %v1396, %v1396
        %v1451 = vpack.c.b16 %v1397, %v1397
        %v1452 = vpack.c.b16 %v1398, %v1398
        %v1453 = vpack.c.b16 %v1399, %v1399
        %v1454 = vpack.c.b16 %v1400, %v1400
        %v1455 = vpack.c.b16 %v1401, %v1401
        %v1456 = vpack.c.b16 %v1402, %v1402
        %v1457 = vpack.c.b16 %v1403, %v1403
        %v1458 = vpack.c.b16 %v1404, %v1404
        %v1459 = vpack.c.b16 %v1405, %v1405
        %v1460 = vpack.c.b16 %v1406, %v1406
        %v1461 = vpack.c.b16 %v1407, %v1407
        %v1462 = vpack.c.b16 %v1408, %v1408
        %v1463 = vpack.c.b16 %v1409, %v1409
        %v1464 = vpack.c.b16 %v1410, %v1410
        %v1465 = vpack.c.b16 %v1411, %v1411
        %v1466 = vpack.c.b16 %v1412, %v1412
        %v1467 = vpack.c.b16 %v1413, %v1413
        %v1468 = vpack.c.b16 %v1414, %v1414
        %v1469 = vpack.c.b16 %v1415, %v1415
        %v1470 = vpack.c.b16 %v1416, %v1416
        %v1471 = vpack.c.b16 %v1417, %v1417
        %v1472 = vpack.c.b16 %v1418, %v1418
        %v1473 = vpack.c.b16 %v1419, %v1419
        %v1474 = vpack.c.b16 %v1420, %v1420
        %v1475 = vpack.c.b16 %v1421, %v1421
        %v1476 = vpack.c.b16 %v1422, %v1422
        %v1477 = vpack.c.b16 %v1423, %v1423
        %v1478 = vpack.c.b16 %v1424, %v1424
        %v1479 = vpack.c.b16 %v1425, %v1425
        %v1480 = vpack.c.b16 %v1426, %v1426
        %v1481 = vpack.c.b16 %v1427, %v1427
        %v1482 = vpack.c.b16 %v1428, %v1428
        %v1483 = vpack.c.b16 %v1429, %v1429
        %v1484 = vpack.c.b16 %v1430, %v1430
        %v1485 = vpack.c.b16 %v1431, %v1431
        %v1486 = vpack.c.b16 %v1432, %v1432
        %v1487 = vpack.c.b16 %v1433, %v1433
        %v1488 = vpack.c.b16 %v1434, %v1434
        %v1489 = vpack.c.b16 %v1435, %v1435
        %v1490 = vpack.c.b16 %v1436, %v1436
        %v1491 = vpack.c.b16 %v1437, %v1437
        %v1492 = vpack.c.b16 %v1438, %v1438
        %v1493 = vpack.c.b16 %v1439, %v1439
        %v1494 = vpack.c.b16 %v1440, %v1440
        %v1495 = vpack.c.b16 %v1441, %v1441
        %v1496 = vpack.c.b16 %v1442, %v1442
        %v1497 = vpack.c.b16 %v1443, %v1443
        %v1498 = vpack.c.b16 %v1444, %v1444
        %v1499 = vpack.c.b16 %v1445, %v1445
        %v1500 = vpack.c.b16 %v1446, %v1446
        %v1501 = vpack.c.b16 %v1447, %v1447
        %v1502 = vpack.c.b16 %v1448, %v1448
        %1557 = vst [vmem:[#allocation2] sm:$0xf] %v1449
        %1558 = vst [vmem:[#allocation2 + $0x4] sm:$0xf] %v1450
        %1559 = vst [vmem:[#allocation2 + $0x8] sm:$0xf] %v1451
        %1560 = vst [vmem:[#allocation2 + $0xc] sm:$0xf] %v1452
        %1561 = vst [vmem:[#allocation2 + $0x10] sm:$0xf] %v1453
        %1562 = vst [vmem:[#allocation2 + $0x14] sm:$0xf] %v1454
        %1563 = vst [vmem:[#allocation2 + $0x18] sm:$0xf] %v1455
        %1564 = vst [vmem:[#allocation2 + $0x1c] sm:$0xf] %v1456
        %1565 = vst [vmem:[#allocation2 + $0x20] sm:$0xf] %v1457
        %1566 = vst [vmem:[#allocation2 + $0x24] sm:$0xf] %v1458
        %1567 = vst [vmem:[#allocation2 + $0x28] sm:$0xf] %v1459
        %1568 = vst [vmem:[#allocation2 + $0x2c] sm:$0xf] %v1460
        %1569 = vst [vmem:[#allocation2 + $0x30] sm:$0xf] %v1461
        %1570 = vst [vmem:[#allocation2 + $0x34] sm:$0xf] %v1462
        %1571 = vst [vmem:[#allocation2 + $0x38] sm:$0xf] %v1463
        %1572 = vst [vmem:[#allocation2 + $0x3c] sm:$0xf] %v1464
        %1573 = vst [vmem:[#allocation2 + $0x40] sm:$0xf] %v1465
        %1574 = vst [vmem:[#allocation2 + $0x44] sm:$0xf] %v1466
        %1575 = vst [vmem:[#allocation2 + $0x48] sm:$0xf] %v1467
        %1576 = vst [vmem:[#allocation2 + $0x4c] sm:$0xf] %v1468
        %1577 = vst [vmem:[#allocation2 + $0x50] sm:$0xf] %v1469
        %1578 = vst [vmem:[#allocation2 + $0x54] sm:$0xf] %v1470
        %1579 = vst [vmem:[#allocation2 + $0x58] sm:$0xf] %v1471
        %1580 = vst [vmem:[#allocation2 + $0x5c] sm:$0xf] %v1472
        %1581 = vst [vmem:[#allocation2 + $0x60] sm:$0xf] %v1473
        %1582 = vst [vmem:[#allocation2 + $0x64] sm:$0xf] %v1474
        %1583 = vst [vmem:[#allocation2 + $0x68] sm:$0xf] %v1475
        %1584 = vst [vmem:[#allocation2 + $0x6c] sm:$0xf] %v1476
        %1585 = vst [vmem:[#allocation2 + $0x70] sm:$0xf] %v1477
        %1586 = vst [vmem:[#allocation2 + $0x74] sm:$0xf] %v1478
        %1587 = vst [vmem:[#allocation2 + $0x78] sm:$0xf] %v1479
        %1588 = vst [vmem:[#allocation2 + $0x7c] sm:$0xf] %v1480
        %1589 = vst [vmem:[#allocation2 + $0x80] sm:$0xf] %v1481
        %1590 = vst [vmem:[#allocation2 + $0x84] sm:$0xf] %v1482
        %1591 = vst [vmem:[#allocation2 + $0x88] sm:$0xf] %v1483
        %1592 = vst [vmem:[#allocation2 + $0x8c] sm:$0xf] %v1484
        %1593 = vst [vmem:[#allocation2 + $0x90] sm:$0xf] %v1485
        %1594 = vst [vmem:[#allocation2 + $0x94] sm:$0xf] %v1486
        %1595 = vst [vmem:[#allocation2 + $0x98] sm:$0xf] %v1487
        %1596 = vst [vmem:[#allocation2 + $0x9c] sm:$0xf] %v1488
        %1597 = vst [vmem:[#allocation2 + $0xa0] sm:$0xf] %v1489
        %1598 = vst [vmem:[#allocation2 + $0xa4] sm:$0xf] %v1490
        %1599 = vst [vmem:[#allocation2 + $0xa8] sm:$0xf] %v1491
        %1600 = vst [vmem:[#allocation2 + $0xac] sm:$0xf] %v1492
        %1601 = vst [vmem:[#allocation2 + $0xb0] sm:$0xf] %v1493
        %1602 = vst [vmem:[#allocation2 + $0xb4] sm:$0xf] %v1494
        %1603 = vst [vmem:[#allocation2 + $0xb8] sm:$0xf] %v1495
        %1604 = vst [vmem:[#allocation2 + $0xbc] sm:$0xf] %v1496
        %1605 = vst [vmem:[#allocation2 + $0xc0] sm:$0xf] %v1497
        %1606 = vst [vmem:[#allocation2 + $0xc4] sm:$0xf] %v1498
        %1607 = vst [vmem:[#allocation2 + $0xc8] sm:$0xf] %v1499
        %1608 = vst [vmem:[#allocation2 + $0xcc] sm:$0xf] %v1500
        %1609 = vst [vmem:[#allocation2 + $0xd0] sm:$0xf] %v1501
        %1610 = vst [vmem:[#allocation2 + $0xd4] sm:$0xf] %v1502
        %v1611 = vld [vmem:[#allocation2] sm:$0xf]
        %v1612 = vld [vmem:[#allocation2 + $0x4] sm:$0xf]
        %v1613 = vld [vmem:[#allocation2 + $0xc] sm:$0xf]
        %v1614 = vld [vmem:[#allocation2 + $0x10] sm:$0xf]
        %v1615 = vld [vmem:[#allocation2 + $0x18] sm:$0xf]
        %v1616 = vld [vmem:[#allocation2 + $0x1c] sm:$0xf]
        %v1617 = vld [vmem:[#allocation2 + $0x24] sm:$0xf]
        %v1618 = vld [vmem:[#allocation2 + $0x28] sm:$0xf]
        %v1619 = vld [vmem:[#allocation2 + $0x30] sm:$0xf]
        %v1620 = vld [vmem:[#allocation2 + $0x34] sm:$0xf]
        %v1621 = vld [vmem:[#allocation2 + $0x3c] sm:$0xf]
        %v1622 = vld [vmem:[#allocation2 + $0x40] sm:$0xf]
        %v1623 = vld [vmem:[#allocation2 + $0x48] sm:$0xf]
        %v1624 = vld [vmem:[#allocation2 + $0x4c] sm:$0xf]
        %v1625 = vld [vmem:[#allocation2 + $0x54] sm:$0xf]
        %v1626 = vld [vmem:[#allocation2 + $0x58] sm:$0xf]
        %v1627 = vld [vmem:[#allocation2 + $0x60] sm:$0xf]
        %v1628 = vld [vmem:[#allocation2 + $0x64] sm:$0xf]
        %v1629 = vld [vmem:[#allocation2 + $0x6c] sm:$0xf]
        %v1630 = vld [vmem:[#allocation2 + $0x70] sm:$0xf]
        %v1631 = vld [vmem:[#allocation2 + $0x78] sm:$0xf]
        %v1632 = vld [vmem:[#allocation2 + $0x7c] sm:$0xf]
        %v1633 = vld [vmem:[#allocation2 + $0x84] sm:$0xf]
        %v1634 = vld [vmem:[#allocation2 + $0x88] sm:$0xf]
        %v1635 = vld [vmem:[#allocation2 + $0x90] sm:$0xf]
        %v1636 = vld [vmem:[#allocation2 + $0x94] sm:$0xf]
        %v1637 = vld [vmem:[#allocation2 + $0x9c] sm:$0xf]
        %v1638 = vld [vmem:[#allocation2 + $0xa0] sm:$0xf]
        %v1639 = vld [vmem:[#allocation2 + $0xa8] sm:$0xf]
        %v1640 = vld [vmem:[#allocation2 + $0xac] sm:$0xf]
        %v1641 = vld [vmem:[#allocation2 + $0xb4] sm:$0xf]
        %v1642 = vld [vmem:[#allocation2 + $0xb8] sm:$0xf]
        %v1643 = vld [vmem:[#allocation8] sm:$0xf]
        %v1644 = vld [vmem:[#allocation8 + $0x4] sm:$0xf]
        %v1645 = vld [vmem:[#allocation8 + $0x8] sm:$0xf]
        %v1646 = vld [vmem:[#allocation8 + $0xc] sm:$0xf]
        %v1647 = vld [vmem:[#allocation8 + $0x10] sm:$0xf]
        %v1648 = vld [vmem:[#allocation8 + $0x14] sm:$0xf]
        %v1649 = vld [vmem:[#allocation8 + $0x18] sm:$0xf]
        %v1650 = vld [vmem:[#allocation8 + $0x1c] sm:$0xf]
        %v1651 = vld [vmem:[#allocation8 + $0x20] sm:$0xf]
        %v1652 = vld [vmem:[#allocation8 + $0x24] sm:$0xf]
        %v1653 = vld [vmem:[#allocation8 + $0x28] sm:$0xf]
        %v1654 = vld [vmem:[#allocation8 + $0x2c] sm:$0xf]
        %v1655 = vld [vmem:[#allocation8 + $0x30] sm:$0xf]
        %v1656 = vld [vmem:[#allocation8 + $0x34] sm:$0xf]
        %v1657 = vld [vmem:[#allocation8 + $0x38] sm:$0xf]
        %v1658 = vld [vmem:[#allocation8 + $0x3c] sm:$0xf]
        %v1659 = vld [vmem:[#allocation2 + $0x8] sm:$0x1]
        %v1660 = vld [vmem:[#allocation2 + $0x14] sm:$0x1]
        %v1661 = vld [vmem:[#allocation2 + $0x20] sm:$0x1]
        %v1662 = vld [vmem:[#allocation2 + $0x2c] sm:$0x1]
        %v1663 = vld [vmem:[#allocation2 + $0x38] sm:$0x1]
        %v1664 = vld [vmem:[#allocation2 + $0x44] sm:$0x1]
        %v1665 = vld [vmem:[#allocation2 + $0x50] sm:$0x1]
        %v1666 = vld [vmem:[#allocation2 + $0x5c] sm:$0x1]
        %v1667 = vld [vmem:[#allocation2 + $0x68] sm:$0x1]
        %v1668 = vld [vmem:[#allocation2 + $0x74] sm:$0x1]
        %v1669 = vld [vmem:[#allocation2 + $0x80] sm:$0x1]
        %v1670 = vld [vmem:[#allocation2 + $0x8c] sm:$0x1]
        %v1671 = vld [vmem:[#allocation2 + $0x98] sm:$0x1]
        %v1672 = vld [vmem:[#allocation2 + $0xa4] sm:$0x1]
        %v1673 = vld [vmem:[#allocation2 + $0xb0] sm:$0x1]
        %v1674 = vld [vmem:[#allocation2 + $0xbc] sm:$0x1]
        %vm1675 = vsmask.f32 3328
        %vm1676 = vsmask.f32 7440
        %vm1677 = vmor %vm1675, %vm1676
        %v1679 = vshrl.u32 %v1611, 16
        %v1681 = vrot.slane %v1679, 4
        %v1682 = vshll.u32 %v1611, 16
        %v1684 = vrot.slane %v1682, 5
        %v1685 = vor.u32 %v1681, %v1684
        %v1686 = vrot.slane %v1685, 4
        %v1688 = vshll.u32 %v1612, 16
        %v1690 = vrot.slane %v1688, 5
        %v1691 = vsel %vm1677, %v1686, %v1690
        %v1692 = vshrl.u32 %v1612, 16
        %v1694 = vrot.slane %v1692, 4
        %v1695 = vor.u32 %v1694, %v1690
        %v1696 = vrot.slane %v1695, 4
        %v1698 = vshll.u32 %v1659, 16
        %v1700 = vrot.slane %v1698, 5
        %v1701 = vsel %vm1677, %v1696, %v1700
        %v1703 = vshrl.u32 %v1613, 16
        %v1705 = vrot.slane %v1703, 4
        %v1706 = vshll.u32 %v1613, 16
        %v1708 = vrot.slane %v1706, 5
        %v1709 = vor.u32 %v1705, %v1708
        %v1710 = vrot.slane %v1709, 4
        %v1712 = vshll.u32 %v1614, 16
        %v1714 = vrot.slane %v1712, 5
        %v1715 = vsel %vm1677, %v1710, %v1714
        %v1716 = vshrl.u32 %v1614, 16
        %v1718 = vrot.slane %v1716, 4
        %v1719 = vor.u32 %v1718, %v1714
        %v1720 = vrot.slane %v1719, 4
        %v1722 = vshll.u32 %v1660, 16
        %v1724 = vrot.slane %v1722, 5
        %v1725 = vsel %vm1677, %v1720, %v1724
        %v1727 = vshrl.u32 %v1615, 16
        %v1729 = vrot.slane %v1727, 4
        %v1730 = vshll.u32 %v1615, 16
        %v1732 = vrot.slane %v1730, 5
        %v1733 = vor.u32 %v1729, %v1732
        %v1734 = vrot.slane %v1733, 4
        %v1736 = vshll.u32 %v1616, 16
        %v1738 = vrot.slane %v1736, 5
        %v1739 = vsel %vm1677, %v1734, %v1738
        %v1740 = vshrl.u32 %v1616, 16
        %v1742 = vrot.slane %v1740, 4
        %v1743 = vor.u32 %v1742, %v1738
        %v1744 = vrot.slane %v1743, 4
        %v1746 = vshll.u32 %v1661, 16
        %v1748 = vrot.slane %v1746, 5
        %v1749 = vsel %vm1677, %v1744, %v1748
        %v1751 = vshrl.u32 %v1617, 16
        %v1753 = vrot.slane %v1751, 4
        %v1754 = vshll.u32 %v1617, 16
        %v1756 = vrot.slane %v1754, 5
        %v1757 = vor.u32 %v1753, %v1756
        %v1758 = vrot.slane %v1757, 4
        %v1760 = vshll.u32 %v1618, 16
        %v1762 = vrot.slane %v1760, 5
        %v1763 = vsel %vm1677, %v1758, %v1762
        %v1764 = vshrl.u32 %v1618, 16
        %v1766 = vrot.slane %v1764, 4
        %v1767 = vor.u32 %v1766, %v1762
        %v1768 = vrot.slane %v1767, 4
        %v1770 = vshll.u32 %v1662, 16
        %v1772 = vrot.slane %v1770, 5
        %v1773 = vsel %vm1677, %v1768, %v1772
        %v1775 = vshrl.u32 %v1619, 16
        %v1777 = vrot.slane %v1775, 4
        %v1778 = vshll.u32 %v1619, 16
        %v1780 = vrot.slane %v1778, 5
        %v1781 = vor.u32 %v1777, %v1780
        %v1782 = vrot.slane %v1781, 4
        %v1784 = vshll.u32 %v1620, 16
        %v1786 = vrot.slane %v1784, 5
        %v1787 = vsel %vm1677, %v1782, %v1786
        %v1788 = vshrl.u32 %v1620, 16
        %v1790 = vrot.slane %v1788, 4
        %v1791 = vor.u32 %v1790, %v1786
        %v1792 = vrot.slane %v1791, 4
        %v1794 = vshll.u32 %v1663, 16
        %v1796 = vrot.slane %v1794, 5
        %v1797 = vsel %vm1677, %v1792, %v1796
        %v1799 = vshrl.u32 %v1621, 16
        %v1801 = vrot.slane %v1799, 4
        %v1802 = vshll.u32 %v1621, 16
        %v1804 = vrot.slane %v1802, 5
        %v1805 = vor.u32 %v1801, %v1804
        %v1806 = vrot.slane %v1805, 4
        %v1808 = vshll.u32 %v1622, 16
        %v1810 = vrot.slane %v1808, 5
        %v1811 = vsel %vm1677, %v1806, %v1810
        %v1812 = vshrl.u32 %v1622, 16
        %v1814 = vrot.slane %v1812, 4
        %v1815 = vor.u32 %v1814, %v1810
        %v1816 = vrot.slane %v1815, 4
        %v1818 = vshll.u32 %v1664, 16
        %v1820 = vrot.slane %v1818, 5
        %v1821 = vsel %vm1677, %v1816, %v1820
        %v1823 = vshrl.u32 %v1623, 16
        %v1825 = vrot.slane %v1823, 4
        %v1826 = vshll.u32 %v1623, 16
        %v1828 = vrot.slane %v1826, 5
        %v1829 = vor.u32 %v1825, %v1828
        %v1830 = vrot.slane %v1829, 4
        %v1832 = vshll.u32 %v1624, 16
        %v1834 = vrot.slane %v1832, 5
        %v1835 = vsel %vm1677, %v1830, %v1834
        %v1836 = vshrl.u32 %v1624, 16
        %v1838 = vrot.slane %v1836, 4
        %v1839 = vor.u32 %v1838, %v1834
        %v1840 = vrot.slane %v1839, 4
        %v1842 = vshll.u32 %v1665, 16
        %v1844 = vrot.slane %v1842, 5
        %v1845 = vsel %vm1677, %v1840, %v1844
        %v1847 = vshrl.u32 %v1625, 16
        %v1849 = vrot.slane %v1847, 4
        %v1850 = vshll.u32 %v1625, 16
        %v1852 = vrot.slane %v1850, 5
        %v1853 = vor.u32 %v1849, %v1852
        %v1854 = vrot.slane %v1853, 4
        %v1856 = vshll.u32 %v1626, 16
        %v1858 = vrot.slane %v1856, 5
        %v1859 = vsel %vm1677, %v1854, %v1858
        %v1860 = vshrl.u32 %v1626, 16
        %v1862 = vrot.slane %v1860, 4
        %v1863 = vor.u32 %v1862, %v1858
        %v1864 = vrot.slane %v1863, 4
        %v1866 = vshll.u32 %v1666, 16
        %v1868 = vrot.slane %v1866, 5
        %v1869 = vsel %vm1677, %v1864, %v1868
        %v1871 = vshrl.u32 %v1627, 16
        %v1873 = vrot.slane %v1871, 4
        %v1874 = vshll.u32 %v1627, 16
        %v1876 = vrot.slane %v1874, 5
        %v1877 = vor.u32 %v1873, %v1876
        %v1878 = vrot.slane %v1877, 4
        %v1880 = vshll.u32 %v1628, 16
        %v1882 = vrot.slane %v1880, 5
        %v1883 = vsel %vm1677, %v1878, %v1882
        %v1884 = vshrl.u32 %v1628, 16
        %v1886 = vrot.slane %v1884, 4
        %v1887 = vor.u32 %v1886, %v1882
        %v1888 = vrot.slane %v1887, 4
        %v1890 = vshll.u32 %v1667, 16
        %v1892 = vrot.slane %v1890, 5
        %v1893 = vsel %vm1677, %v1888, %v1892
        %v1895 = vshrl.u32 %v1629, 16
        %v1897 = vrot.slane %v1895, 4
        %v1898 = vshll.u32 %v1629, 16
        %v1900 = vrot.slane %v1898, 5
        %v1901 = vor.u32 %v1897, %v1900
        %v1902 = vrot.slane %v1901, 4
        %v1904 = vshll.u32 %v1630, 16
        %v1906 = vrot.slane %v1904, 5
        %v1907 = vsel %vm1677, %v1902, %v1906
        %v1908 = vshrl.u32 %v1630, 16
        %v1910 = vrot.slane %v1908, 4
        %v1911 = vor.u32 %v1910, %v1906
        %v1912 = vrot.slane %v1911, 4
        %v1914 = vshll.u32 %v1668, 16
        %v1916 = vrot.slane %v1914, 5
        %v1917 = vsel %vm1677, %v1912, %v1916
        %v1919 = vshrl.u32 %v1631, 16
        %v1921 = vrot.slane %v1919, 4
        %v1922 = vshll.u32 %v1631, 16
        %v1924 = vrot.slane %v1922, 5
        %v1925 = vor.u32 %v1921, %v1924
        %v1926 = vrot.slane %v1925, 4
        %v1928 = vshll.u32 %v1632, 16
        %v1930 = vrot.slane %v1928, 5
        %v1931 = vsel %vm1677, %v1926, %v1930
        %v1932 = vshrl.u32 %v1632, 16
        %v1934 = vrot.slane %v1932, 4
        %v1935 = vor.u32 %v1934, %v1930
        %v1936 = vrot.slane %v1935, 4
        %v1938 = vshll.u32 %v1669, 16
        %v1940 = vrot.slane %v1938, 5
        %v1941 = vsel %vm1677, %v1936, %v1940
        %v1943 = vshrl.u32 %v1633, 16
        %v1945 = vrot.slane %v1943, 4
        %v1946 = vshll.u32 %v1633, 16
        %v1948 = vrot.slane %v1946, 5
        %v1949 = vor.u32 %v1945, %v1948
        %v1950 = vrot.slane %v1949, 4
        %v1952 = vshll.u32 %v1634, 16
        %v1954 = vrot.slane %v1952, 5
        %v1955 = vsel %vm1677, %v1950, %v1954
        %v1956 = vshrl.u32 %v1634, 16
        %v1958 = vrot.slane %v1956, 4
        %v1959 = vor.u32 %v1958, %v1954
        %v1960 = vrot.slane %v1959, 4
        %v1962 = vshll.u32 %v1670, 16
        %v1964 = vrot.slane %v1962, 5
        %v1965 = vsel %vm1677, %v1960, %v1964
        %v1967 = vshrl.u32 %v1635, 16
        %v1969 = vrot.slane %v1967, 4
        %v1970 = vshll.u32 %v1635, 16
        %v1972 = vrot.slane %v1970, 5
        %v1973 = vor.u32 %v1969, %v1972
        %v1974 = vrot.slane %v1973, 4
        %v1976 = vshll.u32 %v1636, 16
        %v1978 = vrot.slane %v1976, 5
        %v1979 = vsel %vm1677, %v1974, %v1978
        %v1980 = vshrl.u32 %v1636, 16
        %v1982 = vrot.slane %v1980, 4
        %v1983 = vor.u32 %v1982, %v1978
        %v1984 = vrot.slane %v1983, 4
        %v1986 = vshll.u32 %v1671, 16
        %v1988 = vrot.slane %v1986, 5
        %v1989 = vsel %vm1677, %v1984, %v1988
        %v1991 = vshrl.u32 %v1637, 16
        %v1993 = vrot.slane %v1991, 4
        %v1994 = vshll.u32 %v1637, 16
        %v1996 = vrot.slane %v1994, 5
        %v1997 = vor.u32 %v1993, %v1996
        %v1998 = vrot.slane %v1997, 4
        %v2000 = vshll.u32 %v1638, 16
        %v2002 = vrot.slane %v2000, 5
        %v2003 = vsel %vm1677, %v1998, %v2002
        %v2004 = vshrl.u32 %v1638, 16
        %v2006 = vrot.slane %v2004, 4
        %v2007 = vor.u32 %v2006, %v2002
        %v2008 = vrot.slane %v2007, 4
        %v2010 = vshll.u32 %v1672, 16
        %v2012 = vrot.slane %v2010, 5
        %v2013 = vsel %vm1677, %v2008, %v2012
        %v2015 = vshrl.u32 %v1639, 16
        %v2017 = vrot.slane %v2015, 4
        %v2018 = vshll.u32 %v1639, 16
        %v2020 = vrot.slane %v2018, 5
        %v2021 = vor.u32 %v2017, %v2020
        %v2022 = vrot.slane %v2021, 4
        %v2024 = vshll.u32 %v1640, 16
        %v2026 = vrot.slane %v2024, 5
        %v2027 = vsel %vm1677, %v2022, %v2026
        %v2028 = vshrl.u32 %v1640, 16
        %v2030 = vrot.slane %v2028, 4
        %v2031 = vor.u32 %v2030, %v2026
        %v2032 = vrot.slane %v2031, 4
        %v2034 = vshll.u32 %v1673, 16
        %v2036 = vrot.slane %v2034, 5
        %v2037 = vsel %vm1677, %v2032, %v2036
        %v2039 = vshrl.u32 %v1641, 16
        %v2041 = vrot.slane %v2039, 4
        %v2042 = vshll.u32 %v1641, 16
        %v2044 = vrot.slane %v2042, 5
        %v2045 = vor.u32 %v2041, %v2044
        %v2046 = vrot.slane %v2045, 4
        %v2048 = vshll.u32 %v1642, 16
        %v2050 = vrot.slane %v2048, 5
        %v2051 = vsel %vm1677, %v2046, %v2050
        %v2052 = vshrl.u32 %v1642, 16
        %v2054 = vrot.slane %v2052, 4
        %v2055 = vor.u32 %v2054, %v2050
        %v2056 = vrot.slane %v2055, 4
        %v2058 = vshll.u32 %v1674, 16
        %v2060 = vrot.slane %v2058, 5
        %v2061 = vsel %vm1677, %v2056, %v2060
        %s2062 = scalar_lea.vmem [#allocation8], 64
        %v2063 = vld [vmem:[%s2062] sm:$0xf]
        %v2064 = vld [vmem:[%s2062 + $0x4] sm:$0xf]
        %v2065 = vld [vmem:[%s2062 + $0x8] sm:$0xf]
        %v2066 = vld [vmem:[%s2062 + $0xc] sm:$0xf]
        %v2067 = vld [vmem:[%s2062 + $0x10] sm:$0xf]
        %v2068 = vld [vmem:[%s2062 + $0x14] sm:$0xf]
        %v2069 = vld [vmem:[%s2062 + $0x18] sm:$0xf]
        %v2070 = vld [vmem:[%s2062 + $0x1c] sm:$0xf]
        %v2071 = vld [vmem:[%s2062 + $0x20] sm:$0xf]
        %v2072 = vld [vmem:[%s2062 + $0x24] sm:$0xf]
        %v2073 = vld [vmem:[%s2062 + $0x28] sm:$0xf]
        %v2074 = vld [vmem:[%s2062 + $0x2c] sm:$0xf]
        %v2075 = vld [vmem:[%s2062 + $0x30] sm:$0xf]
        %v2076 = vld [vmem:[%s2062 + $0x34] sm:$0xf]
        %v2077 = vld [vmem:[%s2062 + $0x38] sm:$0xf]
        %v2078 = vld [vmem:[%s2062 + $0x3c] sm:$0xf]
        %v2079 = vunpack.c.l.b16 %v1691
        %v2080 = vunpack.c.l.b16 %v1701
        %v2081 = vunpack.c.l.b16 %v1715
        %v2082 = vunpack.c.l.b16 %v1725
        %v2083 = vunpack.c.l.b16 %v1739
        %v2084 = vunpack.c.l.b16 %v1749
        %v2085 = vunpack.c.l.b16 %v1763
        %v2086 = vunpack.c.l.b16 %v1773
        %v2087 = vunpack.c.l.b16 %v1787
        %v2088 = vunpack.c.l.b16 %v1797
        %v2089 = vunpack.c.l.b16 %v1811
        %v2090 = vunpack.c.l.b16 %v1821
        %v2091 = vunpack.c.l.b16 %v1835
        %v2092 = vunpack.c.l.b16 %v1845
        %v2093 = vunpack.c.l.b16 %v1859
        %v2094 = vunpack.c.l.b16 %v1869
        %v2095 = vunpack.c.l.b16 %v1883
        %v2096 = vunpack.c.l.b16 %v1893
        %v2097 = vunpack.c.l.b16 %v1907
        %v2098 = vunpack.c.l.b16 %v1917
        %v2099 = vunpack.c.l.b16 %v1931
        %v2100 = vunpack.c.l.b16 %v1941
        %v2101 = vunpack.c.l.b16 %v1955
        %v2102 = vunpack.c.l.b16 %v1965
        %v2103 = vunpack.c.l.b16 %v1979
        %v2104 = vunpack.c.l.b16 %v1989
        %v2105 = vunpack.c.l.b16 %v2003
        %v2106 = vunpack.c.l.b16 %v2013
        %v2107 = vunpack.c.l.b16 %v2027
        %v2108 = vunpack.c.l.b16 %v2037
        %v2109 = vunpack.c.l.b16 %v2051
        %v2110 = vunpack.c.l.b16 %v2061
        %v2111 = vpack.c.b16 %v2080, %v2079
        %v2112 = vpack.c.b16 %v2082, %v2081
        %v2113 = vpack.c.b16 %v2084, %v2083
        %v2114 = vpack.c.b16 %v2086, %v2085
        %v2115 = vpack.c.b16 %v2088, %v2087
        %v2116 = vpack.c.b16 %v2090, %v2089
        %v2117 = vpack.c.b16 %v2092, %v2091
        %v2118 = vpack.c.b16 %v2094, %v2093
        %v2119 = vpack.c.b16 %v2096, %v2095
        %v2120 = vpack.c.b16 %v2098, %v2097
        %v2121 = vpack.c.b16 %v2100, %v2099
        %v2122 = vpack.c.b16 %v2102, %v2101
        %v2123 = vpack.c.b16 %v2104, %v2103
        %v2124 = vpack.c.b16 %v2106, %v2105
        %v2125 = vpack.c.b16 %v2108, %v2107
        %v2126 = vpack.c.b16 %v2110, %v2109
        %v2159 = vunpack.c.l.b16 %v2063
        %v2160 = vunpack.c.l.b16 %v2064
        %v2161 = vunpack.c.l.b16 %v2065
        %v2162 = vunpack.c.l.b16 %v2066
        %v2163 = vunpack.c.l.b16 %v2067
        %v2164 = vunpack.c.l.b16 %v2068
        %v2165 = vunpack.c.l.b16 %v2069
        %v2166 = vunpack.c.l.b16 %v2070
        %v2167 = vunpack.c.l.b16 %v2071
        %v2168 = vunpack.c.l.b16 %v2072
        %v2169 = vunpack.c.l.b16 %v2073
        %v2170 = vunpack.c.l.b16 %v2074
        %v2171 = vunpack.c.l.b16 %v2075
        %v2172 = vunpack.c.l.b16 %v2076
        %v2173 = vunpack.c.l.b16 %v2077
        %v2174 = vunpack.c.l.b16 %v2078
        %v2175 = vpack.c.b16 %v2160, %v2159
        %v2176 = vpack.c.b16 %v2162, %v2161
        %v2177 = vpack.c.b16 %v2164, %v2163
        %v2178 = vpack.c.b16 %v2166, %v2165
        %v2179 = vpack.c.b16 %v2168, %v2167
        %v2180 = vpack.c.b16 %v2170, %v2169
        %v2181 = vpack.c.b16 %v2172, %v2171
        %v2182 = vpack.c.b16 %v2174, %v2173
        %2191 = vmatprep.subr.bf16.mxu0 0
        %2192 = vmatpush1.bf16.msra.mxu0 %v2175
        %2193 = vmatprep.subr.bf16.mxu0 0
        %2194 = vmatpush1.bf16.msra.mxu0 %v2176
        %2195 = vmatprep.subr.bf16.mxu0 0
        %2196 = vmatpush1.bf16.msra.mxu0 %v2177
        %2197 = vmatprep.subr.bf16.mxu0 0
        %2198 = vmatpush1.bf16.msra.mxu0 %v2178
        %2199 = vmatprep.subr.bf16.mxu0 0
        %2200 = vmatpush1.bf16.msra.mxu0 %v2179
        %2201 = vmatprep.subr.bf16.mxu0 0
        %2202 = vmatpush1.bf16.msra.mxu0 %v2180
        %2203 = vmatprep.subr.bf16.mxu0 0
        %2204 = vmatpush1.bf16.msra.mxu0 %v2181
        %2205 = vmatprep.subr.bf16.mxu0 0
        %2206 = vmatpush1.bf16.msra.mxu0 %v2182
        %2207 = vmatprep.subr.bf16.mxu0 0
        %2208 = vmatpush1.bf16.msra.mxu0 0
        %2209 = vmatprep.subr.bf16.mxu0 0
        %2210 = vmatpush1.bf16.msra.mxu0 0
        %2211 = vmatprep.subr.bf16.mxu0 0
        %2212 = vmatpush1.bf16.msra.mxu0 0
        %2213 = vmatprep.subr.bf16.mxu0 0
        %2214 = vmatpush1.bf16.msra.mxu0 0
        %2215 = vmatprep.subr.bf16.mxu0 0
        %2216 = vmatpush1.bf16.msra.mxu0 0
        %2217 = vmatprep.subr.bf16.mxu0 0
        %2218 = vmatpush1.bf16.msra.mxu0 0
        %2219 = vmatprep.subr.bf16.mxu0 0
        %2220 = vmatpush1.bf16.msra.mxu0 0
        %2221 = vmatprep.subr.bf16.mxu0 0
        %2222 = vmatpush1.bf16.msra.mxu0 0
        %2223 = vmatprep.mubr.bf16.mxu0 0
        %2224 = vmatmul.mubr.bf16.gmra.mrb[0].mxu0 %v2111
        %v2225 = vpop.f32.mrb[0].mxu0
        %v2226 = vadd.f32 0.0, %v2225
        %v2227 = vpop.f32.mrb[0].mxu0
        %v2228 = vpop.f32.mrb[0].mxu0
        %v2229 = vadd.f32 0.0, %v2228
        %v2230 = vpop.f32.mrb[0].mxu0
        %2231 = vmatprep.mubr.bf16.mxu0 0
        %2232 = vmatmul.mubr.bf16.gmra.mrb[0].mxu0 %v2112
        %v2233 = vpop.f32.mrb[0].mxu0
        %v2234 = vadd.f32 0.0, %v2233
        %v2235 = vpop.f32.mrb[0].mxu0
        %v2236 = vpop.f32.mrb[0].mxu0
        %v2237 = vadd.f32 0.0, %v2236
        %v2238 = vpop.f32.mrb[0].mxu0
        %2239 = vmatprep.mubr.bf16.mxu0 0
        %2240 = vmatmul.mubr.bf16.gmra.mrb[0].mxu0 %v2113
        %v2241 = vpop.f32.mrb[0].mxu0
        %v2242 = vadd.f32 0.0, %v2241
        %v2243 = vpop.f32.mrb[0].mxu0
        %v2244 = vpop.f32.mrb[0].mxu0
        %v2245 = vadd.f32 0.0, %v2244
        %v2246 = vpop.f32.mrb[0].mxu0
        %2247 = vmatprep.mubr.bf16.mxu0 0
        %2248 = vmatmul.mubr.bf16.gmra.mrb[0].mxu0 %v2114
        %v2249 = vpop.f32.mrb[0].mxu0
        %v2250 = vadd.f32 0.0, %v2249
        %v2251 = vpop.f32.mrb[0].mxu0
        %v2252 = vpop.f32.mrb[0].mxu0
        %v2253 = vadd.f32 0.0, %v2252
        %v2254 = vpop.f32.mrb[0].mxu0
        %2255 = vmatprep.mubr.bf16.mxu0 0
        %2256 = vmatmul.mubr.bf16.gmra.mrb[0].mxu0 %v2115
        %v2257 = vpop.f32.mrb[0].mxu0
        %v2258 = vadd.f32 0.0, %v2257
        %v2259 = vpop.f32.mrb[0].mxu0
        %v2260 = vpop.f32.mrb[0].mxu0
        %v2261 = vadd.f32 0.0, %v2260
        %v2262 = vpop.f32.mrb[0].mxu0
        %2263 = vmatprep.mubr.bf16.mxu0 0
        %2264 = vmatmul.mubr.bf16.gmra.mrb[0].mxu0 %v2116
        %v2265 = vpop.f32.mrb[0].mxu0
        %v2266 = vadd.f32 0.0, %v2265
        %v2267 = vpop.f32.mrb[0].mxu0
        %v2268 = vpop.f32.mrb[0].mxu0
        %v2269 = vadd.f32 0.0, %v2268
        %v2270 = vpop.f32.mrb[0].mxu0
        %2271 = vmatprep.mubr.bf16.mxu0 0
        %2272 = vmatmul.mubr.bf16.gmra.mrb[0].mxu0 %v2117
        %v2273 = vpop.f32.mrb[0].mxu0
        %v2274 = vadd.f32 0.0, %v2273
        %v2275 = vpop.f32.mrb[0].mxu0
        %v2276 = vpop.f32.mrb[0].mxu0
        %v2277 = vadd.f32 0.0, %v2276
        %v2278 = vpop.f32.mrb[0].mxu0
        %2279 = vmatprep.mubr.bf16.mxu0 0
        %2280 = vmatmul.mubr.bf16.gmra.mrb[0].mxu0 %v2118
        %v2281 = vpop.f32.mrb[0].mxu0
        %v2282 = vadd.f32 0.0, %v2281
        %v2283 = vpop.f32.mrb[0].mxu0
        %v2284 = vpop.f32.mrb[0].mxu0
        %v2285 = vadd.f32 0.0, %v2284
        %v2286 = vpop.f32.mrb[0].mxu0
        %2287 = vmatprep.mubr.bf16.mxu0 0
        %2288 = vmatmul.mubr.bf16.gmra.mrb[0].mxu0 %v2119
        %v2289 = vpop.f32.mrb[0].mxu0
        %v2290 = vadd.f32 0.0, %v2289
        %v2291 = vpop.f32.mrb[0].mxu0
        %v2292 = vpop.f32.mrb[0].mxu0
        %v2293 = vadd.f32 0.0, %v2292
        %v2294 = vpop.f32.mrb[0].mxu0
        %2295 = vmatprep.mubr.bf16.mxu0 0
        %2296 = vmatmul.mubr.bf16.gmra.mrb[0].mxu0 %v2120
        %v2297 = vpop.f32.mrb[0].mxu0
        %v2298 = vadd.f32 0.0, %v2297
        %v2299 = vpop.f32.mrb[0].mxu0
        %v2300 = vpop.f32.mrb[0].mxu0
        %v2301 = vadd.f32 0.0, %v2300
        %v2302 = vpop.f32.mrb[0].mxu0
        %2303 = vmatprep.mubr.bf16.mxu0 0
        %2304 = vmatmul.mubr.bf16.gmra.mrb[0].mxu0 %v2121
        %v2305 = vpop.f32.mrb[0].mxu0
        %v2306 = vadd.f32 0.0, %v2305
        %v2307 = vpop.f32.mrb[0].mxu0
        %v2308 = vpop.f32.mrb[0].mxu0
        %v2309 = vadd.f32 0.0, %v2308
        %v2310 = vpop.f32.mrb[0].mxu0
        %2311 = vmatprep.mubr.bf16.mxu0 0
        %2312 = vmatmul.mubr.bf16.gmra.mrb[0].mxu0 %v2122
        %v2313 = vpop.f32.mrb[0].mxu0
        %v2314 = vadd.f32 0.0, %v2313
        %v2315 = vpop.f32.mrb[0].mxu0
        %v2316 = vpop.f32.mrb[0].mxu0
        %v2317 = vadd.f32 0.0, %v2316
        %v2318 = vpop.f32.mrb[0].mxu0
        %2319 = vmatprep.mubr.bf16.mxu0 0
        %2320 = vmatmul.mubr.bf16.gmra.mrb[0].mxu0 %v2123
        %v2321 = vpop.f32.mrb[0].mxu0
        %v2322 = vadd.f32 0.0, %v2321
        %v2323 = vpop.f32.mrb[0].mxu0
        %v2324 = vpop.f32.mrb[0].mxu0
        %v2325 = vadd.f32 0.0, %v2324
        %v2326 = vpop.f32.mrb[0].mxu0
        %2327 = vmatprep.mubr.bf16.mxu0 0
        %2328 = vmatmul.mubr.bf16.gmra.mrb[0].mxu0 %v2124
        %v2329 = vpop.f32.mrb[0].mxu0
        %v2330 = vadd.f32 0.0, %v2329
        %v2331 = vpop.f32.mrb[0].mxu0
        %v2332 = vpop.f32.mrb[0].mxu0
        %v2333 = vadd.f32 0.0, %v2332
        %v2334 = vpop.f32.mrb[0].mxu0
        %2335 = vmatprep.mubr.bf16.mxu0 0
        %2336 = vmatmul.mubr.bf16.gmra.mrb[0].mxu0 %v2125
        %v2337 = vpop.f32.mrb[0].mxu0
        %v2338 = vadd.f32 0.0, %v2337
        %v2339 = vpop.f32.mrb[0].mxu0
        %v2340 = vpop.f32.mrb[0].mxu0
        %v2341 = vadd.f32 0.0, %v2340
        %v2342 = vpop.f32.mrb[0].mxu0
        %2343 = vmatprep.mubr.bf16.mxu0 0
        %2344 = vmatmul.mubr.bf16.gmra.mrb[0].mxu0 %v2126
        %v2345 = vpop.f32.mrb[0].mxu0
        %v2346 = vadd.f32 0.0, %v2345
        %v2347 = vpop.f32.mrb[0].mxu0
        %v2348 = vpop.f32.mrb[0].mxu0
        %v2349 = vadd.f32 0.0, %v2348
        %v2350 = vpop.f32.mrb[0].mxu0
        %2351 = vdwg.mxu0
        %v2384 = vunpack.c.l.b16 %v1611
        %v2385 = vunpack.c.l.b16 %v1612
        %v2386 = vunpack.c.l.b16 %v1613
        %v2387 = vunpack.c.l.b16 %v1614
        %v2388 = vunpack.c.l.b16 %v1615
        %v2389 = vunpack.c.l.b16 %v1616
        %v2390 = vunpack.c.l.b16 %v1617
        %v2391 = vunpack.c.l.b16 %v1618
        %v2392 = vunpack.c.l.b16 %v1619
        %v2393 = vunpack.c.l.b16 %v1620
        %v2394 = vunpack.c.l.b16 %v1621
        %v2395 = vunpack.c.l.b16 %v1622
        %v2396 = vunpack.c.l.b16 %v1623
        %v2397 = vunpack.c.l.b16 %v1624
        %v2398 = vunpack.c.l.b16 %v1625
        %v2399 = vunpack.c.l.b16 %v1626
        %v2400 = vunpack.c.l.b16 %v1627
        %v2401 = vunpack.c.l.b16 %v1628
        %v2402 = vunpack.c.l.b16 %v1629
        %v2403 = vunpack.c.l.b16 %v1630
        %v2404 = vunpack.c.l.b16 %v1631
        %v2405 = vunpack.c.l.b16 %v1632
        %v2406 = vunpack.c.l.b16 %v1633
        %v2407 = vunpack.c.l.b16 %v1634
        %v2408 = vunpack.c.l.b16 %v1635
        %v2409 = vunpack.c.l.b16 %v1636
        %v2410 = vunpack.c.l.b16 %v1637
        %v2411 = vunpack.c.l.b16 %v1638
        %v2412 = vunpack.c.l.b16 %v1639
        %v2413 = vunpack.c.l.b16 %v1640
        %v2414 = vunpack.c.l.b16 %v1641
        %v2415 = vunpack.c.l.b16 %v1642
        %v2416 = vpack.c.b16 %v2385, %v2384
        %v2417 = vpack.c.b16 %v2387, %v2386
        %v2418 = vpack.c.b16 %v2389, %v2388
        %v2419 = vpack.c.b16 %v2391, %v2390
        %v2420 = vpack.c.b16 %v2393, %v2392
        %v2421 = vpack.c.b16 %v2395, %v2394
        %v2422 = vpack.c.b16 %v2397, %v2396
        %v2423 = vpack.c.b16 %v2399, %v2398
        %v2424 = vpack.c.b16 %v2401, %v2400
        %v2425 = vpack.c.b16 %v2403, %v2402
        %v2426 = vpack.c.b16 %v2405, %v2404
        %v2427 = vpack.c.b16 %v2407, %v2406
        %v2428 = vpack.c.b16 %v2409, %v2408
        %v2429 = vpack.c.b16 %v2411, %v2410
        %v2430 = vpack.c.b16 %v2413, %v2412
        %v2431 = vpack.c.b16 %v2415, %v2414
        %v2464 = vunpack.c.l.b16 %v1643
        %v2465 = vunpack.c.l.b16 %v1644
        %v2466 = vunpack.c.l.b16 %v1645
        %v2467 = vunpack.c.l.b16 %v1646
        %v2468 = vunpack.c.l.b16 %v1647
        %v2469 = vunpack.c.l.b16 %v1648
        %v2470 = vunpack.c.l.b16 %v1649
        %v2471 = vunpack.c.l.b16 %v1650
        %v2472 = vunpack.c.l.b16 %v1651
        %v2473 = vunpack.c.l.b16 %v1652
        %v2474 = vunpack.c.l.b16 %v1653
        %v2475 = vunpack.c.l.b16 %v1654
        %v2476 = vunpack.c.l.b16 %v1655
        %v2477 = vunpack.c.l.b16 %v1656
        %v2478 = vunpack.c.l.b16 %v1657
        %v2479 = vunpack.c.l.b16 %v1658
        %v2480 = vpack.c.b16 %v2465, %v2464
        %v2481 = vpack.c.b16 %v2467, %v2466
        %v2482 = vpack.c.b16 %v2469, %v2468
        %v2483 = vpack.c.b16 %v2471, %v2470
        %v2484 = vpack.c.b16 %v2473, %v2472
        %v2485 = vpack.c.b16 %v2475, %v2474
        %v2486 = vpack.c.b16 %v2477, %v2476
        %v2487 = vpack.c.b16 %v2479, %v2478
        %2496 = vmatprep.subr.bf16.mxu0 0
        %2497 = vmatpush1.bf16.msra.mxu0 %v2480
        %2498 = vmatprep.subr.bf16.mxu0 0
        %2499 = vmatpush1.bf16.msra.mxu0 %v2481
        %2500 = vmatprep.subr.bf16.mxu0 0
        %2501 = vmatpush1.bf16.msra.mxu0 %v2482
        %2502 = vmatprep.subr.bf16.mxu0 0
        %2503 = vmatpush1.bf16.msra.mxu0 %v2483
        %2504 = vmatprep.subr.bf16.mxu0 0
        %2505 = vmatpush1.bf16.msra.mxu0 %v2484
        %2506 = vmatprep.subr.bf16.mxu0 0
        %2507 = vmatpush1.bf16.msra.mxu0 %v2485
        %2508 = vmatprep.subr.bf16.mxu0 0
        %2509 = vmatpush1.bf16.msra.mxu0 %v2486
        %2510 = vmatprep.subr.bf16.mxu0 0
        %2511 = vmatpush1.bf16.msra.mxu0 %v2487
        %2512 = vmatprep.subr.bf16.mxu0 0
        %2513 = vmatpush1.bf16.msra.mxu0 0
        %2514 = vmatprep.subr.bf16.mxu0 0
        %2515 = vmatpush1.bf16.msra.mxu0 0
        %2516 = vmatprep.subr.bf16.mxu0 0
        %2517 = vmatpush1.bf16.msra.mxu0 0
        %2518 = vmatprep.subr.bf16.mxu0 0
        %2519 = vmatpush1.bf16.msra.mxu0 0
        %2520 = vmatprep.subr.bf16.mxu0 0
        %2521 = vmatpush1.bf16.msra.mxu0 0
        %2522 = vmatprep.subr.bf16.mxu0 0
        %2523 = vmatpush1.bf16.msra.mxu0 0
        %2524 = vmatprep.subr.bf16.mxu0 0
        %2525 = vmatpush1.bf16.msra.mxu0 0
        %2526 = vmatprep.subr.bf16.mxu0 0
        %2527 = vmatpush1.bf16.msra.mxu0 0
        %2528 = vmatprep.mubr.bf16.mxu0 0
        %2529 = vmatmul.mubr.bf16.gmra.mrb[0].mxu0 %v2416
        %v2530 = vpop.f32.mrb[0].mxu0
        %v2531 = vadd.f32 %v2226, %v2530
        %v2532 = vpop.f32.mrb[0].mxu0
        %v2533 = vpop.f32.mrb[0].mxu0
        %v2534 = vadd.f32 %v2229, %v2533
        %v2535 = vpop.f32.mrb[0].mxu0
        %2536 = vmatprep.mubr.bf16.mxu0 0
        %2537 = vmatmul.mubr.bf16.gmra.mrb[0].mxu0 %v2417
        %v2538 = vpop.f32.mrb[0].mxu0
        %v2539 = vadd.f32 %v2234, %v2538
        %v2540 = vpop.f32.mrb[0].mxu0
        %v2541 = vpop.f32.mrb[0].mxu0
        %v2542 = vadd.f32 %v2237, %v2541
        %v2543 = vpop.f32.mrb[0].mxu0
        %2544 = vmatprep.mubr.bf16.mxu0 0
        %2545 = vmatmul.mubr.bf16.gmra.mrb[0].mxu0 %v2418
        %v2546 = vpop.f32.mrb[0].mxu0
        %v2547 = vadd.f32 %v2242, %v2546
        %v2548 = vpop.f32.mrb[0].mxu0
        %v2549 = vpop.f32.mrb[0].mxu0
        %v2550 = vadd.f32 %v2245, %v2549
        %v2551 = vpop.f32.mrb[0].mxu0
        %2552 = vmatprep.mubr.bf16.mxu0 0
        %2553 = vmatmul.mubr.bf16.gmra.mrb[0].mxu0 %v2419
        %v2554 = vpop.f32.mrb[0].mxu0
        %v2555 = vadd.f32 %v2250, %v2554
        %v2556 = vpop.f32.mrb[0].mxu0
        %v2557 = vpop.f32.mrb[0].mxu0
        %v2558 = vadd.f32 %v2253, %v2557
        %v2559 = vpop.f32.mrb[0].mxu0
        %2560 = vmatprep.mubr.bf16.mxu0 0
        %2561 = vmatmul.mubr.bf16.gmra.mrb[0].mxu0 %v2420
        %v2562 = vpop.f32.mrb[0].mxu0
        %v2563 = vadd.f32 %v2258, %v2562
        %v2564 = vpop.f32.mrb[0].mxu0
        %v2565 = vpop.f32.mrb[0].mxu0
        %v2566 = vadd.f32 %v2261, %v2565
        %v2567 = vpop.f32.mrb[0].mxu0
        %2568 = vmatprep.mubr.bf16.mxu0 0
        %2569 = vmatmul.mubr.bf16.gmra.mrb[0].mxu0 %v2421
        %v2570 = vpop.f32.mrb[0].mxu0
        %v2571 = vadd.f32 %v2266, %v2570
        %v2572 = vpop.f32.mrb[0].mxu0
        %v2573 = vpop.f32.mrb[0].mxu0
        %v2574 = vadd.f32 %v2269, %v2573
        %v2575 = vpop.f32.mrb[0].mxu0
        %2576 = vmatprep.mubr.bf16.mxu0 0
        %2577 = vmatmul.mubr.bf16.gmra.mrb[0].mxu0 %v2422
        %v2578 = vpop.f32.mrb[0].mxu0
        %v2579 = vadd.f32 %v2274, %v2578
        %v2580 = vpop.f32.mrb[0].mxu0
        %v2581 = vpop.f32.mrb[0].mxu0
        %v2582 = vadd.f32 %v2277, %v2581
        %v2583 = vpop.f32.mrb[0].mxu0
        %2584 = vmatprep.mubr.bf16.mxu0 0
        %2585 = vmatmul.mubr.bf16.gmra.mrb[0].mxu0 %v2423
        %v2586 = vpop.f32.mrb[0].mxu0
        %v2587 = vadd.f32 %v2282, %v2586
        %v2588 = vpop.f32.mrb[0].mxu0
        %v2589 = vpop.f32.mrb[0].mxu0
        %v2590 = vadd.f32 %v2285, %v2589
        %v2591 = vpop.f32.mrb[0].mxu0
        %2592 = vmatprep.mubr.bf16.mxu0 0
        %2593 = vmatmul.mubr.bf16.gmra.mrb[0].mxu0 %v2424
        %v2594 = vpop.f32.mrb[0].mxu0
        %v2595 = vadd.f32 %v2290, %v2594
        %v2596 = vpop.f32.mrb[0].mxu0
        %v2597 = vpop.f32.mrb[0].mxu0
        %v2598 = vadd.f32 %v2293, %v2597
        %v2599 = vpop.f32.mrb[0].mxu0
        %2600 = vmatprep.mubr.bf16.mxu0 0
        %2601 = vmatmul.mubr.bf16.gmra.mrb[0].mxu0 %v2425
        %v2602 = vpop.f32.mrb[0].mxu0
        %v2603 = vadd.f32 %v2298, %v2602
        %v2604 = vpop.f32.mrb[0].mxu0
        %v2605 = vpop.f32.mrb[0].mxu0
        %v2606 = vadd.f32 %v2301, %v2605
        %v2607 = vpop.f32.mrb[0].mxu0
        %2608 = vmatprep.mubr.bf16.mxu0 0
        %2609 = vmatmul.mubr.bf16.gmra.mrb[0].mxu0 %v2426
        %v2610 = vpop.f32.mrb[0].mxu0
        %v2611 = vadd.f32 %v2306, %v2610
        %v2612 = vpop.f32.mrb[0].mxu0
        %v2613 = vpop.f32.mrb[0].mxu0
        %v2614 = vadd.f32 %v2309, %v2613
        %v2615 = vpop.f32.mrb[0].mxu0
        %2616 = vmatprep.mubr.bf16.mxu0 0
        %2617 = vmatmul.mubr.bf16.gmra.mrb[0].mxu0 %v2427
        %v2618 = vpop.f32.mrb[0].mxu0
        %v2619 = vadd.f32 %v2314, %v2618
        %v2620 = vpop.f32.mrb[0].mxu0
        %v2621 = vpop.f32.mrb[0].mxu0
        %v2622 = vadd.f32 %v2317, %v2621
        %v2623 = vpop.f32.mrb[0].mxu0
        %2624 = vmatprep.mubr.bf16.mxu0 0
        %2625 = vmatmul.mubr.bf16.gmra.mrb[0].mxu0 %v2428
        %v2626 = vpop.f32.mrb[0].mxu0
        %v2627 = vadd.f32 %v2322, %v2626
        %v2628 = vpop.f32.mrb[0].mxu0
        %v2629 = vpop.f32.mrb[0].mxu0
        %v2630 = vadd.f32 %v2325, %v2629
        %v2631 = vpop.f32.mrb[0].mxu0
        %2632 = vmatprep.mubr.bf16.mxu0 0
        %2633 = vmatmul.mubr.bf16.gmra.mrb[0].mxu0 %v2429
        %v2634 = vpop.f32.mrb[0].mxu0
        %v2635 = vadd.f32 %v2330, %v2634
        %v2636 = vpop.f32.mrb[0].mxu0
        %v2637 = vpop.f32.mrb[0].mxu0
        %v2638 = vadd.f32 %v2333, %v2637
        %v2639 = vpop.f32.mrb[0].mxu0
        %2640 = vmatprep.mubr.bf16.mxu0 0
        %2641 = vmatmul.mubr.bf16.gmra.mrb[0].mxu0 %v2430
        %v2642 = vpop.f32.mrb[0].mxu0
        %v2643 = vadd.f32 %v2338, %v2642
        %v2644 = vpop.f32.mrb[0].mxu0
        %v2645 = vpop.f32.mrb[0].mxu0
        %v2646 = vadd.f32 %v2341, %v2645
        %v2647 = vpop.f32.mrb[0].mxu0
        %2648 = vmatprep.mubr.bf16.mxu0 0
        %2649 = vmatmul.mubr.bf16.gmra.mrb[0].mxu0 %v2431
        %v2650 = vpop.f32.mrb[0].mxu0
        %v2651 = vadd.f32 %v2346, %v2650
        %v2652 = vpop.f32.mrb[0].mxu0
        %v2653 = vpop.f32.mrb[0].mxu0
        %v2654 = vadd.f32 %v2349, %v2653
        %v2655 = vpop.f32.mrb[0].mxu0
        %2656 = vdwg.mxu0
        %v2657 = vld [vmem:[#allocation2] sm:$0xe]
        %v2658 = vld [vmem:[#allocation2 + $0xc] sm:$0xe]
        %v2659 = vld [vmem:[#allocation2 + $0x18] sm:$0xe]
        %v2660 = vld [vmem:[#allocation2 + $0x24] sm:$0xe]
        %v2661 = vld [vmem:[#allocation2 + $0x30] sm:$0xe]
        %v2662 = vld [vmem:[#allocation2 + $0x3c] sm:$0xe]
        %v2663 = vld [vmem:[#allocation2 + $0x48] sm:$0xe]
        %v2664 = vld [vmem:[#allocation2 + $0x54] sm:$0xe]
        %v2665 = vld [vmem:[#allocation2 + $0x60] sm:$0xe]
        %v2666 = vld [vmem:[#allocation2 + $0x6c] sm:$0xe]
        %v2667 = vld [vmem:[#allocation2 + $0x78] sm:$0xe]
        %v2668 = vld [vmem:[#allocation2 + $0x84] sm:$0xe]
        %v2669 = vld [vmem:[#allocation2 + $0x90] sm:$0xe]
        %v2670 = vld [vmem:[#allocation2 + $0x9c] sm:$0xe]
        %v2671 = vld [vmem:[#allocation2 + $0xa8] sm:$0xe]
        %v2672 = vld [vmem:[#allocation2 + $0xb4] sm:$0xe]
        %vm2705 = vcmask 1042432
        %vm2706 = vcmask 1046532
        %vm2707 = vmor %vm2705, %vm2706
        %v2708 = vrot.slane %v2657, 5
        %v2709 = vrot.slane %v2708, 4
        %v2710 = vrot.slane %v1612, 5
        %v2711 = vsel %vm2707, %v2709, %v2710
        %v2712 = vrot.slane %v2710, 4
        %v2713 = vrot.slane %v1659, 5
        %v2714 = vsel %vm2707, %v2712, %v2713
        %v2715 = vrot.slane %v2658, 5
        %v2716 = vrot.slane %v2715, 4
        %v2717 = vrot.slane %v1614, 5
        %v2718 = vsel %vm2707, %v2716, %v2717
        %v2719 = vrot.slane %v2717, 4
        %v2720 = vrot.slane %v1660, 5
        %v2721 = vsel %vm2707, %v2719, %v2720
        %v2722 = vrot.slane %v2659, 5
        %v2723 = vrot.slane %v2722, 4
        %v2724 = vrot.slane %v1616, 5
        %v2725 = vsel %vm2707, %v2723, %v2724
        %v2726 = vrot.slane %v2724, 4
        %v2727 = vrot.slane %v1661, 5
        %v2728 = vsel %vm2707, %v2726, %v2727
        %v2729 = vrot.slane %v2660, 5
        %v2730 = vrot.slane %v2729, 4
        %v2731 = vrot.slane %v1618, 5
        %v2732 = vsel %vm2707, %v2730, %v2731
        %v2733 = vrot.slane %v2731, 4
        %v2734 = vrot.slane %v1662, 5
        %v2735 = vsel %vm2707, %v2733, %v2734
        %v2736 = vrot.slane %v2661, 5
        %v2737 = vrot.slane %v2736, 4
        %v2738 = vrot.slane %v1620, 5
        %v2739 = vsel %vm2707, %v2737, %v2738
        %v2740 = vrot.slane %v2738, 4
        %v2741 = vrot.slane %v1663, 5
        %v2742 = vsel %vm2707, %v2740, %v2741
        %v2743 = vrot.slane %v2662, 5
        %v2744 = vrot.slane %v2743, 4
        %v2745 = vrot.slane %v1622, 5
        %v2746 = vsel %vm2707, %v2744, %v2745
        %v2747 = vrot.slane %v2745, 4
        %v2748 = vrot.slane %v1664, 5
        %v2749 = vsel %vm2707, %v2747, %v2748
        %v2750 = vrot.slane %v2663, 5
        %v2751 = vrot.slane %v2750, 4
        %v2752 = vrot.slane %v1624, 5
        %v2753 = vsel %vm2707, %v2751, %v2752
        %v2754 = vrot.slane %v2752, 4
        %v2755 = vrot.slane %v1665, 5
        %v2756 = vsel %vm2707, %v2754, %v2755
        %v2757 = vrot.slane %v2664, 5
        %v2758 = vrot.slane %v2757, 4
        %v2759 = vrot.slane %v1626, 5
        %v2760 = vsel %vm2707, %v2758, %v2759
        %v2761 = vrot.slane %v2759, 4
        %v2762 = vrot.slane %v1666, 5
        %v2763 = vsel %vm2707, %v2761, %v2762
        %v2764 = vrot.slane %v2665, 5
        %v2765 = vrot.slane %v2764, 4
        %v2766 = vrot.slane %v1628, 5
        %v2767 = vsel %vm2707, %v2765, %v2766
        %v2768 = vrot.slane %v2766, 4
        %v2769 = vrot.slane %v1667, 5
        %v2770 = vsel %vm2707, %v2768, %v2769
        %v2771 = vrot.slane %v2666, 5
        %v2772 = vrot.slane %v2771, 4
        %v2773 = vrot.slane %v1630, 5
        %v2774 = vsel %vm2707, %v2772, %v2773
        %v2775 = vrot.slane %v2773, 4
        %v2776 = vrot.slane %v1668, 5
        %v2777 = vsel %vm2707, %v2775, %v2776
        %v2778 = vrot.slane %v2667, 5
        %v2779 = vrot.slane %v2778, 4
        %v2780 = vrot.slane %v1632, 5
        %v2781 = vsel %vm2707, %v2779, %v2780
        %v2782 = vrot.slane %v2780, 4
        %v2783 = vrot.slane %v1669, 5
        %v2784 = vsel %vm2707, %v2782, %v2783
        %v2785 = vrot.slane %v2668, 5
        %v2786 = vrot.slane %v2785, 4
        %v2787 = vrot.slane %v1634, 5
        %v2788 = vsel %vm2707, %v2786, %v2787
        %v2789 = vrot.slane %v2787, 4
        %v2790 = vrot.slane %v1670, 5
        %v2791 = vsel %vm2707, %v2789, %v2790
        %v2792 = vrot.slane %v2669, 5
        %v2793 = vrot.slane %v2792, 4
        %v2794 = vrot.slane %v1636, 5
        %v2795 = vsel %vm2707, %v2793, %v2794
        %v2796 = vrot.slane %v2794, 4
        %v2797 = vrot.slane %v1671, 5
        %v2798 = vsel %vm2707, %v2796, %v2797
        %v2799 = vrot.slane %v2670, 5
        %v2800 = vrot.slane %v2799, 4
        %v2801 = vrot.slane %v1638, 5
        %v2802 = vsel %vm2707, %v2800, %v2801
        %v2803 = vrot.slane %v2801, 4
        %v2804 = vrot.slane %v1672, 5
        %v2805 = vsel %vm2707, %v2803, %v2804
        %v2806 = vrot.slane %v2671, 5
        %v2807 = vrot.slane %v2806, 4
        %v2808 = vrot.slane %v1640, 5
        %v2809 = vsel %vm2707, %v2807, %v2808
        %v2810 = vrot.slane %v2808, 4
        %v2811 = vrot.slane %v1673, 5
        %v2812 = vsel %vm2707, %v2810, %v2811
        %v2813 = vrot.slane %v2672, 5
        %v2814 = vrot.slane %v2813, 4
        %v2815 = vrot.slane %v1642, 5
        %v2816 = vsel %vm2707, %v2814, %v2815
        %v2817 = vrot.slane %v2815, 4
        %v2818 = vrot.slane %v1674, 5
        %v2819 = vsel %vm2707, %v2817, %v2818
        %s2820 = scalar_lea.vmem [#allocation8], 128
        %v2821 = vld [vmem:[%s2820] sm:$0xf]
        %v2822 = vld [vmem:[%s2820 + $0x4] sm:$0xf]
        %v2823 = vld [vmem:[%s2820 + $0x8] sm:$0xf]
        %v2824 = vld [vmem:[%s2820 + $0xc] sm:$0xf]
        %v2825 = vld [vmem:[%s2820 + $0x10] sm:$0xf]
        %v2826 = vld [vmem:[%s2820 + $0x14] sm:$0xf]
        %v2827 = vld [vmem:[%s2820 + $0x18] sm:$0xf]
        %v2828 = vld [vmem:[%s2820 + $0x1c] sm:$0xf]
        %v2829 = vld [vmem:[%s2820 + $0x20] sm:$0xf]
        %v2830 = vld [vmem:[%s2820 + $0x24] sm:$0xf]
        %v2831 = vld [vmem:[%s2820 + $0x28] sm:$0xf]
        %v2832 = vld [vmem:[%s2820 + $0x2c] sm:$0xf]
        %v2833 = vld [vmem:[%s2820 + $0x30] sm:$0xf]
        %v2834 = vld [vmem:[%s2820 + $0x34] sm:$0xf]
        %v2835 = vld [vmem:[%s2820 + $0x38] sm:$0xf]
        %v2836 = vld [vmem:[%s2820 + $0x3c] sm:$0xf]
        %v2837 = vunpack.c.l.b16 %v2711
        %v2838 = vunpack.c.l.b16 %v2714
        %v2839 = vunpack.c.l.b16 %v2718
        %v2840 = vunpack.c.l.b16 %v2721
        %v2841 = vunpack.c.l.b16 %v2725
        %v2842 = vunpack.c.l.b16 %v2728
        %v2843 = vunpack.c.l.b16 %v2732
        %v2844 = vunpack.c.l.b16 %v2735
        %v2845 = vunpack.c.l.b16 %v2739
        %v2846 = vunpack.c.l.b16 %v2742
        %v2847 = vunpack.c.l.b16 %v2746
        %v2848 = vunpack.c.l.b16 %v2749
        %v2849 = vunpack.c.l.b16 %v2753
        %v2850 = vunpack.c.l.b16 %v2756
        %v2851 = vunpack.c.l.b16 %v2760
        %v2852 = vunpack.c.l.b16 %v2763
        %v2853 = vunpack.c.l.b16 %v2767
        %v2854 = vunpack.c.l.b16 %v2770
        %v2855 = vunpack.c.l.b16 %v2774
        %v2856 = vunpack.c.l.b16 %v2777
        %v2857 = vunpack.c.l.b16 %v2781
        %v2858 = vunpack.c.l.b16 %v2784
        %v2859 = vunpack.c.l.b16 %v2788
        %v2860 = vunpack.c.l.b16 %v2791
        %v2861 = vunpack.c.l.b16 %v2795
        %v2862 = vunpack.c.l.b16 %v2798
        %v2863 = vunpack.c.l.b16 %v2802
        %v2864 = vunpack.c.l.b16 %v2805
        %v2865 = vunpack.c.l.b16 %v2809
        %v2866 = vunpack.c.l.b16 %v2812
        %v2867 = vunpack.c.l.b16 %v2816
        %v2868 = vunpack.c.l.b16 %v2819
        %v2869 = vpack.c.b16 %v2838, %v2837
        %v2870 = vpack.c.b16 %v2840, %v2839
        %v2871 = vpack.c.b16 %v2842, %v2841
        %v2872 = vpack.c.b16 %v2844, %v2843
        %v2873 = vpack.c.b16 %v2846, %v2845
        %v2874 = vpack.c.b16 %v2848, %v2847
        %v2875 = vpack.c.b16 %v2850, %v2849
        %v2876 = vpack.c.b16 %v2852, %v2851
        %v2877 = vpack.c.b16 %v2854, %v2853
        %v2878 = vpack.c.b16 %v2856, %v2855
        %v2879 = vpack.c.b16 %v2858, %v2857
        %v2880 = vpack.c.b16 %v2860, %v2859
        %v2881 = vpack.c.b16 %v2862, %v2861
        %v2882 = vpack.c.b16 %v2864, %v2863
        %v2883 = vpack.c.b16 %v2866, %v2865
        %v2884 = vpack.c.b16 %v2868, %v2867
        %v2917 = vunpack.c.l.b16 %v2821
        %v2918 = vunpack.c.l.b16 %v2822
        %v2919 = vunpack.c.l.b16 %v2823
        %v2920 = vunpack.c.l.b16 %v2824
        %v2921 = vunpack.c.l.b16 %v2825
        %v2922 = vunpack.c.l.b16 %v2826
        %v2923 = vunpack.c.l.b16 %v2827
        %v2924 = vunpack.c.l.b16 %v2828
        %v2925 = vunpack.c.l.b16 %v2829
        %v2926 = vunpack.c.l.b16 %v2830
        %v2927 = vunpack.c.l.b16 %v2831
        %v2928 = vunpack.c.l.b16 %v2832
        %v2929 = vunpack.c.l.b16 %v2833
        %v2930 = vunpack.c.l.b16 %v2834
        %v2931 = vunpack.c.l.b16 %v2835
        %v2932 = vunpack.c.l.b16 %v2836
        %v2933 = vpack.c.b16 %v2918, %v2917
        %v2934 = vpack.c.b16 %v2920, %v2919
        %v2935 = vpack.c.b16 %v2922, %v2921
        %v2936 = vpack.c.b16 %v2924, %v2923
        %v2937 = vpack.c.b16 %v2926, %v2925
        %v2938 = vpack.c.b16 %v2928, %v2927
        %v2939 = vpack.c.b16 %v2930, %v2929
        %v2940 = vpack.c.b16 %v2932, %v2931
        %2949 = vmatprep.subr.bf16.mxu0 0
        %2950 = vmatpush1.bf16.msra.mxu0 %v2933
        %2951 = vmatprep.subr.bf16.mxu0 0
        %2952 = vmatpush1.bf16.msra.mxu0 %v2934
        %2953 = vmatprep.subr.bf16.mxu0 0
        %2954 = vmatpush1.bf16.msra.mxu0 %v2935
        %2955 = vmatprep.subr.bf16.mxu0 0
        %2956 = vmatpush1.bf16.msra.mxu0 %v2936
        %2957 = vmatprep.subr.bf16.mxu0 0
        %2958 = vmatpush1.bf16.msra.mxu0 %v2937
        %2959 = vmatprep.subr.bf16.mxu0 0
        %2960 = vmatpush1.bf16.msra.mxu0 %v2938
        %2961 = vmatprep.subr.bf16.mxu0 0
        %2962 = vmatpush1.bf16.msra.mxu0 %v2939
        %2963 = vmatprep.subr.bf16.mxu0 0
        %2964 = vmatpush1.bf16.msra.mxu0 %v2940
        %2965 = vmatprep.subr.bf16.mxu0 0
        %2966 = vmatpush1.bf16.msra.mxu0 0
        %2967 = vmatprep.subr.bf16.mxu0 0
        %2968 = vmatpush1.bf16.msra.mxu0 0
        %2969 = vmatprep.subr.bf16.mxu0 0
        %2970 = vmatpush1.bf16.msra.mxu0 0
        %2971 = vmatprep.subr.bf16.mxu0 0
        %2972 = vmatpush1.bf16.msra.mxu0 0
        %2973 = vmatprep.subr.bf16.mxu0 0
        %2974 = vmatpush1.bf16.msra.mxu0 0
        %2975 = vmatprep.subr.bf16.mxu0 0
        %2976 = vmatpush1.bf16.msra.mxu0 0
        %2977 = vmatprep.subr.bf16.mxu0 0
        %2978 = vmatpush1.bf16.msra.mxu0 0
        %2979 = vmatprep.subr.bf16.mxu0 0
        %2980 = vmatpush1.bf16.msra.mxu0 0
        %2981 = vmatprep.mubr.bf16.mxu0 0
        %2982 = vmatmul.mubr.bf16.gmra.mrb[0].mxu0 %v2869
        %v2983 = vpop.f32.mrb[0].mxu0
        %v2984 = vadd.f32 0.0, %v2983
        %v2985 = vpop.f32.mrb[0].mxu0
        %v2986 = vpop.f32.mrb[0].mxu0
        %v2987 = vadd.f32 0.0, %v2986
        %v2988 = vpop.f32.mrb[0].mxu0
        %2989 = vmatprep.mubr.bf16.mxu0 0
        %2990 = vmatmul.mubr.bf16.gmra.mrb[0].mxu0 %v2870
        %v2991 = vpop.f32.mrb[0].mxu0
        %v2992 = vadd.f32 0.0, %v2991
        %v2993 = vpop.f32.mrb[0].mxu0
        %v2994 = vpop.f32.mrb[0].mxu0
        %v2995 = vadd.f32 0.0, %v2994
        %v2996 = vpop.f32.mrb[0].mxu0
        %2997 = vmatprep.mubr.bf16.mxu0 0
        %2998 = vmatmul.mubr.bf16.gmra.mrb[0].mxu0 %v2871
        %v2999 = vpop.f32.mrb[0].mxu0
        %v3000 = vadd.f32 0.0, %v2999
        %v3001 = vpop.f32.mrb[0].mxu0
        %v3002 = vpop.f32.mrb[0].mxu0
        %v3003 = vadd.f32 0.0, %v3002
        %v3004 = vpop.f32.mrb[0].mxu0
        %3005 = vmatprep.mubr.bf16.mxu0 0
        %3006 = vmatmul.mubr.bf16.gmra.mrb[0].mxu0 %v2872
        %v3007 = vpop.f32.mrb[0].mxu0
        %v3008 = vadd.f32 0.0, %v3007
        %v3009 = vpop.f32.mrb[0].mxu0
        %v3010 = vpop.f32.mrb[0].mxu0
        %v3011 = vadd.f32 0.0, %v3010
        %v3012 = vpop.f32.mrb[0].mxu0
        %3013 = vmatprep.mubr.bf16.mxu0 0
        %3014 = vmatmul.mubr.bf16.gmra.mrb[0].mxu0 %v2873
        %v3015 = vpop.f32.mrb[0].mxu0
        %v3016 = vadd.f32 0.0, %v3015
        %v3017 = vpop.f32.mrb[0].mxu0
        %v3018 = vpop.f32.mrb[0].mxu0
        %v3019 = vadd.f32 0.0, %v3018
        %v3020 = vpop.f32.mrb[0].mxu0
        %3021 = vmatprep.mubr.bf16.mxu0 0
        %3022 = vmatmul.mubr.bf16.gmra.mrb[0].mxu0 %v2874
        %v3023 = vpop.f32.mrb[0].mxu0
        %v3024 = vadd.f32 0.0, %v3023
        %v3025 = vpop.f32.mrb[0].mxu0
        %v3026 = vpop.f32.mrb[0].mxu0
        %v3027 = vadd.f32 0.0, %v3026
        %v3028 = vpop.f32.mrb[0].mxu0
        %3029 = vmatprep.mubr.bf16.mxu0 0
        %3030 = vmatmul.mubr.bf16.gmra.mrb[0].mxu0 %v2875
        %v3031 = vpop.f32.mrb[0].mxu0
        %v3032 = vadd.f32 0.0, %v3031
        %v3033 = vpop.f32.mrb[0].mxu0
        %v3034 = vpop.f32.mrb[0].mxu0
        %v3035 = vadd.f32 0.0, %v3034
        %v3036 = vpop.f32.mrb[0].mxu0
        %3037 = vmatprep.mubr.bf16.mxu0 0
        %3038 = vmatmul.mubr.bf16.gmra.mrb[0].mxu0 %v2876
        %v3039 = vpop.f32.mrb[0].mxu0
        %v3040 = vadd.f32 0.0, %v3039
        %v3041 = vpop.f32.mrb[0].mxu0
        %v3042 = vpop.f32.mrb[0].mxu0
        %v3043 = vadd.f32 0.0, %v3042
        %v3044 = vpop.f32.mrb[0].mxu0
        %3045 = vmatprep.mubr.bf16.mxu0 0
        %3046 = vmatmul.mubr.bf16.gmra.mrb[0].mxu0 %v2877
        %v3047 = vpop.f32.mrb[0].mxu0
        %v3048 = vadd.f32 0.0, %v3047
        %v3049 = vpop.f32.mrb[0].mxu0
        %v3050 = vpop.f32.mrb[0].mxu0
        %v3051 = vadd.f32 0.0, %v3050
        %v3052 = vpop.f32.mrb[0].mxu0
        %3053 = vmatprep.mubr.bf16.mxu0 0
        %3054 = vmatmul.mubr.bf16.gmra.mrb[0].mxu0 %v2878
        %v3055 = vpop.f32.mrb[0].mxu0
        %v3056 = vadd.f32 0.0, %v3055
        %v3057 = vpop.f32.mrb[0].mxu0
        %v3058 = vpop.f32.mrb[0].mxu0
        %v3059 = vadd.f32 0.0, %v3058
        %v3060 = vpop.f32.mrb[0].mxu0
        %3061 = vmatprep.mubr.bf16.mxu0 0
        %3062 = vmatmul.mubr.bf16.gmra.mrb[0].mxu0 %v2879
        %v3063 = vpop.f32.mrb[0].mxu0
        %v3064 = vadd.f32 0.0, %v3063
        %v3065 = vpop.f32.mrb[0].mxu0
        %v3066 = vpop.f32.mrb[0].mxu0
        %v3067 = vadd.f32 0.0, %v3066
        %v3068 = vpop.f32.mrb[0].mxu0
        %3069 = vmatprep.mubr.bf16.mxu0 0
        %3070 = vmatmul.mubr.bf16.gmra.mrb[0].mxu0 %v2880
        %v3071 = vpop.f32.mrb[0].mxu0
        %v3072 = vadd.f32 0.0, %v3071
        %v3073 = vpop.f32.mrb[0].mxu0
        %v3074 = vpop.f32.mrb[0].mxu0
        %v3075 = vadd.f32 0.0, %v3074
        %v3076 = vpop.f32.mrb[0].mxu0
        %3077 = vmatprep.mubr.bf16.mxu0 0
        %3078 = vmatmul.mubr.bf16.gmra.mrb[0].mxu0 %v2881
        %v3079 = vpop.f32.mrb[0].mxu0
        %v3080 = vadd.f32 0.0, %v3079
        %v3081 = vpop.f32.mrb[0].mxu0
        %v3082 = vpop.f32.mrb[0].mxu0
        %v3083 = vadd.f32 0.0, %v3082
        %v3084 = vpop.f32.mrb[0].mxu0
        %3085 = vmatprep.mubr.bf16.mxu0 0
        %3086 = vmatmul.mubr.bf16.gmra.mrb[0].mxu0 %v2882
        %v3087 = vpop.f32.mrb[0].mxu0
        %v3088 = vadd.f32 0.0, %v3087
        %v3089 = vpop.f32.mrb[0].mxu0
        %v3090 = vpop.f32.mrb[0].mxu0
        %v3091 = vadd.f32 0.0, %v3090
        %v3092 = vpop.f32.mrb[0].mxu0
        %3093 = vmatprep.mubr.bf16.mxu0 0
        %3094 = vmatmul.mubr.bf16.gmra.mrb[0].mxu0 %v2883
        %v3095 = vpop.f32.mrb[0].mxu0
        %v3096 = vadd.f32 0.0, %v3095
        %v3097 = vpop.f32.mrb[0].mxu0
        %v3098 = vpop.f32.mrb[0].mxu0
        %v3099 = vadd.f32 0.0, %v3098
        %v3100 = vpop.f32.mrb[0].mxu0
        %3101 = vmatprep.mubr.bf16.mxu0 0
        %3102 = vmatmul.mubr.bf16.gmra.mrb[0].mxu0 %v2884
        %v3103 = vpop.f32.mrb[0].mxu0
        %v3104 = vadd.f32 0.0, %v3103
        %v3105 = vpop.f32.mrb[0].mxu0
        %v3106 = vpop.f32.mrb[0].mxu0
        %v3107 = vadd.f32 0.0, %v3106
        %v3108 = vpop.f32.mrb[0].mxu0
        %3109 = vdwg.mxu0
        %v3110 = vadd.f32 %v2531, %v2984
        %v3111 = vadd.f32 %v2534, %v2987
        %v3112 = vadd.f32 %v2539, %v2992
        %v3113 = vadd.f32 %v2542, %v2995
        %v3114 = vadd.f32 %v2547, %v3000
        %v3115 = vadd.f32 %v2550, %v3003
        %v3116 = vadd.f32 %v2555, %v3008
        %v3117 = vadd.f32 %v2558, %v3011
        %v3118 = vadd.f32 %v2563, %v3016
        %v3119 = vadd.f32 %v2566, %v3019
        %v3120 = vadd.f32 %v2571, %v3024
        %v3121 = vadd.f32 %v2574, %v3027
        %v3122 = vadd.f32 %v2579, %v3032
        %v3123 = vadd.f32 %v2582, %v3035
        %v3124 = vadd.f32 %v2587, %v3040
        %v3125 = vadd.f32 %v2590, %v3043
        %v3126 = vadd.f32 %v2595, %v3048
        %v3127 = vadd.f32 %v2598, %v3051
        %v3128 = vadd.f32 %v2603, %v3056
        %v3129 = vadd.f32 %v2606, %v3059
        %v3130 = vadd.f32 %v2611, %v3064
        %v3131 = vadd.f32 %v2614, %v3067
        %v3132 = vadd.f32 %v2619, %v3072
        %v3133 = vadd.f32 %v2622, %v3075
        %v3134 = vadd.f32 %v2627, %v3080
        %v3135 = vadd.f32 %v2630, %v3083
        %v3136 = vadd.f32 %v2635, %v3088
        %v3137 = vadd.f32 %v2638, %v3091
        %v3138 = vadd.f32 %v2643, %v3096
        %v3139 = vadd.f32 %v2646, %v3099
        %v3140 = vadd.f32 %v2651, %v3104
        %v3141 = vadd.f32 %v2654, %v3107
        %s3142 = scalar_lea.vmem [#allocation2], 12
        %v3143 = vld [vmem:[%s3142] sm:$0xf]
        %v3144 = vld [vmem:[%s3142 + $0x4] sm:$0xf]
        %v3145 = vld [vmem:[%s3142 + $0xc] sm:$0xf]
        %v3146 = vld [vmem:[%s3142 + $0x10] sm:$0xf]
        %v3147 = vld [vmem:[%s3142 + $0x18] sm:$0xf]
        %v3148 = vld [vmem:[%s3142 + $0x1c] sm:$0xf]
        %v3149 = vld [vmem:[%s3142 + $0x24] sm:$0xf]
        %v3150 = vld [vmem:[%s3142 + $0x28] sm:$0xf]
        %v3151 = vld [vmem:[%s3142 + $0x30] sm:$0xf]
        %v3152 = vld [vmem:[%s3142 + $0x34] sm:$0xf]
        %v3153 = vld [vmem:[%s3142 + $0x3c] sm:$0xf]
        %v3154 = vld [vmem:[%s3142 + $0x40] sm:$0xf]
        %v3155 = vld [vmem:[%s3142 + $0x48] sm:$0xf]
        %v3156 = vld [vmem:[%s3142 + $0x4c] sm:$0xf]
        %v3157 = vld [vmem:[%s3142 + $0x54] sm:$0xf]
        %v3158 = vld [vmem:[%s3142 + $0x58] sm:$0xf]
        %v3159 = vld [vmem:[%s3142 + $0x60] sm:$0xf]
        %v3160 = vld [vmem:[%s3142 + $0x64] sm:$0xf]
        %v3161 = vld [vmem:[%s3142 + $0x6c] sm:$0xf]
        %v3162 = vld [vmem:[%s3142 + $0x70] sm:$0xf]
        %v3163 = vld [vmem:[%s3142 + $0x78] sm:$0xf]
        %v3164 = vld [vmem:[%s3142 + $0x7c] sm:$0xf]
        %v3165 = vld [vmem:[%s3142 + $0x84] sm:$0xf]
        %v3166 = vld [vmem:[%s3142 + $0x88] sm:$0xf]
        %v3167 = vld [vmem:[%s3142 + $0x90] sm:$0xf]
        %v3168 = vld [vmem:[%s3142 + $0x94] sm:$0xf]
        %v3169 = vld [vmem:[%s3142 + $0x9c] sm:$0xf]
        %v3170 = vld [vmem:[%s3142 + $0xa0] sm:$0xf]
        %v3171 = vld [vmem:[%s3142 + $0xa8] sm:$0xf]
        %v3172 = vld [vmem:[%s3142 + $0xac] sm:$0xf]
        %v3173 = vld [vmem:[%s3142 + $0xb4] sm:$0xf]
        %v3174 = vld [vmem:[%s3142 + $0xb8] sm:$0xf]
        %s3175 = scalar_lea.vmem [#allocation8], 192
        %v3176 = vld [vmem:[%s3175] sm:$0xf]
        %v3177 = vld [vmem:[%s3175 + $0x4] sm:$0xf]
        %v3178 = vld [vmem:[%s3175 + $0x8] sm:$0xf]
        %v3179 = vld [vmem:[%s3175 + $0xc] sm:$0xf]
        %v3180 = vld [vmem:[%s3175 + $0x10] sm:$0xf]
        %v3181 = vld [vmem:[%s3175 + $0x14] sm:$0xf]
        %v3182 = vld [vmem:[%s3175 + $0x18] sm:$0xf]
        %v3183 = vld [vmem:[%s3175 + $0x1c] sm:$0xf]
        %v3184 = vld [vmem:[%s3175 + $0x20] sm:$0xf]
        %v3185 = vld [vmem:[%s3175 + $0x24] sm:$0xf]
        %v3186 = vld [vmem:[%s3175 + $0x28] sm:$0xf]
        %v3187 = vld [vmem:[%s3175 + $0x2c] sm:$0xf]
        %v3188 = vld [vmem:[%s3175 + $0x30] sm:$0xf]
        %v3189 = vld [vmem:[%s3175 + $0x34] sm:$0xf]
        %v3190 = vld [vmem:[%s3175 + $0x38] sm:$0xf]
        %v3191 = vld [vmem:[%s3175 + $0x3c] sm:$0xf]
        %v3224 = vunpack.c.l.b16 %v3143
        %v3225 = vunpack.c.l.b16 %v3144
        %v3226 = vunpack.c.l.b16 %v3145
        %v3227 = vunpack.c.l.b16 %v3146
        %v3228 = vunpack.c.l.b16 %v3147
        %v3229 = vunpack.c.l.b16 %v3148
        %v3230 = vunpack.c.l.b16 %v3149
        %v3231 = vunpack.c.l.b16 %v3150
        %v3232 = vunpack.c.l.b16 %v3151
        %v3233 = vunpack.c.l.b16 %v3152
        %v3234 = vunpack.c.l.b16 %v3153
        %v3235 = vunpack.c.l.b16 %v3154
        %v3236 = vunpack.c.l.b16 %v3155
        %v3237 = vunpack.c.l.b16 %v3156
        %v3238 = vunpack.c.l.b16 %v3157
        %v3239 = vunpack.c.l.b16 %v3158
        %v3240 = vunpack.c.l.b16 %v3159
        %v3241 = vunpack.c.l.b16 %v3160
        %v3242 = vunpack.c.l.b16 %v3161
        %v3243 = vunpack.c.l.b16 %v3162
        %v3244 = vunpack.c.l.b16 %v3163
        %v3245 = vunpack.c.l.b16 %v3164
        %v3246 = vunpack.c.l.b16 %v3165
        %v3247 = vunpack.c.l.b16 %v3166
        %v3248 = vunpack.c.l.b16 %v3167
        %v3249 = vunpack.c.l.b16 %v3168
        %v3250 = vunpack.c.l.b16 %v3169
        %v3251 = vunpack.c.l.b16 %v3170
        %v3252 = vunpack.c.l.b16 %v3171
        %v3253 = vunpack.c.l.b16 %v3172
        %v3254 = vunpack.c.l.b16 %v3173
        %v3255 = vunpack.c.l.b16 %v3174
        %v3256 = vpack.c.b16 %v3225, %v3224
        %v3257 = vpack.c.b16 %v3227, %v3226
        %v3258 = vpack.c.b16 %v3229, %v3228
        %v3259 = vpack.c.b16 %v3231, %v3230
        %v3260 = vpack.c.b16 %v3233, %v3232
        %v3261 = vpack.c.b16 %v3235, %v3234
        %v3262 = vpack.c.b16 %v3237, %v3236
        %v3263 = vpack.c.b16 %v3239, %v3238
        %v3264 = vpack.c.b16 %v3241, %v3240
        %v3265 = vpack.c.b16 %v3243, %v3242
        %v3266 = vpack.c.b16 %v3245, %v3244
        %v3267 = vpack.c.b16 %v3247, %v3246
        %v3268 = vpack.c.b16 %v3249, %v3248
        %v3269 = vpack.c.b16 %v3251, %v3250
        %v3270 = vpack.c.b16 %v3253, %v3252
        %v3271 = vpack.c.b16 %v3255, %v3254
        %v3304 = vunpack.c.l.b16 %v3176
        %v3305 = vunpack.c.l.b16 %v3177
        %v3306 = vunpack.c.l.b16 %v3178
        %v3307 = vunpack.c.l.b16 %v3179
        %v3308 = vunpack.c.l.b16 %v3180
        %v3309 = vunpack.c.l.b16 %v3181
        %v3310 = vunpack.c.l.b16 %v3182
        %v3311 = vunpack.c.l.b16 %v3183
        %v3312 = vunpack.c.l.b16 %v3184
        %v3313 = vunpack.c.l.b16 %v3185
        %v3314 = vunpack.c.l.b16 %v3186
        %v3315 = vunpack.c.l.b16 %v3187
        %v3316 = vunpack.c.l.b16 %v3188
        %v3317 = vunpack.c.l.b16 %v3189
        %v3318 = vunpack.c.l.b16 %v3190
        %v3319 = vunpack.c.l.b16 %v3191
        %v3320 = vpack.c.b16 %v3305, %v3304
        %v3321 = vpack.c.b16 %v3307, %v3306
        %v3322 = vpack.c.b16 %v3309, %v3308
        %v3323 = vpack.c.b16 %v3311, %v3310
        %v3324 = vpack.c.b16 %v3313, %v3312
        %v3325 = vpack.c.b16 %v3315, %v3314
        %v3326 = vpack.c.b16 %v3317, %v3316
        %v3327 = vpack.c.b16 %v3319, %v3318
        %3336 = vmatprep.subr.bf16.mxu0 0
        %3337 = vmatpush1.bf16.msra.mxu0 %v3320
        %3338 = vmatprep.subr.bf16.mxu0 0
        %3339 = vmatpush1.bf16.msra.mxu0 %v3321
        %3340 = vmatprep.subr.bf16.mxu0 0
        %3341 = vmatpush1.bf16.msra.mxu0 %v3322
        %3342 = vmatprep.subr.bf16.mxu0 0
        %3343 = vmatpush1.bf16.msra.mxu0 %v3323
        %3344 = vmatprep.subr.bf16.mxu0 0
        %3345 = vmatpush1.bf16.msra.mxu0 %v3324
        %3346 = vmatprep.subr.bf16.mxu0 0
        %3347 = vmatpush1.bf16.msra.mxu0 %v3325
        %3348 = vmatprep.subr.bf16.mxu0 0
        %3349 = vmatpush1.bf16.msra.mxu0 %v3326
        %3350 = vmatprep.subr.bf16.mxu0 0
        %3351 = vmatpush1.bf16.msra.mxu0 %v3327
        %3352 = vmatprep.subr.bf16.mxu0 0
        %3353 = vmatpush1.bf16.msra.mxu0 0
        %3354 = vmatprep.subr.bf16.mxu0 0
        %3355 = vmatpush1.bf16.msra.mxu0 0
        %3356 = vmatprep.subr.bf16.mxu0 0
        %3357 = vmatpush1.bf16.msra.mxu0 0
        %3358 = vmatprep.subr.bf16.mxu0 0
        %3359 = vmatpush1.bf16.msra.mxu0 0
        %3360 = vmatprep.subr.bf16.mxu0 0
        %3361 = vmatpush1.bf16.msra.mxu0 0
        %3362 = vmatprep.subr.bf16.mxu0 0
        %3363 = vmatpush1.bf16.msra.mxu0 0
        %3364 = vmatprep.subr.bf16.mxu0 0
        %3365 = vmatpush1.bf16.msra.mxu0 0
        %3366 = vmatprep.subr.bf16.mxu0 0
        %3367 = vmatpush1.bf16.msra.mxu0 0
        %3368 = vmatprep.mubr.bf16.mxu0 0
        %3369 = vmatmul.mubr.bf16.gmra.mrb[0].mxu0 %v3256
        %v3370 = vpop.f32.mrb[0].mxu0
        %v3371 = vadd.f32 0.0, %v3370
        %v3372 = vpop.f32.mrb[0].mxu0
        %v3373 = vpop.f32.mrb[0].mxu0
        %v3374 = vadd.f32 0.0, %v3373
        %v3375 = vpop.f32.mrb[0].mxu0
        %3376 = vmatprep.mubr.bf16.mxu0 0
        %3377 = vmatmul.mubr.bf16.gmra.mrb[0].mxu0 %v3257
        %v3378 = vpop.f32.mrb[0].mxu0
        %v3379 = vadd.f32 0.0, %v3378
        %v3380 = vpop.f32.mrb[0].mxu0
        %v3381 = vpop.f32.mrb[0].mxu0
        %v3382 = vadd.f32 0.0, %v3381
        %v3383 = vpop.f32.mrb[0].mxu0
        %3384 = vmatprep.mubr.bf16.mxu0 0
        %3385 = vmatmul.mubr.bf16.gmra.mrb[0].mxu0 %v3258
        %v3386 = vpop.f32.mrb[0].mxu0
        %v3387 = vadd.f32 0.0, %v3386
        %v3388 = vpop.f32.mrb[0].mxu0
        %v3389 = vpop.f32.mrb[0].mxu0
        %v3390 = vadd.f32 0.0, %v3389
        %v3391 = vpop.f32.mrb[0].mxu0
        %3392 = vmatprep.mubr.bf16.mxu0 0
        %3393 = vmatmul.mubr.bf16.gmra.mrb[0].mxu0 %v3259
        %v3394 = vpop.f32.mrb[0].mxu0
        %v3395 = vadd.f32 0.0, %v3394
        %v3396 = vpop.f32.mrb[0].mxu0
        %v3397 = vpop.f32.mrb[0].mxu0
        %v3398 = vadd.f32 0.0, %v3397
        %v3399 = vpop.f32.mrb[0].mxu0
        %3400 = vmatprep.mubr.bf16.mxu0 0
        %3401 = vmatmul.mubr.bf16.gmra.mrb[0].mxu0 %v3260
        %v3402 = vpop.f32.mrb[0].mxu0
        %v3403 = vadd.f32 0.0, %v3402
        %v3404 = vpop.f32.mrb[0].mxu0
        %v3405 = vpop.f32.mrb[0].mxu0
        %v3406 = vadd.f32 0.0, %v3405
        %v3407 = vpop.f32.mrb[0].mxu0
        %3408 = vmatprep.mubr.bf16.mxu0 0
        %3409 = vmatmul.mubr.bf16.gmra.mrb[0].mxu0 %v3261
        %v3410 = vpop.f32.mrb[0].mxu0
        %v3411 = vadd.f32 0.0, %v3410
        %v3412 = vpop.f32.mrb[0].mxu0
        %v3413 = vpop.f32.mrb[0].mxu0
        %v3414 = vadd.f32 0.0, %v3413
        %v3415 = vpop.f32.mrb[0].mxu0
        %3416 = vmatprep.mubr.bf16.mxu0 0
        %3417 = vmatmul.mubr.bf16.gmra.mrb[0].mxu0 %v3262
        %v3418 = vpop.f32.mrb[0].mxu0
        %v3419 = vadd.f32 0.0, %v3418
        %v3420 = vpop.f32.mrb[0].mxu0
        %v3421 = vpop.f32.mrb[0].mxu0
        %v3422 = vadd.f32 0.0, %v3421
        %v3423 = vpop.f32.mrb[0].mxu0
        %3424 = vmatprep.mubr.bf16.mxu0 0
        %3425 = vmatmul.mubr.bf16.gmra.mrb[0].mxu0 %v3263
        %v3426 = vpop.f32.mrb[0].mxu0
        %v3427 = vadd.f32 0.0, %v3426
        %v3428 = vpop.f32.mrb[0].mxu0
        %v3429 = vpop.f32.mrb[0].mxu0
        %v3430 = vadd.f32 0.0, %v3429
        %v3431 = vpop.f32.mrb[0].mxu0
        %3432 = vmatprep.mubr.bf16.mxu0 0
        %3433 = vmatmul.mubr.bf16.gmra.mrb[0].mxu0 %v3264
        %v3434 = vpop.f32.mrb[0].mxu0
        %v3435 = vadd.f32 0.0, %v3434
        %v3436 = vpop.f32.mrb[0].mxu0
        %v3437 = vpop.f32.mrb[0].mxu0
        %v3438 = vadd.f32 0.0, %v3437
        %v3439 = vpop.f32.mrb[0].mxu0
        %3440 = vmatprep.mubr.bf16.mxu0 0
        %3441 = vmatmul.mubr.bf16.gmra.mrb[0].mxu0 %v3265
        %v3442 = vpop.f32.mrb[0].mxu0
        %v3443 = vadd.f32 0.0, %v3442
        %v3444 = vpop.f32.mrb[0].mxu0
        %v3445 = vpop.f32.mrb[0].mxu0
        %v3446 = vadd.f32 0.0, %v3445
        %v3447 = vpop.f32.mrb[0].mxu0
        %3448 = vmatprep.mubr.bf16.mxu0 0
        %3449 = vmatmul.mubr.bf16.gmra.mrb[0].mxu0 %v3266
        %v3450 = vpop.f32.mrb[0].mxu0
        %v3451 = vadd.f32 0.0, %v3450
        %v3452 = vpop.f32.mrb[0].mxu0
        %v3453 = vpop.f32.mrb[0].mxu0
        %v3454 = vadd.f32 0.0, %v3453
        %v3455 = vpop.f32.mrb[0].mxu0
        %3456 = vmatprep.mubr.bf16.mxu0 0
        %3457 = vmatmul.mubr.bf16.gmra.mrb[0].mxu0 %v3267
        %v3458 = vpop.f32.mrb[0].mxu0
        %v3459 = vadd.f32 0.0, %v3458
        %v3460 = vpop.f32.mrb[0].mxu0
        %v3461 = vpop.f32.mrb[0].mxu0
        %v3462 = vadd.f32 0.0, %v3461
        %v3463 = vpop.f32.mrb[0].mxu0
        %3464 = vmatprep.mubr.bf16.mxu0 0
        %3465 = vmatmul.mubr.bf16.gmra.mrb[0].mxu0 %v3268
        %v3466 = vpop.f32.mrb[0].mxu0
        %v3467 = vadd.f32 0.0, %v3466
        %v3468 = vpop.f32.mrb[0].mxu0
        %v3469 = vpop.f32.mrb[0].mxu0
        %v3470 = vadd.f32 0.0, %v3469
        %v3471 = vpop.f32.mrb[0].mxu0
        %3472 = vmatprep.mubr.bf16.mxu0 0
        %3473 = vmatmul.mubr.bf16.gmra.mrb[0].mxu0 %v3269
        %v3474 = vpop.f32.mrb[0].mxu0
        %v3475 = vadd.f32 0.0, %v3474
        %v3476 = vpop.f32.mrb[0].mxu0
        %v3477 = vpop.f32.mrb[0].mxu0
        %v3478 = vadd.f32 0.0, %v3477
        %v3479 = vpop.f32.mrb[0].mxu0
        %3480 = vmatprep.mubr.bf16.mxu0 0
        %3481 = vmatmul.mubr.bf16.gmra.mrb[0].mxu0 %v3270
        %v3482 = vpop.f32.mrb[0].mxu0
        %v3483 = vadd.f32 0.0, %v3482
        %v3484 = vpop.f32.mrb[0].mxu0
        %v3485 = vpop.f32.mrb[0].mxu0
        %v3486 = vadd.f32 0.0, %v3485
        %v3487 = vpop.f32.mrb[0].mxu0
        %3488 = vmatprep.mubr.bf16.mxu0 0
        %3489 = vmatmul.mubr.bf16.gmra.mrb[0].mxu0 %v3271
        %v3490 = vpop.f32.mrb[0].mxu0
        %v3491 = vadd.f32 0.0, %v3490
        %v3492 = vpop.f32.mrb[0].mxu0
        %v3493 = vpop.f32.mrb[0].mxu0
        %v3494 = vadd.f32 0.0, %v3493
        %v3495 = vpop.f32.mrb[0].mxu0
        %3496 = vdwg.mxu0
        %v3497 = vadd.f32 %v3110, %v3371
        %v3498 = vadd.f32 %v3111, %v3374
        %v3499 = vadd.f32 %v3112, %v3379
        %v3500 = vadd.f32 %v3113, %v3382
        %v3501 = vadd.f32 %v3114, %v3387
        %v3502 = vadd.f32 %v3115, %v3390
        %v3503 = vadd.f32 %v3116, %v3395
        %v3504 = vadd.f32 %v3117, %v3398
        %v3505 = vadd.f32 %v3118, %v3403
        %v3506 = vadd.f32 %v3119, %v3406
        %v3507 = vadd.f32 %v3120, %v3411
        %v3508 = vadd.f32 %v3121, %v3414
        %v3509 = vadd.f32 %v3122, %v3419
        %v3510 = vadd.f32 %v3123, %v3422
        %v3511 = vadd.f32 %v3124, %v3427
        %v3512 = vadd.f32 %v3125, %v3430
        %v3513 = vadd.f32 %v3126, %v3435
        %v3514 = vadd.f32 %v3127, %v3438
        %v3515 = vadd.f32 %v3128, %v3443
        %v3516 = vadd.f32 %v3129, %v3446
        %v3517 = vadd.f32 %v3130, %v3451
        %v3518 = vadd.f32 %v3131, %v3454
        %v3519 = vadd.f32 %v3132, %v3459
        %v3520 = vadd.f32 %v3133, %v3462
        %v3521 = vadd.f32 %v3134, %v3467
        %v3522 = vadd.f32 %v3135, %v3470
        %v3523 = vadd.f32 %v3136, %v3475
        %v3524 = vadd.f32 %v3137, %v3478
        %v3525 = vadd.f32 %v3138, %v3483
        %v3526 = vadd.f32 %v3139, %v3486
        %v3527 = vadd.f32 %v3140, %v3491
        %v3528 = vadd.f32 %v3141, %v3494
        %v3529 = vld [vmem:[%s3142] sm:$0xf]
        %v3530 = vld [vmem:[%s3142 + $0x4] sm:$0xf]
        %v3531 = vld [vmem:[%s3142 + $0x8] sm:$0x1]
        %v3532 = vld [vmem:[%s3142 + $0xc] sm:$0xf]
        %v3533 = vld [vmem:[%s3142 + $0x10] sm:$0xf]
        %v3534 = vld [vmem:[%s3142 + $0x14] sm:$0x1]
        %v3535 = vld [vmem:[%s3142 + $0x18] sm:$0xf]
        %v3536 = vld [vmem:[%s3142 + $0x1c] sm:$0xf]
        %v3537 = vld [vmem:[%s3142 + $0x20] sm:$0x1]
        %v3538 = vld [vmem:[%s3142 + $0x24] sm:$0xf]
        %v3539 = vld [vmem:[%s3142 + $0x28] sm:$0xf]
        %v3540 = vld [vmem:[%s3142 + $0x2c] sm:$0x1]
        %v3541 = vld [vmem:[%s3142 + $0x30] sm:$0xf]
        %v3542 = vld [vmem:[%s3142 + $0x34] sm:$0xf]
        %v3543 = vld [vmem:[%s3142 + $0x38] sm:$0x1]
        %v3544 = vld [vmem:[%s3142 + $0x3c] sm:$0xf]
        %v3545 = vld [vmem:[%s3142 + $0x40] sm:$0xf]
        %v3546 = vld [vmem:[%s3142 + $0x44] sm:$0x1]
        %v3547 = vld [vmem:[%s3142 + $0x48] sm:$0xf]
        %v3548 = vld [vmem:[%s3142 + $0x4c] sm:$0xf]
        %v3549 = vld [vmem:[%s3142 + $0x50] sm:$0x1]
        %v3550 = vld [vmem:[%s3142 + $0x54] sm:$0xf]
        %v3551 = vld [vmem:[%s3142 + $0x58] sm:$0xf]
        %v3552 = vld [vmem:[%s3142 + $0x5c] sm:$0x1]
        %v3553 = vld [vmem:[%s3142 + $0x60] sm:$0xf]
        %v3554 = vld [vmem:[%s3142 + $0x64] sm:$0xf]
        %v3555 = vld [vmem:[%s3142 + $0x68] sm:$0x1]
        %v3556 = vld [vmem:[%s3142 + $0x6c] sm:$0xf]
        %v3557 = vld [vmem:[%s3142 + $0x70] sm:$0xf]
        %v3558 = vld [vmem:[%s3142 + $0x74] sm:$0x1]
        %v3559 = vld [vmem:[%s3142 + $0x78] sm:$0xf]
        %v3560 = vld [vmem:[%s3142 + $0x7c] sm:$0xf]
        %v3561 = vld [vmem:[%s3142 + $0x80] sm:$0x1]
        %v3562 = vld [vmem:[%s3142 + $0x84] sm:$0xf]
        %v3563 = vld [vmem:[%s3142 + $0x88] sm:$0xf]
        %v3564 = vld [vmem:[%s3142 + $0x8c] sm:$0x1]
        %v3565 = vld [vmem:[%s3142 + $0x90] sm:$0xf]
        %v3566 = vld [vmem:[%s3142 + $0x94] sm:$0xf]
        %v3567 = vld [vmem:[%s3142 + $0x98] sm:$0x1]
        %v3568 = vld [vmem:[%s3142 + $0x9c] sm:$0xf]
        %v3569 = vld [vmem:[%s3142 + $0xa0] sm:$0xf]
        %v3570 = vld [vmem:[%s3142 + $0xa4] sm:$0x1]
        %v3571 = vld [vmem:[%s3142 + $0xa8] sm:$0xf]
        %v3572 = vld [vmem:[%s3142 + $0xac] sm:$0xf]
        %v3573 = vld [vmem:[%s3142 + $0xb0] sm:$0x1]
        %v3574 = vld [vmem:[%s3142 + $0xb4] sm:$0xf]
        %v3575 = vld [vmem:[%s3142 + $0xb8] sm:$0xf]
        %v3576 = vld [vmem:[%s3142 + $0xbc] sm:$0x1]
        %v3578 = vshrl.u32 %v3529, 16
        %v3580 = vrot.slane %v3578, 4
        %v3581 = vshll.u32 %v3529, 16
        %v3583 = vrot.slane %v3581, 5
        %v3584 = vor.u32 %v3580, %v3583
        %v3585 = vrot.slane %v3584, 4
        %v3587 = vshll.u32 %v3530, 16
        %v3589 = vrot.slane %v3587, 5
        %v3590 = vsel %vm1677, %v3585, %v3589
        %v3591 = vshrl.u32 %v3530, 16
        %v3593 = vrot.slane %v3591, 4
        %v3594 = vor.u32 %v3593, %v3589
        %v3595 = vrot.slane %v3594, 4
        %v3597 = vshll.u32 %v3531, 16
        %v3599 = vrot.slane %v3597, 5
        %v3600 = vsel %vm1677, %v3595, %v3599
        %v3602 = vshrl.u32 %v3532, 16
        %v3604 = vrot.slane %v3602, 4
        %v3605 = vshll.u32 %v3532, 16
        %v3607 = vrot.slane %v3605, 5
        %v3608 = vor.u32 %v3604, %v3607
        %v3609 = vrot.slane %v3608, 4
        %v3611 = vshll.u32 %v3533, 16
        %v3613 = vrot.slane %v3611, 5
        %v3614 = vsel %vm1677, %v3609, %v3613
        %v3615 = vshrl.u32 %v3533, 16
        %v3617 = vrot.slane %v3615, 4
        %v3618 = vor.u32 %v3617, %v3613
        %v3619 = vrot.slane %v3618, 4
        %v3621 = vshll.u32 %v3534, 16
        %v3623 = vrot.slane %v3621, 5
        %v3624 = vsel %vm1677, %v3619, %v3623
        %v3626 = vshrl.u32 %v3535, 16
        %v3628 = vrot.slane %v3626, 4
        %v3629 = vshll.u32 %v3535, 16
        %v3631 = vrot.slane %v3629, 5
        %v3632 = vor.u32 %v3628, %v3631
        %v3633 = vrot.slane %v3632, 4
        %v3635 = vshll.u32 %v3536, 16
        %v3637 = vrot.slane %v3635, 5
        %v3638 = vsel %vm1677, %v3633, %v3637
        %v3639 = vshrl.u32 %v3536, 16
        %v3641 = vrot.slane %v3639, 4
        %v3642 = vor.u32 %v3641, %v3637
        %v3643 = vrot.slane %v3642, 4
        %v3645 = vshll.u32 %v3537, 16
        %v3647 = vrot.slane %v3645, 5
        %v3648 = vsel %vm1677, %v3643, %v3647
        %v3650 = vshrl.u32 %v3538, 16
        %v3652 = vrot.slane %v3650, 4
        %v3653 = vshll.u32 %v3538, 16
        %v3655 = vrot.slane %v3653, 5
        %v3656 = vor.u32 %v3652, %v3655
        %v3657 = vrot.slane %v3656, 4
        %v3659 = vshll.u32 %v3539, 16
        %v3661 = vrot.slane %v3659, 5
        %v3662 = vsel %vm1677, %v3657, %v3661
        %v3663 = vshrl.u32 %v3539, 16
        %v3665 = vrot.slane %v3663, 4
        %v3666 = vor.u32 %v3665, %v3661
        %v3667 = vrot.slane %v3666, 4
        %v3669 = vshll.u32 %v3540, 16
        %v3671 = vrot.slane %v3669, 5
        %v3672 = vsel %vm1677, %v3667, %v3671
        %v3674 = vshrl.u32 %v3541, 16
        %v3676 = vrot.slane %v3674, 4
        %v3677 = vshll.u32 %v3541, 16
        %v3679 = vrot.slane %v3677, 5
        %v3680 = vor.u32 %v3676, %v3679
        %v3681 = vrot.slane %v3680, 4
        %v3683 = vshll.u32 %v3542, 16
        %v3685 = vrot.slane %v3683, 5
        %v3686 = vsel %vm1677, %v3681, %v3685
        %v3687 = vshrl.u32 %v3542, 16
        %v3689 = vrot.slane %v3687, 4
        %v3690 = vor.u32 %v3689, %v3685
        %v3691 = vrot.slane %v3690, 4
        %v3693 = vshll.u32 %v3543, 16
        %v3695 = vrot.slane %v3693, 5
        %v3696 = vsel %vm1677, %v3691, %v3695
        %v3698 = vshrl.u32 %v3544, 16
        %v3700 = vrot.slane %v3698, 4
        %v3701 = vshll.u32 %v3544, 16
        %v3703 = vrot.slane %v3701, 5
        %v3704 = vor.u32 %v3700, %v3703
        %v3705 = vrot.slane %v3704, 4
        %v3707 = vshll.u32 %v3545, 16
        %v3709 = vrot.slane %v3707, 5
        %v3710 = vsel %vm1677, %v3705, %v3709
        %v3711 = vshrl.u32 %v3545, 16
        %v3713 = vrot.slane %v3711, 4
        %v3714 = vor.u32 %v3713, %v3709
        %v3715 = vrot.slane %v3714, 4
        %v3717 = vshll.u32 %v3546, 16
        %v3719 = vrot.slane %v3717, 5
        %v3720 = vsel %vm1677, %v3715, %v3719
        %v3722 = vshrl.u32 %v3547, 16
        %v3724 = vrot.slane %v3722, 4
        %v3725 = vshll.u32 %v3547, 16
        %v3727 = vrot.slane %v3725, 5
        %v3728 = vor.u32 %v3724, %v3727
        %v3729 = vrot.slane %v3728, 4
        %v3731 = vshll.u32 %v3548, 16
        %v3733 = vrot.slane %v3731, 5
        %v3734 = vsel %vm1677, %v3729, %v3733
        %v3735 = vshrl.u32 %v3548, 16
        %v3737 = vrot.slane %v3735, 4
        %v3738 = vor.u32 %v3737, %v3733
        %v3739 = vrot.slane %v3738, 4
        %v3741 = vshll.u32 %v3549, 16
        %v3743 = vrot.slane %v3741, 5
        %v3744 = vsel %vm1677, %v3739, %v3743
        %v3746 = vshrl.u32 %v3550, 16
        %v3748 = vrot.slane %v3746, 4
        %v3749 = vshll.u32 %v3550, 16
        %v3751 = vrot.slane %v3749, 5
        %v3752 = vor.u32 %v3748, %v3751
        %v3753 = vrot.slane %v3752, 4
        %v3755 = vshll.u32 %v3551, 16
        %v3757 = vrot.slane %v3755, 5
        %v3758 = vsel %vm1677, %v3753, %v3757
        %v3759 = vshrl.u32 %v3551, 16
        %v3761 = vrot.slane %v3759, 4
        %v3762 = vor.u32 %v3761, %v3757
        %v3763 = vrot.slane %v3762, 4
        %v3765 = vshll.u32 %v3552, 16
        %v3767 = vrot.slane %v3765, 5
        %v3768 = vsel %vm1677, %v3763, %v3767
        %v3770 = vshrl.u32 %v3553, 16
        %v3772 = vrot.slane %v3770, 4
        %v3773 = vshll.u32 %v3553, 16
        %v3775 = vrot.slane %v3773, 5
        %v3776 = vor.u32 %v3772, %v3775
        %v3777 = vrot.slane %v3776, 4
        %v3779 = vshll.u32 %v3554, 16
        %v3781 = vrot.slane %v3779, 5
        %v3782 = vsel %vm1677, %v3777, %v3781
        %v3783 = vshrl.u32 %v3554, 16
        %v3785 = vrot.slane %v3783, 4
        %v3786 = vor.u32 %v3785, %v3781
        %v3787 = vrot.slane %v3786, 4
        %v3789 = vshll.u32 %v3555, 16
        %v3791 = vrot.slane %v3789, 5
        %v3792 = vsel %vm1677, %v3787, %v3791
        %v3794 = vshrl.u32 %v3556, 16
        %v3796 = vrot.slane %v3794, 4
        %v3797 = vshll.u32 %v3556, 16
        %v3799 = vrot.slane %v3797, 5
        %v3800 = vor.u32 %v3796, %v3799
        %v3801 = vrot.slane %v3800, 4
        %v3803 = vshll.u32 %v3557, 16
        %v3805 = vrot.slane %v3803, 5
        %v3806 = vsel %vm1677, %v3801, %v3805
        %v3807 = vshrl.u32 %v3557, 16
        %v3809 = vrot.slane %v3807, 4
        %v3810 = vor.u32 %v3809, %v3805
        %v3811 = vrot.slane %v3810, 4
        %v3813 = vshll.u32 %v3558, 16
        %v3815 = vrot.slane %v3813, 5
        %v3816 = vsel %vm1677, %v3811, %v3815
        %v3818 = vshrl.u32 %v3559, 16
        %v3820 = vrot.slane %v3818, 4
        %v3821 = vshll.u32 %v3559, 16
        %v3823 = vrot.slane %v3821, 5
        %v3824 = vor.u32 %v3820, %v3823
        %v3825 = vrot.slane %v3824, 4
        %v3827 = vshll.u32 %v3560, 16
        %v3829 = vrot.slane %v3827, 5
        %v3830 = vsel %vm1677, %v3825, %v3829
        %v3831 = vshrl.u32 %v3560, 16
        %v3833 = vrot.slane %v3831, 4
        %v3834 = vor.u32 %v3833, %v3829
        %v3835 = vrot.slane %v3834, 4
        %v3837 = vshll.u32 %v3561, 16
        %v3839 = vrot.slane %v3837, 5
        %v3840 = vsel %vm1677, %v3835, %v3839
        %v3842 = vshrl.u32 %v3562, 16
        %v3844 = vrot.slane %v3842, 4
        %v3845 = vshll.u32 %v3562, 16
        %v3847 = vrot.slane %v3845, 5
        %v3848 = vor.u32 %v3844, %v3847
        %v3849 = vrot.slane %v3848, 4
        %v3851 = vshll.u32 %v3563, 16
        %v3853 = vrot.slane %v3851, 5
        %v3854 = vsel %vm1677, %v3849, %v3853
        %v3855 = vshrl.u32 %v3563, 16
        %v3857 = vrot.slane %v3855, 4
        %v3858 = vor.u32 %v3857, %v3853
        %v3859 = vrot.slane %v3858, 4
        %v3861 = vshll.u32 %v3564, 16
        %v3863 = vrot.slane %v3861, 5
        %v3864 = vsel %vm1677, %v3859, %v3863
        %v3866 = vshrl.u32 %v3565, 16
        %v3868 = vrot.slane %v3866, 4
        %v3869 = vshll.u32 %v3565, 16
        %v3871 = vrot.slane %v3869, 5
        %v3872 = vor.u32 %v3868, %v3871
        %v3873 = vrot.slane %v3872, 4
        %v3875 = vshll.u32 %v3566, 16
        %v3877 = vrot.slane %v3875, 5
        %v3878 = vsel %vm1677, %v3873, %v3877
        %v3879 = vshrl.u32 %v3566, 16
        %v3881 = vrot.slane %v3879, 4
        %v3882 = vor.u32 %v3881, %v3877
        %v3883 = vrot.slane %v3882, 4
        %v3885 = vshll.u32 %v3567, 16
        %v3887 = vrot.slane %v3885, 5
        %v3888 = vsel %vm1677, %v3883, %v3887
        %v3890 = vshrl.u32 %v3568, 16
        %v3892 = vrot.slane %v3890, 4
        %v3893 = vshll.u32 %v3568, 16
        %v3895 = vrot.slane %v3893, 5
        %v3896 = vor.u32 %v3892, %v3895
        %v3897 = vrot.slane %v3896, 4
        %v3899 = vshll.u32 %v3569, 16
        %v3901 = vrot.slane %v3899, 5
        %v3902 = vsel %vm1677, %v3897, %v3901
        %v3903 = vshrl.u32 %v3569, 16
        %v3905 = vrot.slane %v3903, 4
        %v3906 = vor.u32 %v3905, %v3901
        %v3907 = vrot.slane %v3906, 4
        %v3909 = vshll.u32 %v3570, 16
        %v3911 = vrot.slane %v3909, 5
        %v3912 = vsel %vm1677, %v3907, %v3911
        %v3914 = vshrl.u32 %v3571, 16
        %v3916 = vrot.slane %v3914, 4
        %v3917 = vshll.u32 %v3571, 16
        %v3919 = vrot.slane %v3917, 5
        %v3920 = vor.u32 %v3916, %v3919
        %v3921 = vrot.slane %v3920, 4
        %v3923 = vshll.u32 %v3572, 16
        %v3925 = vrot.slane %v3923, 5
        %v3926 = vsel %vm1677, %v3921, %v3925
        %v3927 = vshrl.u32 %v3572, 16
        %v3929 = vrot.slane %v3927, 4
        %v3930 = vor.u32 %v3929, %v3925
        %v3931 = vrot.slane %v3930, 4
        %v3933 = vshll.u32 %v3573, 16
        %v3935 = vrot.slane %v3933, 5
        %v3936 = vsel %vm1677, %v3931, %v3935
        %v3938 = vshrl.u32 %v3574, 16
        %v3940 = vrot.slane %v3938, 4
        %v3941 = vshll.u32 %v3574, 16
        %v3943 = vrot.slane %v3941, 5
        %v3944 = vor.u32 %v3940, %v3943
        %v3945 = vrot.slane %v3944, 4
        %v3947 = vshll.u32 %v3575, 16
        %v3949 = vrot.slane %v3947, 5
        %v3950 = vsel %vm1677, %v3945, %v3949
        %v3951 = vshrl.u32 %v3575, 16
        %v3953 = vrot.slane %v3951, 4
        %v3954 = vor.u32 %v3953, %v3949
        %v3955 = vrot.slane %v3954, 4
        %v3957 = vshll.u32 %v3576, 16
        %v3959 = vrot.slane %v3957, 5
        %v3960 = vsel %vm1677, %v3955, %v3959
        %s3961 = scalar_lea.vmem [#allocation8], 256
        %v3962 = vld [vmem:[%s3961] sm:$0xf]
        %v3963 = vld [vmem:[%s3961 + $0x4] sm:$0xf]
        %v3964 = vld [vmem:[%s3961 + $0x8] sm:$0xf]
        %v3965 = vld [vmem:[%s3961 + $0xc] sm:$0xf]
        %v3966 = vld [vmem:[%s3961 + $0x10] sm:$0xf]
        %v3967 = vld [vmem:[%s3961 + $0x14] sm:$0xf]
        %v3968 = vld [vmem:[%s3961 + $0x18] sm:$0xf]
        %v3969 = vld [vmem:[%s3961 + $0x1c] sm:$0xf]
        %v3970 = vld [vmem:[%s3961 + $0x20] sm:$0xf]
        %v3971 = vld [vmem:[%s3961 + $0x24] sm:$0xf]
        %v3972 = vld [vmem:[%s3961 + $0x28] sm:$0xf]
        %v3973 = vld [vmem:[%s3961 + $0x2c] sm:$0xf]
        %v3974 = vld [vmem:[%s3961 + $0x30] sm:$0xf]
        %v3975 = vld [vmem:[%s3961 + $0x34] sm:$0xf]
        %v3976 = vld [vmem:[%s3961 + $0x38] sm:$0xf]
        %v3977 = vld [vmem:[%s3961 + $0x3c] sm:$0xf]
        %v3978 = vunpack.c.l.b16 %v3590
        %v3979 = vunpack.c.l.b16 %v3600
        %v3980 = vunpack.c.l.b16 %v3614
        %v3981 = vunpack.c.l.b16 %v3624
        %v3982 = vunpack.c.l.b16 %v3638
        %v3983 = vunpack.c.l.b16 %v3648
        %v3984 = vunpack.c.l.b16 %v3662
        %v3985 = vunpack.c.l.b16 %v3672
        %v3986 = vunpack.c.l.b16 %v3686
        %v3987 = vunpack.c.l.b16 %v3696
        %v3988 = vunpack.c.l.b16 %v3710
        %v3989 = vunpack.c.l.b16 %v3720
        %v3990 = vunpack.c.l.b16 %v3734
        %v3991 = vunpack.c.l.b16 %v3744
        %v3992 = vunpack.c.l.b16 %v3758
        %v3993 = vunpack.c.l.b16 %v3768
        %v3994 = vunpack.c.l.b16 %v3782
        %v3995 = vunpack.c.l.b16 %v3792
        %v3996 = vunpack.c.l.b16 %v3806
        %v3997 = vunpack.c.l.b16 %v3816
        %v3998 = vunpack.c.l.b16 %v3830
        %v3999 = vunpack.c.l.b16 %v3840
        %v4000 = vunpack.c.l.b16 %v3854
        %v4001 = vunpack.c.l.b16 %v3864
        %v4002 = vunpack.c.l.b16 %v3878
        %v4003 = vunpack.c.l.b16 %v3888
        %v4004 = vunpack.c.l.b16 %v3902
        %v4005 = vunpack.c.l.b16 %v3912
        %v4006 = vunpack.c.l.b16 %v3926
        %v4007 = vunpack.c.l.b16 %v3936
        %v4008 = vunpack.c.l.b16 %v3950
        %v4009 = vunpack.c.l.b16 %v3960
        %v4010 = vpack.c.b16 %v3979, %v3978
        %v4011 = vpack.c.b16 %v3981, %v3980
        %v4012 = vpack.c.b16 %v3983, %v3982
        %v4013 = vpack.c.b16 %v3985, %v3984
        %v4014 = vpack.c.b16 %v3987, %v3986
        %v4015 = vpack.c.b16 %v3989, %v3988
        %v4016 = vpack.c.b16 %v3991, %v3990
        %v4017 = vpack.c.b16 %v3993, %v3992
        %v4018 = vpack.c.b16 %v3995, %v3994
        %v4019 = vpack.c.b16 %v3997, %v3996
        %v4020 = vpack.c.b16 %v3999, %v3998
        %v4021 = vpack.c.b16 %v4001, %v4000
        %v4022 = vpack.c.b16 %v4003, %v4002
        %v4023 = vpack.c.b16 %v4005, %v4004
        %v4024 = vpack.c.b16 %v4007, %v4006
        %v4025 = vpack.c.b16 %v4009, %v4008
        %v4058 = vunpack.c.l.b16 %v3962
        %v4059 = vunpack.c.l.b16 %v3963
        %v4060 = vunpack.c.l.b16 %v3964
        %v4061 = vunpack.c.l.b16 %v3965
        %v4062 = vunpack.c.l.b16 %v3966
        %v4063 = vunpack.c.l.b16 %v3967
        %v4064 = vunpack.c.l.b16 %v3968
        %v4065 = vunpack.c.l.b16 %v3969
        %v4066 = vunpack.c.l.b16 %v3970
        %v4067 = vunpack.c.l.b16 %v3971
        %v4068 = vunpack.c.l.b16 %v3972
        %v4069 = vunpack.c.l.b16 %v3973
        %v4070 = vunpack.c.l.b16 %v3974
        %v4071 = vunpack.c.l.b16 %v3975
        %v4072 = vunpack.c.l.b16 %v3976
        %v4073 = vunpack.c.l.b16 %v3977
        %v4074 = vpack.c.b16 %v4059, %v4058
        %v4075 = vpack.c.b16 %v4061, %v4060
        %v4076 = vpack.c.b16 %v4063, %v4062
        %v4077 = vpack.c.b16 %v4065, %v4064
        %v4078 = vpack.c.b16 %v4067, %v4066
        %v4079 = vpack.c.b16 %v4069, %v4068
        %v4080 = vpack.c.b16 %v4071, %v4070
        %v4081 = vpack.c.b16 %v4073, %v4072
        %4090 = vmatprep.subr.bf16.mxu0 0
        %4091 = vmatpush1.bf16.msra.mxu0 %v4074
        %4092 = vmatprep.subr.bf16.mxu0 0
        %4093 = vmatpush1.bf16.msra.mxu0 %v4075
        %4094 = vmatprep.subr.bf16.mxu0 0
        %4095 = vmatpush1.bf16.msra.mxu0 %v4076
        %4096 = vmatprep.subr.bf16.mxu0 0
        %4097 = vmatpush1.bf16.msra.mxu0 %v4077
        %4098 = vmatprep.subr.bf16.mxu0 0
        %4099 = vmatpush1.bf16.msra.mxu0 %v4078
        %4100 = vmatprep.subr.bf16.mxu0 0
        %4101 = vmatpush1.bf16.msra.mxu0 %v4079
        %4102 = vmatprep.subr.bf16.mxu0 0
        %4103 = vmatpush1.bf16.msra.mxu0 %v4080
        %4104 = vmatprep.subr.bf16.mxu0 0
        %4105 = vmatpush1.bf16.msra.mxu0 %v4081
        %4106 = vmatprep.subr.bf16.mxu0 0
        %4107 = vmatpush1.bf16.msra.mxu0 0
        %4108 = vmatprep.subr.bf16.mxu0 0
        %4109 = vmatpush1.bf16.msra.mxu0 0
        %4110 = vmatprep.subr.bf16.mxu0 0
        %4111 = vmatpush1.bf16.msra.mxu0 0
        %4112 = vmatprep.subr.bf16.mxu0 0
        %4113 = vmatpush1.bf16.msra.mxu0 0
        %4114 = vmatprep.subr.bf16.mxu0 0
        %4115 = vmatpush1.bf16.msra.mxu0 0
        %4116 = vmatprep.subr.bf16.mxu0 0
        %4117 = vmatpush1.bf16.msra.mxu0 0
        %4118 = vmatprep.subr.bf16.mxu0 0
        %4119 = vmatpush1.bf16.msra.mxu0 0
        %4120 = vmatprep.subr.bf16.mxu0 0
        %4121 = vmatpush1.bf16.msra.mxu0 0
        %4122 = vmatprep.mubr.bf16.mxu0 0
        %4123 = vmatmul.mubr.bf16.gmra.mrb[0].mxu0 %v4010
        %v4124 = vpop.f32.mrb[0].mxu0
        %v4125 = vadd.f32 0.0, %v4124
        %v4126 = vpop.f32.mrb[0].mxu0
        %v4127 = vpop.f32.mrb[0].mxu0
        %v4128 = vadd.f32 0.0, %v4127
        %v4129 = vpop.f32.mrb[0].mxu0
        %4130 = vmatprep.mubr.bf16.mxu0 0
        %4131 = vmatmul.mubr.bf16.gmra.mrb[0].mxu0 %v4011
        %v4132 = vpop.f32.mrb[0].mxu0
        %v4133 = vadd.f32 0.0, %v4132
        %v4134 = vpop.f32.mrb[0].mxu0
        %v4135 = vpop.f32.mrb[0].mxu0
        %v4136 = vadd.f32 0.0, %v4135
        %v4137 = vpop.f32.mrb[0].mxu0
        %4138 = vmatprep.mubr.bf16.mxu0 0
        %4139 = vmatmul.mubr.bf16.gmra.mrb[0].mxu0 %v4012
        %v4140 = vpop.f32.mrb[0].mxu0
        %v4141 = vadd.f32 0.0, %v4140
        %v4142 = vpop.f32.mrb[0].mxu0
        %v4143 = vpop.f32.mrb[0].mxu0
        %v4144 = vadd.f32 0.0, %v4143
        %v4145 = vpop.f32.mrb[0].mxu0
        %4146 = vmatprep.mubr.bf16.mxu0 0
        %4147 = vmatmul.mubr.bf16.gmra.mrb[0].mxu0 %v4013
        %v4148 = vpop.f32.mrb[0].mxu0
        %v4149 = vadd.f32 0.0, %v4148
        %v4150 = vpop.f32.mrb[0].mxu0
        %v4151 = vpop.f32.mrb[0].mxu0
        %v4152 = vadd.f32 0.0, %v4151
        %v4153 = vpop.f32.mrb[0].mxu0
        %4154 = vmatprep.mubr.bf16.mxu0 0
        %4155 = vmatmul.mubr.bf16.gmra.mrb[0].mxu0 %v4014
        %v4156 = vpop.f32.mrb[0].mxu0
        %v4157 = vadd.f32 0.0, %v4156
        %v4158 = vpop.f32.mrb[0].mxu0
        %v4159 = vpop.f32.mrb[0].mxu0
        %v4160 = vadd.f32 0.0, %v4159
        %v4161 = vpop.f32.mrb[0].mxu0
        %4162 = vmatprep.mubr.bf16.mxu0 0
        %4163 = vmatmul.mubr.bf16.gmra.mrb[0].mxu0 %v4015
        %v4164 = vpop.f32.mrb[0].mxu0
        %v4165 = vadd.f32 0.0, %v4164
        %v4166 = vpop.f32.mrb[0].mxu0
        %v4167 = vpop.f32.mrb[0].mxu0
        %v4168 = vadd.f32 0.0, %v4167
        %v4169 = vpop.f32.mrb[0].mxu0
        %4170 = vmatprep.mubr.bf16.mxu0 0
        %4171 = vmatmul.mubr.bf16.gmra.mrb[0].mxu0 %v4016
        %v4172 = vpop.f32.mrb[0].mxu0
        %v4173 = vadd.f32 0.0, %v4172
        %v4174 = vpop.f32.mrb[0].mxu0
        %v4175 = vpop.f32.mrb[0].mxu0
        %v4176 = vadd.f32 0.0, %v4175
        %v4177 = vpop.f32.mrb[0].mxu0
        %4178 = vmatprep.mubr.bf16.mxu0 0
        %4179 = vmatmul.mubr.bf16.gmra.mrb[0].mxu0 %v4017
        %v4180 = vpop.f32.mrb[0].mxu0
        %v4181 = vadd.f32 0.0, %v4180
        %v4182 = vpop.f32.mrb[0].mxu0
        %v4183 = vpop.f32.mrb[0].mxu0
        %v4184 = vadd.f32 0.0, %v4183
        %v4185 = vpop.f32.mrb[0].mxu0
        %4186 = vmatprep.mubr.bf16.mxu0 0
        %4187 = vmatmul.mubr.bf16.gmra.mrb[0].mxu0 %v4018
        %v4188 = vpop.f32.mrb[0].mxu0
        %v4189 = vadd.f32 0.0, %v4188
        %v4190 = vpop.f32.mrb[0].mxu0
        %v4191 = vpop.f32.mrb[0].mxu0
        %v4192 = vadd.f32 0.0, %v4191
        %v4193 = vpop.f32.mrb[0].mxu0
        %4194 = vmatprep.mubr.bf16.mxu0 0
        %4195 = vmatmul.mubr.bf16.gmra.mrb[0].mxu0 %v4019
        %v4196 = vpop.f32.mrb[0].mxu0
        %v4197 = vadd.f32 0.0, %v4196
        %v4198 = vpop.f32.mrb[0].mxu0
        %v4199 = vpop.f32.mrb[0].mxu0
        %v4200 = vadd.f32 0.0, %v4199
        %v4201 = vpop.f32.mrb[0].mxu0
        %4202 = vmatprep.mubr.bf16.mxu0 0
        %4203 = vmatmul.mubr.bf16.gmra.mrb[0].mxu0 %v4020
        %v4204 = vpop.f32.mrb[0].mxu0
        %v4205 = vadd.f32 0.0, %v4204
        %v4206 = vpop.f32.mrb[0].mxu0
        %v4207 = vpop.f32.mrb[0].mxu0
        %v4208 = vadd.f32 0.0, %v4207
        %v4209 = vpop.f32.mrb[0].mxu0
        %4210 = vmatprep.mubr.bf16.mxu0 0
        %4211 = vmatmul.mubr.bf16.gmra.mrb[0].mxu0 %v4021
        %v4212 = vpop.f32.mrb[0].mxu0
        %v4213 = vadd.f32 0.0, %v4212
        %v4214 = vpop.f32.mrb[0].mxu0
        %v4215 = vpop.f32.mrb[0].mxu0
        %v4216 = vadd.f32 0.0, %v4215
        %v4217 = vpop.f32.mrb[0].mxu0
        %4218 = vmatprep.mubr.bf16.mxu0 0
        %4219 = vmatmul.mubr.bf16.gmra.mrb[0].mxu0 %v4022
        %v4220 = vpop.f32.mrb[0].mxu0
        %v4221 = vadd.f32 0.0, %v4220
        %v4222 = vpop.f32.mrb[0].mxu0
        %v4223 = vpop.f32.mrb[0].mxu0
        %v4224 = vadd.f32 0.0, %v4223
        %v4225 = vpop.f32.mrb[0].mxu0
        %4226 = vmatprep.mubr.bf16.mxu0 0
        %4227 = vmatmul.mubr.bf16.gmra.mrb[0].mxu0 %v4023
        %v4228 = vpop.f32.mrb[0].mxu0
        %v4229 = vadd.f32 0.0, %v4228
        %v4230 = vpop.f32.mrb[0].mxu0
        %v4231 = vpop.f32.mrb[0].mxu0
        %v4232 = vadd.f32 0.0, %v4231
        %v4233 = vpop.f32.mrb[0].mxu0
        %4234 = vmatprep.mubr.bf16.mxu0 0
        %4235 = vmatmul.mubr.bf16.gmra.mrb[0].mxu0 %v4024
        %v4236 = vpop.f32.mrb[0].mxu0
        %v4237 = vadd.f32 0.0, %v4236
        %v4238 = vpop.f32.mrb[0].mxu0
        %v4239 = vpop.f32.mrb[0].mxu0
        %v4240 = vadd.f32 0.0, %v4239
        %v4241 = vpop.f32.mrb[0].mxu0
        %4242 = vmatprep.mubr.bf16.mxu0 0
        %4243 = vmatmul.mubr.bf16.gmra.mrb[0].mxu0 %v4025
        %v4244 = vpop.f32.mrb[0].mxu0
        %v4245 = vadd.f32 0.0, %v4244
        %v4246 = vpop.f32.mrb[0].mxu0
        %v4247 = vpop.f32.mrb[0].mxu0
        %v4248 = vadd.f32 0.0, %v4247
        %v4249 = vpop.f32.mrb[0].mxu0
        %4250 = vdwg.mxu0
        %v4251 = vadd.f32 %v3497, %v4125
        %v4252 = vadd.f32 %v3498, %v4128
        %v4253 = vadd.f32 %v3499, %v4133
        %v4254 = vadd.f32 %v3500, %v4136
        %v4255 = vadd.f32 %v3501, %v4141
        %v4256 = vadd.f32 %v3502, %v4144
        %v4257 = vadd.f32 %v3503, %v4149
        %v4258 = vadd.f32 %v3504, %v4152
        %v4259 = vadd.f32 %v3505, %v4157
        %v4260 = vadd.f32 %v3506, %v4160
        %v4261 = vadd.f32 %v3507, %v4165
        %v4262 = vadd.f32 %v3508, %v4168
        %v4263 = vadd.f32 %v3509, %v4173
        %v4264 = vadd.f32 %v3510, %v4176
        %v4265 = vadd.f32 %v3511, %v4181
        %v4266 = vadd.f32 %v3512, %v4184
        %v4267 = vadd.f32 %v3513, %v4189
        %v4268 = vadd.f32 %v3514, %v4192
        %v4269 = vadd.f32 %v3515, %v4197
        %v4270 = vadd.f32 %v3516, %v4200
        %v4271 = vadd.f32 %v3517, %v4205
        %v4272 = vadd.f32 %v3518, %v4208
        %v4273 = vadd.f32 %v3519, %v4213
        %v4274 = vadd.f32 %v3520, %v4216
        %v4275 = vadd.f32 %v3521, %v4221
        %v4276 = vadd.f32 %v3522, %v4224
        %v4277 = vadd.f32 %v3523, %v4229
        %v4278 = vadd.f32 %v3524, %v4232
        %v4279 = vadd.f32 %v3525, %v4237
        %v4280 = vadd.f32 %v3526, %v4240
        %v4281 = vadd.f32 %v3527, %v4245
        %v4282 = vadd.f32 %v3528, %v4248
        %v4283 = vld [vmem:[%s3142] sm:$0xe]
        %v4284 = vld [vmem:[%s3142 + $0xc] sm:$0xe]
        %v4285 = vld [vmem:[%s3142 + $0x18] sm:$0xe]
        %v4286 = vld [vmem:[%s3142 + $0x24] sm:$0xe]
        %v4287 = vld [vmem:[%s3142 + $0x30] sm:$0xe]
        %v4288 = vld [vmem:[%s3142 + $0x3c] sm:$0xe]
        %v4289 = vld [vmem:[%s3142 + $0x48] sm:$0xe]
        %v4290 = vld [vmem:[%s3142 + $0x54] sm:$0xe]
        %v4291 = vld [vmem:[%s3142 + $0x60] sm:$0xe]
        %v4292 = vld [vmem:[%s3142 + $0x6c] sm:$0xe]
        %v4293 = vld [vmem:[%s3142 + $0x78] sm:$0xe]
        %v4294 = vld [vmem:[%s3142 + $0x84] sm:$0xe]
        %v4295 = vld [vmem:[%s3142 + $0x90] sm:$0xe]
        %v4296 = vld [vmem:[%s3142 + $0x9c] sm:$0xe]
        %v4297 = vld [vmem:[%s3142 + $0xa8] sm:$0xe]
        %v4298 = vld [vmem:[%s3142 + $0xb4] sm:$0xe]
        %v4347 = vrot.slane %v4283, 5
        %v4348 = vrot.slane %v4347, 4
        %v4349 = vrot.slane %v3530, 5
        %v4350 = vsel %vm2707, %v4348, %v4349
        %v4351 = vrot.slane %v4349, 4
        %v4352 = vrot.slane %v3531, 5
        %v4353 = vsel %vm2707, %v4351, %v4352
        %v4354 = vrot.slane %v4284, 5
        %v4355 = vrot.slane %v4354, 4
        %v4356 = vrot.slane %v3533, 5
        %v4357 = vsel %vm2707, %v4355, %v4356
        %v4358 = vrot.slane %v4356, 4
        %v4359 = vrot.slane %v3534, 5
        %v4360 = vsel %vm2707, %v4358, %v4359
        %v4361 = vrot.slane %v4285, 5
        %v4362 = vrot.slane %v4361, 4
        %v4363 = vrot.slane %v3536, 5
        %v4364 = vsel %vm2707, %v4362, %v4363
        %v4365 = vrot.slane %v4363, 4
        %v4366 = vrot.slane %v3537, 5
        %v4367 = vsel %vm2707, %v4365, %v4366
        %v4368 = vrot.slane %v4286, 5
        %v4369 = vrot.slane %v4368, 4
        %v4370 = vrot.slane %v3539, 5
        %v4371 = vsel %vm2707, %v4369, %v4370
        %v4372 = vrot.slane %v4370, 4
        %v4373 = vrot.slane %v3540, 5
        %v4374 = vsel %vm2707, %v4372, %v4373
        %v4375 = vrot.slane %v4287, 5
        %v4376 = vrot.slane %v4375, 4
        %v4377 = vrot.slane %v3542, 5
        %v4378 = vsel %vm2707, %v4376, %v4377
        %v4379 = vrot.slane %v4377, 4
        %v4380 = vrot.slane %v3543, 5
        %v4381 = vsel %vm2707, %v4379, %v4380
        %v4382 = vrot.slane %v4288, 5
        %v4383 = vrot.slane %v4382, 4
        %v4384 = vrot.slane %v3545, 5
        %v4385 = vsel %vm2707, %v4383, %v4384
        %v4386 = vrot.slane %v4384, 4
        %v4387 = vrot.slane %v3546, 5
        %v4388 = vsel %vm2707, %v4386, %v4387
        %v4389 = vrot.slane %v4289, 5
        %v4390 = vrot.slane %v4389, 4
        %v4391 = vrot.slane %v3548, 5
        %v4392 = vsel %vm2707, %v4390, %v4391
        %v4393 = vrot.slane %v4391, 4
        %v4394 = vrot.slane %v3549, 5
        %v4395 = vsel %vm2707, %v4393, %v4394
        %v4396 = vrot.slane %v4290, 5
        %v4397 = vrot.slane %v4396, 4
        %v4398 = vrot.slane %v3551, 5
        %v4399 = vsel %vm2707, %v4397, %v4398
        %v4400 = vrot.slane %v4398, 4
        %v4401 = vrot.slane %v3552, 5
        %v4402 = vsel %vm2707, %v4400, %v4401
        %v4403 = vrot.slane %v4291, 5
        %v4404 = vrot.slane %v4403, 4
        %v4405 = vrot.slane %v3554, 5
        %v4406 = vsel %vm2707, %v4404, %v4405
        %v4407 = vrot.slane %v4405, 4
        %v4408 = vrot.slane %v3555, 5
        %v4409 = vsel %vm2707, %v4407, %v4408
        %v4410 = vrot.slane %v4292, 5
        %v4411 = vrot.slane %v4410, 4
        %v4412 = vrot.slane %v3557, 5
        %v4413 = vsel %vm2707, %v4411, %v4412
        %v4414 = vrot.slane %v4412, 4
        %v4415 = vrot.slane %v3558, 5
        %v4416 = vsel %vm2707, %v4414, %v4415
        %v4417 = vrot.slane %v4293, 5
        %v4418 = vrot.slane %v4417, 4
        %v4419 = vrot.slane %v3560, 5
        %v4420 = vsel %vm2707, %v4418, %v4419
        %v4421 = vrot.slane %v4419, 4
        %v4422 = vrot.slane %v3561, 5
        %v4423 = vsel %vm2707, %v4421, %v4422
        %v4424 = vrot.slane %v4294, 5
        %v4425 = vrot.slane %v4424, 4
        %v4426 = vrot.slane %v3563, 5
        %v4427 = vsel %vm2707, %v4425, %v4426
        %v4428 = vrot.slane %v4426, 4
        %v4429 = vrot.slane %v3564, 5
        %v4430 = vsel %vm2707, %v4428, %v4429
        %v4431 = vrot.slane %v4295, 5
        %v4432 = vrot.slane %v4431, 4
        %v4433 = vrot.slane %v3566, 5
        %v4434 = vsel %vm2707, %v4432, %v4433
        %v4435 = vrot.slane %v4433, 4
        %v4436 = vrot.slane %v3567, 5
        %v4437 = vsel %vm2707, %v4435, %v4436
        %v4438 = vrot.slane %v4296, 5
        %v4439 = vrot.slane %v4438, 4
        %v4440 = vrot.slane %v3569, 5
        %v4441 = vsel %vm2707, %v4439, %v4440
        %v4442 = vrot.slane %v4440, 4
        %v4443 = vrot.slane %v3570, 5
        %v4444 = vsel %vm2707, %v4442, %v4443
        %v4445 = vrot.slane %v4297, 5
        %v4446 = vrot.slane %v4445, 4
        %v4447 = vrot.slane %v3572, 5
        %v4448 = vsel %vm2707, %v4446, %v4447
        %v4449 = vrot.slane %v4447, 4
        %v4450 = vrot.slane %v3573, 5
        %v4451 = vsel %vm2707, %v4449, %v4450
        %v4452 = vrot.slane %v4298, 5
        %v4453 = vrot.slane %v4452, 4
        %v4454 = vrot.slane %v3575, 5
        %v4455 = vsel %vm2707, %v4453, %v4454
        %v4456 = vrot.slane %v4454, 4
        %v4457 = vrot.slane %v3576, 5
        %v4458 = vsel %vm2707, %v4456, %v4457
        %s4459 = scalar_lea.vmem [#allocation8], 320
        %v4460 = vld [vmem:[%s4459] sm:$0xf]
        %v4461 = vld [vmem:[%s4459 + $0x4] sm:$0xf]
        %v4462 = vld [vmem:[%s4459 + $0x8] sm:$0xf]
        %v4463 = vld [vmem:[%s4459 + $0xc] sm:$0xf]
        %v4464 = vld [vmem:[%s4459 + $0x10] sm:$0xf]
        %v4465 = vld [vmem:[%s4459 + $0x14] sm:$0xf]
        %v4466 = vld [vmem:[%s4459 + $0x18] sm:$0xf]
        %v4467 = vld [vmem:[%s4459 + $0x1c] sm:$0xf]
        %v4468 = vld [vmem:[%s4459 + $0x20] sm:$0xf]
        %v4469 = vld [vmem:[%s4459 + $0x24] sm:$0xf]
        %v4470 = vld [vmem:[%s4459 + $0x28] sm:$0xf]
        %v4471 = vld [vmem:[%s4459 + $0x2c] sm:$0xf]
        %v4472 = vld [vmem:[%s4459 + $0x30] sm:$0xf]
        %v4473 = vld [vmem:[%s4459 + $0x34] sm:$0xf]
        %v4474 = vld [vmem:[%s4459 + $0x38] sm:$0xf]
        %v4475 = vld [vmem:[%s4459 + $0x3c] sm:$0xf]
        %v4476 = vunpack.c.l.b16 %v4350
        %v4477 = vunpack.c.l.b16 %v4353
        %v4478 = vunpack.c.l.b16 %v4357
        %v4479 = vunpack.c.l.b16 %v4360
        %v4480 = vunpack.c.l.b16 %v4364
        %v4481 = vunpack.c.l.b16 %v4367
        %v4482 = vunpack.c.l.b16 %v4371
        %v4483 = vunpack.c.l.b16 %v4374
        %v4484 = vunpack.c.l.b16 %v4378
        %v4485 = vunpack.c.l.b16 %v4381
        %v4486 = vunpack.c.l.b16 %v4385
        %v4487 = vunpack.c.l.b16 %v4388
        %v4488 = vunpack.c.l.b16 %v4392
        %v4489 = vunpack.c.l.b16 %v4395
        %v4490 = vunpack.c.l.b16 %v4399
        %v4491 = vunpack.c.l.b16 %v4402
        %v4492 = vunpack.c.l.b16 %v4406
        %v4493 = vunpack.c.l.b16 %v4409
        %v4494 = vunpack.c.l.b16 %v4413
        %v4495 = vunpack.c.l.b16 %v4416
        %v4496 = vunpack.c.l.b16 %v4420
        %v4497 = vunpack.c.l.b16 %v4423
        %v4498 = vunpack.c.l.b16 %v4427
        %v4499 = vunpack.c.l.b16 %v4430
        %v4500 = vunpack.c.l.b16 %v4434
        %v4501 = vunpack.c.l.b16 %v4437
        %v4502 = vunpack.c.l.b16 %v4441
        %v4503 = vunpack.c.l.b16 %v4444
        %v4504 = vunpack.c.l.b16 %v4448
        %v4505 = vunpack.c.l.b16 %v4451
        %v4506 = vunpack.c.l.b16 %v4455
        %v4507 = vunpack.c.l.b16 %v4458
        %v4508 = vpack.c.b16 %v4477, %v4476
        %v4509 = vpack.c.b16 %v4479, %v4478
        %v4510 = vpack.c.b16 %v4481, %v4480
        %v4511 = vpack.c.b16 %v4483, %v4482
        %v4512 = vpack.c.b16 %v4485, %v4484
        %v4513 = vpack.c.b16 %v4487, %v4486
        %v4514 = vpack.c.b16 %v4489, %v4488
        %v4515 = vpack.c.b16 %v4491, %v4490
        %v4516 = vpack.c.b16 %v4493, %v4492
        %v4517 = vpack.c.b16 %v4495, %v4494
        %v4518 = vpack.c.b16 %v4497, %v4496
        %v4519 = vpack.c.b16 %v4499, %v4498
        %v4520 = vpack.c.b16 %v4501, %v4500
        %v4521 = vpack.c.b16 %v4503, %v4502
        %v4522 = vpack.c.b16 %v4505, %v4504
        %v4523 = vpack.c.b16 %v4507, %v4506
        %v4556 = vunpack.c.l.b16 %v4460
        %v4557 = vunpack.c.l.b16 %v4461
        %v4558 = vunpack.c.l.b16 %v4462
        %v4559 = vunpack.c.l.b16 %v4463
        %v4560 = vunpack.c.l.b16 %v4464
        %v4561 = vunpack.c.l.b16 %v4465
        %v4562 = vunpack.c.l.b16 %v4466
        %v4563 = vunpack.c.l.b16 %v4467
        %v4564 = vunpack.c.l.b16 %v4468
        %v4565 = vunpack.c.l.b16 %v4469
        %v4566 = vunpack.c.l.b16 %v4470
        %v4567 = vunpack.c.l.b16 %v4471
        %v4568 = vunpack.c.l.b16 %v4472
        %v4569 = vunpack.c.l.b16 %v4473
        %v4570 = vunpack.c.l.b16 %v4474
        %v4571 = vunpack.c.l.b16 %v4475
        %v4572 = vpack.c.b16 %v4557, %v4556
        %v4573 = vpack.c.b16 %v4559, %v4558
        %v4574 = vpack.c.b16 %v4561, %v4560
        %v4575 = vpack.c.b16 %v4563, %v4562
        %v4576 = vpack.c.b16 %v4565, %v4564
        %v4577 = vpack.c.b16 %v4567, %v4566
        %v4578 = vpack.c.b16 %v4569, %v4568
        %v4579 = vpack.c.b16 %v4571, %v4570
        %4588 = vmatprep.subr.bf16.mxu0 0
        %4589 = vmatpush1.bf16.msra.mxu0 %v4572
        %4590 = vmatprep.subr.bf16.mxu0 0
        %4591 = vmatpush1.bf16.msra.mxu0 %v4573
        %4592 = vmatprep.subr.bf16.mxu0 0
        %4593 = vmatpush1.bf16.msra.mxu0 %v4574
        %4594 = vmatprep.subr.bf16.mxu0 0
        %4595 = vmatpush1.bf16.msra.mxu0 %v4575
        %4596 = vmatprep.subr.bf16.mxu0 0
        %4597 = vmatpush1.bf16.msra.mxu0 %v4576
        %4598 = vmatprep.subr.bf16.mxu0 0
        %4599 = vmatpush1.bf16.msra.mxu0 %v4577
        %4600 = vmatprep.subr.bf16.mxu0 0
        %4601 = vmatpush1.bf16.msra.mxu0 %v4578
        %4602 = vmatprep.subr.bf16.mxu0 0
        %4603 = vmatpush1.bf16.msra.mxu0 %v4579
        %4604 = vmatprep.subr.bf16.mxu0 0
        %4605 = vmatpush1.bf16.msra.mxu0 0
        %4606 = vmatprep.subr.bf16.mxu0 0
        %4607 = vmatpush1.bf16.msra.mxu0 0
        %4608 = vmatprep.subr.bf16.mxu0 0
        %4609 = vmatpush1.bf16.msra.mxu0 0
        %4610 = vmatprep.subr.bf16.mxu0 0
        %4611 = vmatpush1.bf16.msra.mxu0 0
        %4612 = vmatprep.subr.bf16.mxu0 0
        %4613 = vmatpush1.bf16.msra.mxu0 0
        %4614 = vmatprep.subr.bf16.mxu0 0
        %4615 = vmatpush1.bf16.msra.mxu0 0
        %4616 = vmatprep.subr.bf16.mxu0 0
        %4617 = vmatpush1.bf16.msra.mxu0 0
        %4618 = vmatprep.subr.bf16.mxu0 0
        %4619 = vmatpush1.bf16.msra.mxu0 0
        %4620 = vmatprep.mubr.bf16.mxu0 0
        %4621 = vmatmul.mubr.bf16.gmra.mrb[0].mxu0 %v4508
        %v4622 = vpop.f32.mrb[0].mxu0
        %v4623 = vadd.f32 0.0, %v4622
        %v4624 = vpop.f32.mrb[0].mxu0
        %v4625 = vpop.f32.mrb[0].mxu0
        %v4626 = vadd.f32 0.0, %v4625
        %v4627 = vpop.f32.mrb[0].mxu0
        %4628 = vmatprep.mubr.bf16.mxu0 0
        %4629 = vmatmul.mubr.bf16.gmra.mrb[0].mxu0 %v4509
        %v4630 = vpop.f32.mrb[0].mxu0
        %v4631 = vadd.f32 0.0, %v4630
        %v4632 = vpop.f32.mrb[0].mxu0
        %v4633 = vpop.f32.mrb[0].mxu0
        %v4634 = vadd.f32 0.0, %v4633
        %v4635 = vpop.f32.mrb[0].mxu0
        %4636 = vmatprep.mubr.bf16.mxu0 0
        %4637 = vmatmul.mubr.bf16.gmra.mrb[0].mxu0 %v4510
        %v4638 = vpop.f32.mrb[0].mxu0
        %v4639 = vadd.f32 0.0, %v4638
        %v4640 = vpop.f32.mrb[0].mxu0
        %v4641 = vpop.f32.mrb[0].mxu0
        %v4642 = vadd.f32 0.0, %v4641
        %v4643 = vpop.f32.mrb[0].mxu0
        %4644 = vmatprep.mubr.bf16.mxu0 0
        %4645 = vmatmul.mubr.bf16.gmra.mrb[0].mxu0 %v4511
        %v4646 = vpop.f32.mrb[0].mxu0
        %v4647 = vadd.f32 0.0, %v4646
        %v4648 = vpop.f32.mrb[0].mxu0
        %v4649 = vpop.f32.mrb[0].mxu0
        %v4650 = vadd.f32 0.0, %v4649
        %v4651 = vpop.f32.mrb[0].mxu0
        %4652 = vmatprep.mubr.bf16.mxu0 0
        %4653 = vmatmul.mubr.bf16.gmra.mrb[0].mxu0 %v4512
        %v4654 = vpop.f32.mrb[0].mxu0
        %v4655 = vadd.f32 0.0, %v4654
        %v4656 = vpop.f32.mrb[0].mxu0
        %v4657 = vpop.f32.mrb[0].mxu0
        %v4658 = vadd.f32 0.0, %v4657
        %v4659 = vpop.f32.mrb[0].mxu0
        %4660 = vmatprep.mubr.bf16.mxu0 0
        %4661 = vmatmul.mubr.bf16.gmra.mrb[0].mxu0 %v4513
        %v4662 = vpop.f32.mrb[0].mxu0
        %v4663 = vadd.f32 0.0, %v4662
        %v4664 = vpop.f32.mrb[0].mxu0
        %v4665 = vpop.f32.mrb[0].mxu0
        %v4666 = vadd.f32 0.0, %v4665
        %v4667 = vpop.f32.mrb[0].mxu0
        %4668 = vmatprep.mubr.bf16.mxu0 0
        %4669 = vmatmul.mubr.bf16.gmra.mrb[0].mxu0 %v4514
        %v4670 = vpop.f32.mrb[0].mxu0
        %v4671 = vadd.f32 0.0, %v4670
        %v4672 = vpop.f32.mrb[0].mxu0
        %v4673 = vpop.f32.mrb[0].mxu0
        %v4674 = vadd.f32 0.0, %v4673
        %v4675 = vpop.f32.mrb[0].mxu0
        %4676 = vmatprep.mubr.bf16.mxu0 0
        %4677 = vmatmul.mubr.bf16.gmra.mrb[0].mxu0 %v4515
        %v4678 = vpop.f32.mrb[0].mxu0
        %v4679 = vadd.f32 0.0, %v4678
        %v4680 = vpop.f32.mrb[0].mxu0
        %v4681 = vpop.f32.mrb[0].mxu0
        %v4682 = vadd.f32 0.0, %v4681
        %v4683 = vpop.f32.mrb[0].mxu0
        %4684 = vmatprep.mubr.bf16.mxu0 0
        %4685 = vmatmul.mubr.bf16.gmra.mrb[0].mxu0 %v4516
        %v4686 = vpop.f32.mrb[0].mxu0
        %v4687 = vadd.f32 0.0, %v4686
        %v4688 = vpop.f32.mrb[0].mxu0
        %v4689 = vpop.f32.mrb[0].mxu0
        %v4690 = vadd.f32 0.0, %v4689
        %v4691 = vpop.f32.mrb[0].mxu0
        %4692 = vmatprep.mubr.bf16.mxu0 0
        %4693 = vmatmul.mubr.bf16.gmra.mrb[0].mxu0 %v4517
        %v4694 = vpop.f32.mrb[0].mxu0
        %v4695 = vadd.f32 0.0, %v4694
        %v4696 = vpop.f32.mrb[0].mxu0
        %v4697 = vpop.f32.mrb[0].mxu0
        %v4698 = vadd.f32 0.0, %v4697
        %v4699 = vpop.f32.mrb[0].mxu0
        %4700 = vmatprep.mubr.bf16.mxu0 0
        %4701 = vmatmul.mubr.bf16.gmra.mrb[0].mxu0 %v4518
        %v4702 = vpop.f32.mrb[0].mxu0
        %v4703 = vadd.f32 0.0, %v4702
        %v4704 = vpop.f32.mrb[0].mxu0
        %v4705 = vpop.f32.mrb[0].mxu0
        %v4706 = vadd.f32 0.0, %v4705
        %v4707 = vpop.f32.mrb[0].mxu0
        %4708 = vmatprep.mubr.bf16.mxu0 0
        %4709 = vmatmul.mubr.bf16.gmra.mrb[0].mxu0 %v4519
        %v4710 = vpop.f32.mrb[0].mxu0
        %v4711 = vadd.f32 0.0, %v4710
        %v4712 = vpop.f32.mrb[0].mxu0
        %v4713 = vpop.f32.mrb[0].mxu0
        %v4714 = vadd.f32 0.0, %v4713
        %v4715 = vpop.f32.mrb[0].mxu0
        %4716 = vmatprep.mubr.bf16.mxu0 0
        %4717 = vmatmul.mubr.bf16.gmra.mrb[0].mxu0 %v4520
        %v4718 = vpop.f32.mrb[0].mxu0
        %v4719 = vadd.f32 0.0, %v4718
        %v4720 = vpop.f32.mrb[0].mxu0
        %v4721 = vpop.f32.mrb[0].mxu0
        %v4722 = vadd.f32 0.0, %v4721
        %v4723 = vpop.f32.mrb[0].mxu0
        %4724 = vmatprep.mubr.bf16.mxu0 0
        %4725 = vmatmul.mubr.bf16.gmra.mrb[0].mxu0 %v4521
        %v4726 = vpop.f32.mrb[0].mxu0
        %v4727 = vadd.f32 0.0, %v4726
        %v4728 = vpop.f32.mrb[0].mxu0
        %v4729 = vpop.f32.mrb[0].mxu0
        %v4730 = vadd.f32 0.0, %v4729
        %v4731 = vpop.f32.mrb[0].mxu0
        %4732 = vmatprep.mubr.bf16.mxu0 0
        %4733 = vmatmul.mubr.bf16.gmra.mrb[0].mxu0 %v4522
        %v4734 = vpop.f32.mrb[0].mxu0
        %v4735 = vadd.f32 0.0, %v4734
        %v4736 = vpop.f32.mrb[0].mxu0
        %v4737 = vpop.f32.mrb[0].mxu0
        %v4738 = vadd.f32 0.0, %v4737
        %v4739 = vpop.f32.mrb[0].mxu0
        %4740 = vmatprep.mubr.bf16.mxu0 0
        %4741 = vmatmul.mubr.bf16.gmra.mrb[0].mxu0 %v4523
        %v4742 = vpop.f32.mrb[0].mxu0
        %v4743 = vadd.f32 0.0, %v4742
        %v4744 = vpop.f32.mrb[0].mxu0
        %v4745 = vpop.f32.mrb[0].mxu0
        %v4746 = vadd.f32 0.0, %v4745
        %v4747 = vpop.f32.mrb[0].mxu0
        %4748 = vdwg.mxu0
        %v4749 = vadd.f32 %v4251, %v4623
        %v4750 = vadd.f32 %v4252, %v4626
        %v4751 = vadd.f32 %v4253, %v4631
        %v4752 = vadd.f32 %v4254, %v4634
        %v4753 = vadd.f32 %v4255, %v4639
        %v4754 = vadd.f32 %v4256, %v4642
        %v4755 = vadd.f32 %v4257, %v4647
        %v4756 = vadd.f32 %v4258, %v4650
        %v4757 = vadd.f32 %v4259, %v4655
        %v4758 = vadd.f32 %v4260, %v4658
        %v4759 = vadd.f32 %v4261, %v4663
        %v4760 = vadd.f32 %v4262, %v4666
        %v4761 = vadd.f32 %v4263, %v4671
        %v4762 = vadd.f32 %v4264, %v4674
        %v4763 = vadd.f32 %v4265, %v4679
        %v4764 = vadd.f32 %v4266, %v4682
        %v4765 = vadd.f32 %v4267, %v4687
        %v4766 = vadd.f32 %v4268, %v4690
        %v4767 = vadd.f32 %v4269, %v4695
        %v4768 = vadd.f32 %v4270, %v4698
        %v4769 = vadd.f32 %v4271, %v4703
        %v4770 = vadd.f32 %v4272, %v4706
        %v4771 = vadd.f32 %v4273, %v4711
        %v4772 = vadd.f32 %v4274, %v4714
        %v4773 = vadd.f32 %v4275, %v4719
        %v4774 = vadd.f32 %v4276, %v4722
        %v4775 = vadd.f32 %v4277, %v4727
        %v4776 = vadd.f32 %v4278, %v4730
        %v4777 = vadd.f32 %v4279, %v4735
        %v4778 = vadd.f32 %v4280, %v4738
        %v4779 = vadd.f32 %v4281, %v4743
        %v4780 = vadd.f32 %v4282, %v4746
        %s4781 = scalar_lea.vmem [#allocation2], 24
        %v4782 = vld [vmem:[%s4781] sm:$0xf]
        %v4783 = vld [vmem:[%s4781 + $0x4] sm:$0xf]
        %v4784 = vld [vmem:[%s4781 + $0xc] sm:$0xf]
        %v4785 = vld [vmem:[%s4781 + $0x10] sm:$0xf]
        %v4786 = vld [vmem:[%s4781 + $0x18] sm:$0xf]
        %v4787 = vld [vmem:[%s4781 + $0x1c] sm:$0xf]
        %v4788 = vld [vmem:[%s4781 + $0x24] sm:$0xf]
        %v4789 = vld [vmem:[%s4781 + $0x28] sm:$0xf]
        %v4790 = vld [vmem:[%s4781 + $0x30] sm:$0xf]
        %v4791 = vld [vmem:[%s4781 + $0x34] sm:$0xf]
        %v4792 = vld [vmem:[%s4781 + $0x3c] sm:$0xf]
        %v4793 = vld [vmem:[%s4781 + $0x40] sm:$0xf]
        %v4794 = vld [vmem:[%s4781 + $0x48] sm:$0xf]
        %v4795 = vld [vmem:[%s4781 + $0x4c] sm:$0xf]
        %v4796 = vld [vmem:[%s4781 + $0x54] sm:$0xf]
        %v4797 = vld [vmem:[%s4781 + $0x58] sm:$0xf]
        %v4798 = vld [vmem:[%s4781 + $0x60] sm:$0xf]
        %v4799 = vld [vmem:[%s4781 + $0x64] sm:$0xf]
        %v4800 = vld [vmem:[%s4781 + $0x6c] sm:$0xf]
        %v4801 = vld [vmem:[%s4781 + $0x70] sm:$0xf]
        %v4802 = vld [vmem:[%s4781 + $0x78] sm:$0xf]
        %v4803 = vld [vmem:[%s4781 + $0x7c] sm:$0xf]
        %v4804 = vld [vmem:[%s4781 + $0x84] sm:$0xf]
        %v4805 = vld [vmem:[%s4781 + $0x88] sm:$0xf]
        %v4806 = vld [vmem:[%s4781 + $0x90] sm:$0xf]
        %v4807 = vld [vmem:[%s4781 + $0x94] sm:$0xf]
        %v4808 = vld [vmem:[%s4781 + $0x9c] sm:$0xf]
        %v4809 = vld [vmem:[%s4781 + $0xa0] sm:$0xf]
        %v4810 = vld [vmem:[%s4781 + $0xa8] sm:$0xf]
        %v4811 = vld [vmem:[%s4781 + $0xac] sm:$0xf]
        %v4812 = vld [vmem:[%s4781 + $0xb4] sm:$0xf]
        %v4813 = vld [vmem:[%s4781 + $0xb8] sm:$0xf]
        %s4814 = scalar_lea.vmem [#allocation8], 384
        %v4815 = vld [vmem:[%s4814] sm:$0xf]
        %v4816 = vld [vmem:[%s4814 + $0x4] sm:$0xf]
        %v4817 = vld [vmem:[%s4814 + $0x8] sm:$0xf]
        %v4818 = vld [vmem:[%s4814 + $0xc] sm:$0xf]
        %v4819 = vld [vmem:[%s4814 + $0x10] sm:$0xf]
        %v4820 = vld [vmem:[%s4814 + $0x14] sm:$0xf]
        %v4821 = vld [vmem:[%s4814 + $0x18] sm:$0xf]
        %v4822 = vld [vmem:[%s4814 + $0x1c] sm:$0xf]
        %v4823 = vld [vmem:[%s4814 + $0x20] sm:$0xf]
        %v4824 = vld [vmem:[%s4814 + $0x24] sm:$0xf]
        %v4825 = vld [vmem:[%s4814 + $0x28] sm:$0xf]
        %v4826 = vld [vmem:[%s4814 + $0x2c] sm:$0xf]
        %v4827 = vld [vmem:[%s4814 + $0x30] sm:$0xf]
        %v4828 = vld [vmem:[%s4814 + $0x34] sm:$0xf]
        %v4829 = vld [vmem:[%s4814 + $0x38] sm:$0xf]
        %v4830 = vld [vmem:[%s4814 + $0x3c] sm:$0xf]
        %v4863 = vunpack.c.l.b16 %v4782
        %v4864 = vunpack.c.l.b16 %v4783
        %v4865 = vunpack.c.l.b16 %v4784
        %v4866 = vunpack.c.l.b16 %v4785
        %v4867 = vunpack.c.l.b16 %v4786
        %v4868 = vunpack.c.l.b16 %v4787
        %v4869 = vunpack.c.l.b16 %v4788
        %v4870 = vunpack.c.l.b16 %v4789
        %v4871 = vunpack.c.l.b16 %v4790
        %v4872 = vunpack.c.l.b16 %v4791
        %v4873 = vunpack.c.l.b16 %v4792
        %v4874 = vunpack.c.l.b16 %v4793
        %v4875 = vunpack.c.l.b16 %v4794
        %v4876 = vunpack.c.l.b16 %v4795
        %v4877 = vunpack.c.l.b16 %v4796
        %v4878 = vunpack.c.l.b16 %v4797
        %v4879 = vunpack.c.l.b16 %v4798
        %v4880 = vunpack.c.l.b16 %v4799
        %v4881 = vunpack.c.l.b16 %v4800
        %v4882 = vunpack.c.l.b16 %v4801
        %v4883 = vunpack.c.l.b16 %v4802
        %v4884 = vunpack.c.l.b16 %v4803
        %v4885 = vunpack.c.l.b16 %v4804
        %v4886 = vunpack.c.l.b16 %v4805
        %v4887 = vunpack.c.l.b16 %v4806
        %v4888 = vunpack.c.l.b16 %v4807
        %v4889 = vunpack.c.l.b16 %v4808
        %v4890 = vunpack.c.l.b16 %v4809
        %v4891 = vunpack.c.l.b16 %v4810
        %v4892 = vunpack.c.l.b16 %v4811
        %v4893 = vunpack.c.l.b16 %v4812
        %v4894 = vunpack.c.l.b16 %v4813
        %v4895 = vpack.c.b16 %v4864, %v4863
        %v4896 = vpack.c.b16 %v4866, %v4865
        %v4897 = vpack.c.b16 %v4868, %v4867
        %v4898 = vpack.c.b16 %v4870, %v4869
        %v4899 = vpack.c.b16 %v4872, %v4871
        %v4900 = vpack.c.b16 %v4874, %v4873
        %v4901 = vpack.c.b16 %v4876, %v4875
        %v4902 = vpack.c.b16 %v4878, %v4877
        %v4903 = vpack.c.b16 %v4880, %v4879
        %v4904 = vpack.c.b16 %v4882, %v4881
        %v4905 = vpack.c.b16 %v4884, %v4883
        %v4906 = vpack.c.b16 %v4886, %v4885
        %v4907 = vpack.c.b16 %v4888, %v4887
        %v4908 = vpack.c.b16 %v4890, %v4889
        %v4909 = vpack.c.b16 %v4892, %v4891
        %v4910 = vpack.c.b16 %v4894, %v4893
        %v4943 = vunpack.c.l.b16 %v4815
        %v4944 = vunpack.c.l.b16 %v4816
        %v4945 = vunpack.c.l.b16 %v4817
        %v4946 = vunpack.c.l.b16 %v4818
        %v4947 = vunpack.c.l.b16 %v4819
        %v4948 = vunpack.c.l.b16 %v4820
        %v4949 = vunpack.c.l.b16 %v4821
        %v4950 = vunpack.c.l.b16 %v4822
        %v4951 = vunpack.c.l.b16 %v4823
        %v4952 = vunpack.c.l.b16 %v4824
        %v4953 = vunpack.c.l.b16 %v4825
        %v4954 = vunpack.c.l.b16 %v4826
        %v4955 = vunpack.c.l.b16 %v4827
        %v4956 = vunpack.c.l.b16 %v4828
        %v4957 = vunpack.c.l.b16 %v4829
        %v4958 = vunpack.c.l.b16 %v4830
        %v4959 = vpack.c.b16 %v4944, %v4943
        %v4960 = vpack.c.b16 %v4946, %v4945
        %v4961 = vpack.c.b16 %v4948, %v4947
        %v4962 = vpack.c.b16 %v4950, %v4949
        %v4963 = vpack.c.b16 %v4952, %v4951
        %v4964 = vpack.c.b16 %v4954, %v4953
        %v4965 = vpack.c.b16 %v4956, %v4955
        %v4966 = vpack.c.b16 %v4958, %v4957
        %4975 = vmatprep.subr.bf16.mxu0 0
        %4976 = vmatpush1.bf16.msra.mxu0 %v4959
        %4977 = vmatprep.subr.bf16.mxu0 0
        %4978 = vmatpush1.bf16.msra.mxu0 %v4960
        %4979 = vmatprep.subr.bf16.mxu0 0
        %4980 = vmatpush1.bf16.msra.mxu0 %v4961
        %4981 = vmatprep.subr.bf16.mxu0 0
        %4982 = vmatpush1.bf16.msra.mxu0 %v4962
        %4983 = vmatprep.subr.bf16.mxu0 0
        %4984 = vmatpush1.bf16.msra.mxu0 %v4963
        %4985 = vmatprep.subr.bf16.mxu0 0
        %4986 = vmatpush1.bf16.msra.mxu0 %v4964
        %4987 = vmatprep.subr.bf16.mxu0 0
        %4988 = vmatpush1.bf16.msra.mxu0 %v4965
        %4989 = vmatprep.subr.bf16.mxu0 0
        %4990 = vmatpush1.bf16.msra.mxu0 %v4966
        %4991 = vmatprep.subr.bf16.mxu0 0
        %4992 = vmatpush1.bf16.msra.mxu0 0
        %4993 = vmatprep.subr.bf16.mxu0 0
        %4994 = vmatpush1.bf16.msra.mxu0 0
        %4995 = vmatprep.subr.bf16.mxu0 0
        %4996 = vmatpush1.bf16.msra.mxu0 0
        %4997 = vmatprep.subr.bf16.mxu0 0
        %4998 = vmatpush1.bf16.msra.mxu0 0
        %4999 = vmatprep.subr.bf16.mxu0 0
        %5000 = vmatpush1.bf16.msra.mxu0 0
        %5001 = vmatprep.subr.bf16.mxu0 0
        %5002 = vmatpush1.bf16.msra.mxu0 0
        %5003 = vmatprep.subr.bf16.mxu0 0
        %5004 = vmatpush1.bf16.msra.mxu0 0
        %5005 = vmatprep.subr.bf16.mxu0 0
        %5006 = vmatpush1.bf16.msra.mxu0 0
        %5007 = vmatprep.mubr.bf16.mxu0 0
        %5008 = vmatmul.mubr.bf16.gmra.mrb[0].mxu0 %v4895
        %v5009 = vpop.f32.mrb[0].mxu0
        %v5010 = vadd.f32 0.0, %v5009
        %v5011 = vpop.f32.mrb[0].mxu0
        %v5012 = vpop.f32.mrb[0].mxu0
        %v5013 = vadd.f32 0.0, %v5012
        %v5014 = vpop.f32.mrb[0].mxu0
        %5015 = vmatprep.mubr.bf16.mxu0 0
        %5016 = vmatmul.mubr.bf16.gmra.mrb[0].mxu0 %v4896
        %v5017 = vpop.f32.mrb[0].mxu0
        %v5018 = vadd.f32 0.0, %v5017
        %v5019 = vpop.f32.mrb[0].mxu0
        %v5020 = vpop.f32.mrb[0].mxu0
        %v5021 = vadd.f32 0.0, %v5020
        %v5022 = vpop.f32.mrb[0].mxu0
        %5023 = vmatprep.mubr.bf16.mxu0 0
        %5024 = vmatmul.mubr.bf16.gmra.mrb[0].mxu0 %v4897
        %v5025 = vpop.f32.mrb[0].mxu0
        %v5026 = vadd.f32 0.0, %v5025
        %v5027 = vpop.f32.mrb[0].mxu0
        %v5028 = vpop.f32.mrb[0].mxu0
        %v5029 = vadd.f32 0.0, %v5028
        %v5030 = vpop.f32.mrb[0].mxu0
        %5031 = vmatprep.mubr.bf16.mxu0 0
        %5032 = vmatmul.mubr.bf16.gmra.mrb[0].mxu0 %v4898
        %v5033 = vpop.f32.mrb[0].mxu0
        %v5034 = vadd.f32 0.0, %v5033
        %v5035 = vpop.f32.mrb[0].mxu0
        %v5036 = vpop.f32.mrb[0].mxu0
        %v5037 = vadd.f32 0.0, %v5036
        %v5038 = vpop.f32.mrb[0].mxu0
        %5039 = vmatprep.mubr.bf16.mxu0 0
        %5040 = vmatmul.mubr.bf16.gmra.mrb[0].mxu0 %v4899
        %v5041 = vpop.f32.mrb[0].mxu0
        %v5042 = vadd.f32 0.0, %v5041
        %v5043 = vpop.f32.mrb[0].mxu0
        %v5044 = vpop.f32.mrb[0].mxu0
        %v5045 = vadd.f32 0.0, %v5044
        %v5046 = vpop.f32.mrb[0].mxu0
        %5047 = vmatprep.mubr.bf16.mxu0 0
        %5048 = vmatmul.mubr.bf16.gmra.mrb[0].mxu0 %v4900
        %v5049 = vpop.f32.mrb[0].mxu0
        %v5050 = vadd.f32 0.0, %v5049
        %v5051 = vpop.f32.mrb[0].mxu0
        %v5052 = vpop.f32.mrb[0].mxu0
        %v5053 = vadd.f32 0.0, %v5052
        %v5054 = vpop.f32.mrb[0].mxu0
        %5055 = vmatprep.mubr.bf16.mxu0 0
        %5056 = vmatmul.mubr.bf16.gmra.mrb[0].mxu0 %v4901
        %v5057 = vpop.f32.mrb[0].mxu0
        %v5058 = vadd.f32 0.0, %v5057
        %v5059 = vpop.f32.mrb[0].mxu0
        %v5060 = vpop.f32.mrb[0].mxu0
        %v5061 = vadd.f32 0.0, %v5060
        %v5062 = vpop.f32.mrb[0].mxu0
        %5063 = vmatprep.mubr.bf16.mxu0 0
        %5064 = vmatmul.mubr.bf16.gmra.mrb[0].mxu0 %v4902
        %v5065 = vpop.f32.mrb[0].mxu0
        %v5066 = vadd.f32 0.0, %v5065
        %v5067 = vpop.f32.mrb[0].mxu0
        %v5068 = vpop.f32.mrb[0].mxu0
        %v5069 = vadd.f32 0.0, %v5068
        %v5070 = vpop.f32.mrb[0].mxu0
        %5071 = vmatprep.mubr.bf16.mxu0 0
        %5072 = vmatmul.mubr.bf16.gmra.mrb[0].mxu0 %v4903
        %v5073 = vpop.f32.mrb[0].mxu0
        %v5074 = vadd.f32 0.0, %v5073
        %v5075 = vpop.f32.mrb[0].mxu0
        %v5076 = vpop.f32.mrb[0].mxu0
        %v5077 = vadd.f32 0.0, %v5076
        %v5078 = vpop.f32.mrb[0].mxu0
        %5079 = vmatprep.mubr.bf16.mxu0 0
        %5080 = vmatmul.mubr.bf16.gmra.mrb[0].mxu0 %v4904
        %v5081 = vpop.f32.mrb[0].mxu0
        %v5082 = vadd.f32 0.0, %v5081
        %v5083 = vpop.f32.mrb[0].mxu0
        %v5084 = vpop.f32.mrb[0].mxu0
        %v5085 = vadd.f32 0.0, %v5084
        %v5086 = vpop.f32.mrb[0].mxu0
        %5087 = vmatprep.mubr.bf16.mxu0 0
        %5088 = vmatmul.mubr.bf16.gmra.mrb[0].mxu0 %v4905
        %v5089 = vpop.f32.mrb[0].mxu0
        %v5090 = vadd.f32 0.0, %v5089
        %v5091 = vpop.f32.mrb[0].mxu0
        %v5092 = vpop.f32.mrb[0].mxu0
        %v5093 = vadd.f32 0.0, %v5092
        %v5094 = vpop.f32.mrb[0].mxu0
        %5095 = vmatprep.mubr.bf16.mxu0 0
        %5096 = vmatmul.mubr.bf16.gmra.mrb[0].mxu0 %v4906
        %v5097 = vpop.f32.mrb[0].mxu0
        %v5098 = vadd.f32 0.0, %v5097
        %v5099 = vpop.f32.mrb[0].mxu0
        %v5100 = vpop.f32.mrb[0].mxu0
        %v5101 = vadd.f32 0.0, %v5100
        %v5102 = vpop.f32.mrb[0].mxu0
        %5103 = vmatprep.mubr.bf16.mxu0 0
        %5104 = vmatmul.mubr.bf16.gmra.mrb[0].mxu0 %v4907
        %v5105 = vpop.f32.mrb[0].mxu0
        %v5106 = vadd.f32 0.0, %v5105
        %v5107 = vpop.f32.mrb[0].mxu0
        %v5108 = vpop.f32.mrb[0].mxu0
        %v5109 = vadd.f32 0.0, %v5108
        %v5110 = vpop.f32.mrb[0].mxu0
        %5111 = vmatprep.mubr.bf16.mxu0 0
        %5112 = vmatmul.mubr.bf16.gmra.mrb[0].mxu0 %v4908
        %v5113 = vpop.f32.mrb[0].mxu0
        %v5114 = vadd.f32 0.0, %v5113
        %v5115 = vpop.f32.mrb[0].mxu0
        %v5116 = vpop.f32.mrb[0].mxu0
        %v5117 = vadd.f32 0.0, %v5116
        %v5118 = vpop.f32.mrb[0].mxu0
        %5119 = vmatprep.mubr.bf16.mxu0 0
        %5120 = vmatmul.mubr.bf16.gmra.mrb[0].mxu0 %v4909
        %v5121 = vpop.f32.mrb[0].mxu0
        %v5122 = vadd.f32 0.0, %v5121
        %v5123 = vpop.f32.mrb[0].mxu0
        %v5124 = vpop.f32.mrb[0].mxu0
        %v5125 = vadd.f32 0.0, %v5124
        %v5126 = vpop.f32.mrb[0].mxu0
        %5127 = vmatprep.mubr.bf16.mxu0 0
        %5128 = vmatmul.mubr.bf16.gmra.mrb[0].mxu0 %v4910
        %v5129 = vpop.f32.mrb[0].mxu0
        %v5130 = vadd.f32 0.0, %v5129
        %v5131 = vpop.f32.mrb[0].mxu0
        %v5132 = vpop.f32.mrb[0].mxu0
        %v5133 = vadd.f32 0.0, %v5132
        %v5134 = vpop.f32.mrb[0].mxu0
        %5135 = vdwg.mxu0
        %v5136 = vadd.f32 %v4749, %v5010
        %v5137 = vadd.f32 %v4750, %v5013
        %v5138 = vadd.f32 %v4751, %v5018
        %v5139 = vadd.f32 %v4752, %v5021
        %v5140 = vadd.f32 %v4753, %v5026
        %v5141 = vadd.f32 %v4754, %v5029
        %v5142 = vadd.f32 %v4755, %v5034
        %v5143 = vadd.f32 %v4756, %v5037
        %v5144 = vadd.f32 %v4757, %v5042
        %v5145 = vadd.f32 %v4758, %v5045
        %v5146 = vadd.f32 %v4759, %v5050
        %v5147 = vadd.f32 %v4760, %v5053
        %v5148 = vadd.f32 %v4761, %v5058
        %v5149 = vadd.f32 %v4762, %v5061
        %v5150 = vadd.f32 %v4763, %v5066
        %v5151 = vadd.f32 %v4764, %v5069
        %v5152 = vadd.f32 %v4765, %v5074
        %v5153 = vadd.f32 %v4766, %v5077
        %v5154 = vadd.f32 %v4767, %v5082
        %v5155 = vadd.f32 %v4768, %v5085
        %v5156 = vadd.f32 %v4769, %v5090
        %v5157 = vadd.f32 %v4770, %v5093
        %v5158 = vadd.f32 %v4771, %v5098
        %v5159 = vadd.f32 %v4772, %v5101
        %v5160 = vadd.f32 %v4773, %v5106
        %v5161 = vadd.f32 %v4774, %v5109
        %v5162 = vadd.f32 %v4775, %v5114
        %v5163 = vadd.f32 %v4776, %v5117
        %v5164 = vadd.f32 %v4777, %v5122
        %v5165 = vadd.f32 %v4778, %v5125
        %v5166 = vadd.f32 %v4779, %v5130
        %v5167 = vadd.f32 %v4780, %v5133
        %v5168 = vld [vmem:[%s4781] sm:$0xf]
        %v5169 = vld [vmem:[%s4781 + $0x4] sm:$0xf]
        %v5170 = vld [vmem:[%s4781 + $0x8] sm:$0x1]
        %v5171 = vld [vmem:[%s4781 + $0xc] sm:$0xf]
        %v5172 = vld [vmem:[%s4781 + $0x10] sm:$0xf]
        %v5173 = vld [vmem:[%s4781 + $0x14] sm:$0x1]
        %v5174 = vld [vmem:[%s4781 + $0x18] sm:$0xf]
        %v5175 = vld [vmem:[%s4781 + $0x1c] sm:$0xf]
        %v5176 = vld [vmem:[%s4781 + $0x20] sm:$0x1]
        %v5177 = vld [vmem:[%s4781 + $0x24] sm:$0xf]
        %v5178 = vld [vmem:[%s4781 + $0x28] sm:$0xf]
        %v5179 = vld [vmem:[%s4781 + $0x2c] sm:$0x1]
        %v5180 = vld [vmem:[%s4781 + $0x30] sm:$0xf]
        %v5181 = vld [vmem:[%s4781 + $0x34] sm:$0xf]
        %v5182 = vld [vmem:[%s4781 + $0x38] sm:$0x1]
        %v5183 = vld [vmem:[%s4781 + $0x3c] sm:$0xf]
        %v5184 = vld [vmem:[%s4781 + $0x40] sm:$0xf]
        %v5185 = vld [vmem:[%s4781 + $0x44] sm:$0x1]
        %v5186 = vld [vmem:[%s4781 + $0x48] sm:$0xf]
        %v5187 = vld [vmem:[%s4781 + $0x4c] sm:$0xf]
        %v5188 = vld [vmem:[%s4781 + $0x50] sm:$0x1]
        %v5189 = vld [vmem:[%s4781 + $0x54] sm:$0xf]
        %v5190 = vld [vmem:[%s4781 + $0x58] sm:$0xf]
        %v5191 = vld [vmem:[%s4781 + $0x5c] sm:$0x1]
        %v5192 = vld [vmem:[%s4781 + $0x60] sm:$0xf]
        %v5193 = vld [vmem:[%s4781 + $0x64] sm:$0xf]
        %v5194 = vld [vmem:[%s4781 + $0x68] sm:$0x1]
        %v5195 = vld [vmem:[%s4781 + $0x6c] sm:$0xf]
        %v5196 = vld [vmem:[%s4781 + $0x70] sm:$0xf]
        %v5197 = vld [vmem:[%s4781 + $0x74] sm:$0x1]
        %v5198 = vld [vmem:[%s4781 + $0x78] sm:$0xf]
        %v5199 = vld [vmem:[%s4781 + $0x7c] sm:$0xf]
        %v5200 = vld [vmem:[%s4781 + $0x80] sm:$0x1]
        %v5201 = vld [vmem:[%s4781 + $0x84] sm:$0xf]
        %v5202 = vld [vmem:[%s4781 + $0x88] sm:$0xf]
        %v5203 = vld [vmem:[%s4781 + $0x8c] sm:$0x1]
        %v5204 = vld [vmem:[%s4781 + $0x90] sm:$0xf]
        %v5205 = vld [vmem:[%s4781 + $0x94] sm:$0xf]
        %v5206 = vld [vmem:[%s4781 + $0x98] sm:$0x1]
        %v5207 = vld [vmem:[%s4781 + $0x9c] sm:$0xf]
        %v5208 = vld [vmem:[%s4781 + $0xa0] sm:$0xf]
        %v5209 = vld [vmem:[%s4781 + $0xa4] sm:$0x1]
        %v5210 = vld [vmem:[%s4781 + $0xa8] sm:$0xf]
        %v5211 = vld [vmem:[%s4781 + $0xac] sm:$0xf]
        %v5212 = vld [vmem:[%s4781 + $0xb0] sm:$0x1]
        %v5213 = vld [vmem:[%s4781 + $0xb4] sm:$0xf]
        %v5214 = vld [vmem:[%s4781 + $0xb8] sm:$0xf]
        %v5215 = vld [vmem:[%s4781 + $0xbc] sm:$0x1]
        %v5217 = vshrl.u32 %v5168, 16
        %v5219 = vrot.slane %v5217, 4
        %v5220 = vshll.u32 %v5168, 16
        %v5222 = vrot.slane %v5220, 5
        %v5223 = vor.u32 %v5219, %v5222
        %v5224 = vrot.slane %v5223, 4
        %v5226 = vshll.u32 %v5169, 16
        %v5228 = vrot.slane %v5226, 5
        %v5229 = vsel %vm1677, %v5224, %v5228
        %v5230 = vshrl.u32 %v5169, 16
        %v5232 = vrot.slane %v5230, 4
        %v5233 = vor.u32 %v5232, %v5228
        %v5234 = vrot.slane %v5233, 4
        %v5236 = vshll.u32 %v5170, 16
        %v5238 = vrot.slane %v5236, 5
        %v5239 = vsel %vm1677, %v5234, %v5238
        %v5241 = vshrl.u32 %v5171, 16
        %v5243 = vrot.slane %v5241, 4
        %v5244 = vshll.u32 %v5171, 16
        %v5246 = vrot.slane %v5244, 5
        %v5247 = vor.u32 %v5243, %v5246
        %v5248 = vrot.slane %v5247, 4
        %v5250 = vshll.u32 %v5172, 16
        %v5252 = vrot.slane %v5250, 5
        %v5253 = vsel %vm1677, %v5248, %v5252
        %v5254 = vshrl.u32 %v5172, 16
        %v5256 = vrot.slane %v5254, 4
        %v5257 = vor.u32 %v5256, %v5252
        %v5258 = vrot.slane %v5257, 4
        %v5260 = vshll.u32 %v5173, 16
        %v5262 = vrot.slane %v5260, 5
        %v5263 = vsel %vm1677, %v5258, %v5262
        %v5265 = vshrl.u32 %v5174, 16
        %v5267 = vrot.slane %v5265, 4
        %v5268 = vshll.u32 %v5174, 16
        %v5270 = vrot.slane %v5268, 5
        %v5271 = vor.u32 %v5267, %v5270
        %v5272 = vrot.slane %v5271, 4
        %v5274 = vshll.u32 %v5175, 16
        %v5276 = vrot.slane %v5274, 5
        %v5277 = vsel %vm1677, %v5272, %v5276
        %v5278 = vshrl.u32 %v5175, 16
        %v5280 = vrot.slane %v5278, 4
        %v5281 = vor.u32 %v5280, %v5276
        %v5282 = vrot.slane %v5281, 4
        %v5284 = vshll.u32 %v5176, 16
        %v5286 = vrot.slane %v5284, 5
        %v5287 = vsel %vm1677, %v5282, %v5286
        %v5289 = vshrl.u32 %v5177, 16
        %v5291 = vrot.slane %v5289, 4
        %v5292 = vshll.u32 %v5177, 16
        %v5294 = vrot.slane %v5292, 5
        %v5295 = vor.u32 %v5291, %v5294
        %v5296 = vrot.slane %v5295, 4
        %v5298 = vshll.u32 %v5178, 16
        %v5300 = vrot.slane %v5298, 5
        %v5301 = vsel %vm1677, %v5296, %v5300
        %v5302 = vshrl.u32 %v5178, 16
        %v5304 = vrot.slane %v5302, 4
        %v5305 = vor.u32 %v5304, %v5300
        %v5306 = vrot.slane %v5305, 4
        %v5308 = vshll.u32 %v5179, 16
        %v5310 = vrot.slane %v5308, 5
        %v5311 = vsel %vm1677, %v5306, %v5310
        %v5313 = vshrl.u32 %v5180, 16
        %v5315 = vrot.slane %v5313, 4
        %v5316 = vshll.u32 %v5180, 16
        %v5318 = vrot.slane %v5316, 5
        %v5319 = vor.u32 %v5315, %v5318
        %v5320 = vrot.slane %v5319, 4
        %v5322 = vshll.u32 %v5181, 16
        %v5324 = vrot.slane %v5322, 5
        %v5325 = vsel %vm1677, %v5320, %v5324
        %v5326 = vshrl.u32 %v5181, 16
        %v5328 = vrot.slane %v5326, 4
        %v5329 = vor.u32 %v5328, %v5324
        %v5330 = vrot.slane %v5329, 4
        %v5332 = vshll.u32 %v5182, 16
        %v5334 = vrot.slane %v5332, 5
        %v5335 = vsel %vm1677, %v5330, %v5334
        %v5337 = vshrl.u32 %v5183, 16
        %v5339 = vrot.slane %v5337, 4
        %v5340 = vshll.u32 %v5183, 16
        %v5342 = vrot.slane %v5340, 5
        %v5343 = vor.u32 %v5339, %v5342
        %v5344 = vrot.slane %v5343, 4
        %v5346 = vshll.u32 %v5184, 16
        %v5348 = vrot.slane %v5346, 5
        %v5349 = vsel %vm1677, %v5344, %v5348
        %v5350 = vshrl.u32 %v5184, 16
        %v5352 = vrot.slane %v5350, 4
        %v5353 = vor.u32 %v5352, %v5348
        %v5354 = vrot.slane %v5353, 4
        %v5356 = vshll.u32 %v5185, 16
        %v5358 = vrot.slane %v5356, 5
        %v5359 = vsel %vm1677, %v5354, %v5358
        %v5361 = vshrl.u32 %v5186, 16
        %v5363 = vrot.slane %v5361, 4
        %v5364 = vshll.u32 %v5186, 16
        %v5366 = vrot.slane %v5364, 5
        %v5367 = vor.u32 %v5363, %v5366
        %v5368 = vrot.slane %v5367, 4
        %v5370 = vshll.u32 %v5187, 16
        %v5372 = vrot.slane %v5370, 5
        %v5373 = vsel %vm1677, %v5368, %v5372
        %v5374 = vshrl.u32 %v5187, 16
        %v5376 = vrot.slane %v5374, 4
        %v5377 = vor.u32 %v5376, %v5372
        %v5378 = vrot.slane %v5377, 4
        %v5380 = vshll.u32 %v5188, 16
        %v5382 = vrot.slane %v5380, 5
        %v5383 = vsel %vm1677, %v5378, %v5382
        %v5385 = vshrl.u32 %v5189, 16
        %v5387 = vrot.slane %v5385, 4
        %v5388 = vshll.u32 %v5189, 16
        %v5390 = vrot.slane %v5388, 5
        %v5391 = vor.u32 %v5387, %v5390
        %v5392 = vrot.slane %v5391, 4
        %v5394 = vshll.u32 %v5190, 16
        %v5396 = vrot.slane %v5394, 5
        %v5397 = vsel %vm1677, %v5392, %v5396
        %v5398 = vshrl.u32 %v5190, 16
        %v5400 = vrot.slane %v5398, 4
        %v5401 = vor.u32 %v5400, %v5396
        %v5402 = vrot.slane %v5401, 4
        %v5404 = vshll.u32 %v5191, 16
        %v5406 = vrot.slane %v5404, 5
        %v5407 = vsel %vm1677, %v5402, %v5406
        %v5409 = vshrl.u32 %v5192, 16
        %v5411 = vrot.slane %v5409, 4
        %v5412 = vshll.u32 %v5192, 16
        %v5414 = vrot.slane %v5412, 5
        %v5415 = vor.u32 %v5411, %v5414
        %v5416 = vrot.slane %v5415, 4
        %v5418 = vshll.u32 %v5193, 16
        %v5420 = vrot.slane %v5418, 5
        %v5421 = vsel %vm1677, %v5416, %v5420
        %v5422 = vshrl.u32 %v5193, 16
        %v5424 = vrot.slane %v5422, 4
        %v5425 = vor.u32 %v5424, %v5420
        %v5426 = vrot.slane %v5425, 4
        %v5428 = vshll.u32 %v5194, 16
        %v5430 = vrot.slane %v5428, 5
        %v5431 = vsel %vm1677, %v5426, %v5430
        %v5433 = vshrl.u32 %v5195, 16
        %v5435 = vrot.slane %v5433, 4
        %v5436 = vshll.u32 %v5195, 16
        %v5438 = vrot.slane %v5436, 5
        %v5439 = vor.u32 %v5435, %v5438
        %v5440 = vrot.slane %v5439, 4
        %v5442 = vshll.u32 %v5196, 16
        %v5444 = vrot.slane %v5442, 5
        %v5445 = vsel %vm1677, %v5440, %v5444
        %v5446 = vshrl.u32 %v5196, 16
        %v5448 = vrot.slane %v5446, 4
        %v5449 = vor.u32 %v5448, %v5444
        %v5450 = vrot.slane %v5449, 4
        %v5452 = vshll.u32 %v5197, 16
        %v5454 = vrot.slane %v5452, 5
        %v5455 = vsel %vm1677, %v5450, %v5454
        %v5457 = vshrl.u32 %v5198, 16
        %v5459 = vrot.slane %v5457, 4
        %v5460 = vshll.u32 %v5198, 16
        %v5462 = vrot.slane %v5460, 5
        %v5463 = vor.u32 %v5459, %v5462
        %v5464 = vrot.slane %v5463, 4
        %v5466 = vshll.u32 %v5199, 16
        %v5468 = vrot.slane %v5466, 5
        %v5469 = vsel %vm1677, %v5464, %v5468
        %v5470 = vshrl.u32 %v5199, 16
        %v5472 = vrot.slane %v5470, 4
        %v5473 = vor.u32 %v5472, %v5468
        %v5474 = vrot.slane %v5473, 4
        %v5476 = vshll.u32 %v5200, 16
        %v5478 = vrot.slane %v5476, 5
        %v5479 = vsel %vm1677, %v5474, %v5478
        %v5481 = vshrl.u32 %v5201, 16
        %v5483 = vrot.slane %v5481, 4
        %v5484 = vshll.u32 %v5201, 16
        %v5486 = vrot.slane %v5484, 5
        %v5487 = vor.u32 %v5483, %v5486
        %v5488 = vrot.slane %v5487, 4
        %v5490 = vshll.u32 %v5202, 16
        %v5492 = vrot.slane %v5490, 5
        %v5493 = vsel %vm1677, %v5488, %v5492
        %v5494 = vshrl.u32 %v5202, 16
        %v5496 = vrot.slane %v5494, 4
        %v5497 = vor.u32 %v5496, %v5492
        %v5498 = vrot.slane %v5497, 4
        %v5500 = vshll.u32 %v5203, 16
        %v5502 = vrot.slane %v5500, 5
        %v5503 = vsel %vm1677, %v5498, %v5502
        %v5505 = vshrl.u32 %v5204, 16
        %v5507 = vrot.slane %v5505, 4
        %v5508 = vshll.u32 %v5204, 16
        %v5510 = vrot.slane %v5508, 5
        %v5511 = vor.u32 %v5507, %v5510
        %v5512 = vrot.slane %v5511, 4
        %v5514 = vshll.u32 %v5205, 16
        %v5516 = vrot.slane %v5514, 5
        %v5517 = vsel %vm1677, %v5512, %v5516
        %v5518 = vshrl.u32 %v5205, 16
        %v5520 = vrot.slane %v5518, 4
        %v5521 = vor.u32 %v5520, %v5516
        %v5522 = vrot.slane %v5521, 4
        %v5524 = vshll.u32 %v5206, 16
        %v5526 = vrot.slane %v5524, 5
        %v5527 = vsel %vm1677, %v5522, %v5526
        %v5529 = vshrl.u32 %v5207, 16
        %v5531 = vrot.slane %v5529, 4
        %v5532 = vshll.u32 %v5207, 16
        %v5534 = vrot.slane %v5532, 5
        %v5535 = vor.u32 %v5531, %v5534
        %v5536 = vrot.slane %v5535, 4
        %v5538 = vshll.u32 %v5208, 16
        %v5540 = vrot.slane %v5538, 5
        %v5541 = vsel %vm1677, %v5536, %v5540
        %v5542 = vshrl.u32 %v5208, 16
        %v5544 = vrot.slane %v5542, 4
        %v5545 = vor.u32 %v5544, %v5540
        %v5546 = vrot.slane %v5545, 4
        %v5548 = vshll.u32 %v5209, 16
        %v5550 = vrot.slane %v5548, 5
        %v5551 = vsel %vm1677, %v5546, %v5550
        %v5553 = vshrl.u32 %v5210, 16
        %v5555 = vrot.slane %v5553, 4
        %v5556 = vshll.u32 %v5210, 16
        %v5558 = vrot.slane %v5556, 5
        %v5559 = vor.u32 %v5555, %v5558
        %v5560 = vrot.slane %v5559, 4
        %v5562 = vshll.u32 %v5211, 16
        %v5564 = vrot.slane %v5562, 5
        %v5565 = vsel %vm1677, %v5560, %v5564
        %v5566 = vshrl.u32 %v5211, 16
        %v5568 = vrot.slane %v5566, 4
        %v5569 = vor.u32 %v5568, %v5564
        %v5570 = vrot.slane %v5569, 4
        %v5572 = vshll.u32 %v5212, 16
        %v5574 = vrot.slane %v5572, 5
        %v5575 = vsel %vm1677, %v5570, %v5574
        %v5577 = vshrl.u32 %v5213, 16
        %v5579 = vrot.slane %v5577, 4
        %v5580 = vshll.u32 %v5213, 16
        %v5582 = vrot.slane %v5580, 5
        %v5583 = vor.u32 %v5579, %v5582
        %v5584 = vrot.slane %v5583, 4
        %v5586 = vshll.u32 %v5214, 16
        %v5588 = vrot.slane %v5586, 5
        %v5589 = vsel %vm1677, %v5584, %v5588
        %v5590 = vshrl.u32 %v5214, 16
        %v5592 = vrot.slane %v5590, 4
        %v5593 = vor.u32 %v5592, %v5588
        %v5594 = vrot.slane %v5593, 4
        %v5596 = vshll.u32 %v5215, 16
        %v5598 = vrot.slane %v5596, 5
        %v5599 = vsel %vm1677, %v5594, %v5598
        %s5600 = scalar_lea.vmem [#allocation8], 448
        %v5601 = vld [vmem:[%s5600] sm:$0xf]
        %v5602 = vld [vmem:[%s5600 + $0x4] sm:$0xf]
        %v5603 = vld [vmem:[%s5600 + $0x8] sm:$0xf]
        %v5604 = vld [vmem:[%s5600 + $0xc] sm:$0xf]
        %v5605 = vld [vmem:[%s5600 + $0x10] sm:$0xf]
        %v5606 = vld [vmem:[%s5600 + $0x14] sm:$0xf]
        %v5607 = vld [vmem:[%s5600 + $0x18] sm:$0xf]
        %v5608 = vld [vmem:[%s5600 + $0x1c] sm:$0xf]
        %v5609 = vld [vmem:[%s5600 + $0x20] sm:$0xf]
        %v5610 = vld [vmem:[%s5600 + $0x24] sm:$0xf]
        %v5611 = vld [vmem:[%s5600 + $0x28] sm:$0xf]
        %v5612 = vld [vmem:[%s5600 + $0x2c] sm:$0xf]
        %v5613 = vld [vmem:[%s5600 + $0x30] sm:$0xf]
        %v5614 = vld [vmem:[%s5600 + $0x34] sm:$0xf]
        %v5615 = vld [vmem:[%s5600 + $0x38] sm:$0xf]
        %v5616 = vld [vmem:[%s5600 + $0x3c] sm:$0xf]
        %v5617 = vunpack.c.l.b16 %v5229
        %v5618 = vunpack.c.l.b16 %v5239
        %v5619 = vunpack.c.l.b16 %v5253
        %v5620 = vunpack.c.l.b16 %v5263
        %v5621 = vunpack.c.l.b16 %v5277
        %v5622 = vunpack.c.l.b16 %v5287
        %v5623 = vunpack.c.l.b16 %v5301
        %v5624 = vunpack.c.l.b16 %v5311
        %v5625 = vunpack.c.l.b16 %v5325
        %v5626 = vunpack.c.l.b16 %v5335
        %v5627 = vunpack.c.l.b16 %v5349
        %v5628 = vunpack.c.l.b16 %v5359
        %v5629 = vunpack.c.l.b16 %v5373
        %v5630 = vunpack.c.l.b16 %v5383
        %v5631 = vunpack.c.l.b16 %v5397
        %v5632 = vunpack.c.l.b16 %v5407
        %v5633 = vunpack.c.l.b16 %v5421
        %v5634 = vunpack.c.l.b16 %v5431
        %v5635 = vunpack.c.l.b16 %v5445
        %v5636 = vunpack.c.l.b16 %v5455
        %v5637 = vunpack.c.l.b16 %v5469
        %v5638 = vunpack.c.l.b16 %v5479
        %v5639 = vunpack.c.l.b16 %v5493
        %v5640 = vunpack.c.l.b16 %v5503
        %v5641 = vunpack.c.l.b16 %v5517
        %v5642 = vunpack.c.l.b16 %v5527
        %v5643 = vunpack.c.l.b16 %v5541
        %v5644 = vunpack.c.l.b16 %v5551
        %v5645 = vunpack.c.l.b16 %v5565
        %v5646 = vunpack.c.l.b16 %v5575
        %v5647 = vunpack.c.l.b16 %v5589
        %v5648 = vunpack.c.l.b16 %v5599
        %v5649 = vpack.c.b16 %v5618, %v5617
        %v5650 = vpack.c.b16 %v5620, %v5619
        %v5651 = vpack.c.b16 %v5622, %v5621
        %v5652 = vpack.c.b16 %v5624, %v5623
        %v5653 = vpack.c.b16 %v5626, %v5625
        %v5654 = vpack.c.b16 %v5628, %v5627
        %v5655 = vpack.c.b16 %v5630, %v5629
        %v5656 = vpack.c.b16 %v5632, %v5631
        %v5657 = vpack.c.b16 %v5634, %v5633
        %v5658 = vpack.c.b16 %v5636, %v5635
        %v5659 = vpack.c.b16 %v5638, %v5637
        %v5660 = vpack.c.b16 %v5640, %v5639
        %v5661 = vpack.c.b16 %v5642, %v5641
        %v5662 = vpack.c.b16 %v5644, %v5643
        %v5663 = vpack.c.b16 %v5646, %v5645
        %v5664 = vpack.c.b16 %v5648, %v5647
        %v5697 = vunpack.c.l.b16 %v5601
        %v5698 = vunpack.c.l.b16 %v5602
        %v5699 = vunpack.c.l.b16 %v5603
        %v5700 = vunpack.c.l.b16 %v5604
        %v5701 = vunpack.c.l.b16 %v5605
        %v5702 = vunpack.c.l.b16 %v5606
        %v5703 = vunpack.c.l.b16 %v5607
        %v5704 = vunpack.c.l.b16 %v5608
        %v5705 = vunpack.c.l.b16 %v5609
        %v5706 = vunpack.c.l.b16 %v5610
        %v5707 = vunpack.c.l.b16 %v5611
        %v5708 = vunpack.c.l.b16 %v5612
        %v5709 = vunpack.c.l.b16 %v5613
        %v5710 = vunpack.c.l.b16 %v5614
        %v5711 = vunpack.c.l.b16 %v5615
        %v5712 = vunpack.c.l.b16 %v5616
        %v5713 = vpack.c.b16 %v5698, %v5697
        %v5714 = vpack.c.b16 %v5700, %v5699
        %v5715 = vpack.c.b16 %v5702, %v5701
        %v5716 = vpack.c.b16 %v5704, %v5703
        %v5717 = vpack.c.b16 %v5706, %v5705
        %v5718 = vpack.c.b16 %v5708, %v5707
        %v5719 = vpack.c.b16 %v5710, %v5709
        %v5720 = vpack.c.b16 %v5712, %v5711
        %5729 = vmatprep.subr.bf16.mxu0 0
        %5730 = vmatpush1.bf16.msra.mxu0 %v5713
        %5731 = vmatprep.subr.bf16.mxu0 0
        %5732 = vmatpush1.bf16.msra.mxu0 %v5714
        %5733 = vmatprep.subr.bf16.mxu0 0
        %5734 = vmatpush1.bf16.msra.mxu0 %v5715
        %5735 = vmatprep.subr.bf16.mxu0 0
        %5736 = vmatpush1.bf16.msra.mxu0 %v5716
        %5737 = vmatprep.subr.bf16.mxu0 0
        %5738 = vmatpush1.bf16.msra.mxu0 %v5717
        %5739 = vmatprep.subr.bf16.mxu0 0
        %5740 = vmatpush1.bf16.msra.mxu0 %v5718
        %5741 = vmatprep.subr.bf16.mxu0 0
        %5742 = vmatpush1.bf16.msra.mxu0 %v5719
        %5743 = vmatprep.subr.bf16.mxu0 0
        %5744 = vmatpush1.bf16.msra.mxu0 %v5720
        %5745 = vmatprep.subr.bf16.mxu0 0
        %5746 = vmatpush1.bf16.msra.mxu0 0
        %5747 = vmatprep.subr.bf16.mxu0 0
        %5748 = vmatpush1.bf16.msra.mxu0 0
        %5749 = vmatprep.subr.bf16.mxu0 0
        %5750 = vmatpush1.bf16.msra.mxu0 0
        %5751 = vmatprep.subr.bf16.mxu0 0
        %5752 = vmatpush1.bf16.msra.mxu0 0
        %5753 = vmatprep.subr.bf16.mxu0 0
        %5754 = vmatpush1.bf16.msra.mxu0 0
        %5755 = vmatprep.subr.bf16.mxu0 0
        %5756 = vmatpush1.bf16.msra.mxu0 0
        %5757 = vmatprep.subr.bf16.mxu0 0
        %5758 = vmatpush1.bf16.msra.mxu0 0
        %5759 = vmatprep.subr.bf16.mxu0 0
        %5760 = vmatpush1.bf16.msra.mxu0 0
        %5761 = vmatprep.mubr.bf16.mxu0 0
        %5762 = vmatmul.mubr.bf16.gmra.mrb[0].mxu0 %v5649
        %v5763 = vpop.f32.mrb[0].mxu0
        %v5764 = vadd.f32 0.0, %v5763
        %v5765 = vpop.f32.mrb[0].mxu0
        %v5766 = vpop.f32.mrb[0].mxu0
        %v5767 = vadd.f32 0.0, %v5766
        %v5768 = vpop.f32.mrb[0].mxu0
        %5769 = vmatprep.mubr.bf16.mxu0 0
        %5770 = vmatmul.mubr.bf16.gmra.mrb[0].mxu0 %v5650
        %v5771 = vpop.f32.mrb[0].mxu0
        %v5772 = vadd.f32 0.0, %v5771
        %v5773 = vpop.f32.mrb[0].mxu0
        %v5774 = vpop.f32.mrb[0].mxu0
        %v5775 = vadd.f32 0.0, %v5774
        %v5776 = vpop.f32.mrb[0].mxu0
        %5777 = vmatprep.mubr.bf16.mxu0 0
        %5778 = vmatmul.mubr.bf16.gmra.mrb[0].mxu0 %v5651
        %v5779 = vpop.f32.mrb[0].mxu0
        %v5780 = vadd.f32 0.0, %v5779
        %v5781 = vpop.f32.mrb[0].mxu0
        %v5782 = vpop.f32.mrb[0].mxu0
        %v5783 = vadd.f32 0.0, %v5782
        %v5784 = vpop.f32.mrb[0].mxu0
        %5785 = vmatprep.mubr.bf16.mxu0 0
        %5786 = vmatmul.mubr.bf16.gmra.mrb[0].mxu0 %v5652
        %v5787 = vpop.f32.mrb[0].mxu0
        %v5788 = vadd.f32 0.0, %v5787
        %v5789 = vpop.f32.mrb[0].mxu0
        %v5790 = vpop.f32.mrb[0].mxu0
        %v5791 = vadd.f32 0.0, %v5790
        %v5792 = vpop.f32.mrb[0].mxu0
        %5793 = vmatprep.mubr.bf16.mxu0 0
        %5794 = vmatmul.mubr.bf16.gmra.mrb[0].mxu0 %v5653
        %v5795 = vpop.f32.mrb[0].mxu0
        %v5796 = vadd.f32 0.0, %v5795
        %v5797 = vpop.f32.mrb[0].mxu0
        %v5798 = vpop.f32.mrb[0].mxu0
        %v5799 = vadd.f32 0.0, %v5798
        %v5800 = vpop.f32.mrb[0].mxu0
        %5801 = vmatprep.mubr.bf16.mxu0 0
        %5802 = vmatmul.mubr.bf16.gmra.mrb[0].mxu0 %v5654
        %v5803 = vpop.f32.mrb[0].mxu0
        %v5804 = vadd.f32 0.0, %v5803
        %v5805 = vpop.f32.mrb[0].mxu0
        %v5806 = vpop.f32.mrb[0].mxu0
        %v5807 = vadd.f32 0.0, %v5806
        %v5808 = vpop.f32.mrb[0].mxu0
        %5809 = vmatprep.mubr.bf16.mxu0 0
        %5810 = vmatmul.mubr.bf16.gmra.mrb[0].mxu0 %v5655
        %v5811 = vpop.f32.mrb[0].mxu0
        %v5812 = vadd.f32 0.0, %v5811
        %v5813 = vpop.f32.mrb[0].mxu0
        %v5814 = vpop.f32.mrb[0].mxu0
        %v5815 = vadd.f32 0.0, %v5814
        %v5816 = vpop.f32.mrb[0].mxu0
        %5817 = vmatprep.mubr.bf16.mxu0 0
        %5818 = vmatmul.mubr.bf16.gmra.mrb[0].mxu0 %v5656
        %v5819 = vpop.f32.mrb[0].mxu0
        %v5820 = vadd.f32 0.0, %v5819
        %v5821 = vpop.f32.mrb[0].mxu0
        %v5822 = vpop.f32.mrb[0].mxu0
        %v5823 = vadd.f32 0.0, %v5822
        %v5824 = vpop.f32.mrb[0].mxu0
        %5825 = vmatprep.mubr.bf16.mxu0 0
        %5826 = vmatmul.mubr.bf16.gmra.mrb[0].mxu0 %v5657
        %v5827 = vpop.f32.mrb[0].mxu0
        %v5828 = vadd.f32 0.0, %v5827
        %v5829 = vpop.f32.mrb[0].mxu0
        %v5830 = vpop.f32.mrb[0].mxu0
        %v5831 = vadd.f32 0.0, %v5830
        %v5832 = vpop.f32.mrb[0].mxu0
        %5833 = vmatprep.mubr.bf16.mxu0 0
        %5834 = vmatmul.mubr.bf16.gmra.mrb[0].mxu0 %v5658
        %v5835 = vpop.f32.mrb[0].mxu0
        %v5836 = vadd.f32 0.0, %v5835
        %v5837 = vpop.f32.mrb[0].mxu0
        %v5838 = vpop.f32.mrb[0].mxu0
        %v5839 = vadd.f32 0.0, %v5838
        %v5840 = vpop.f32.mrb[0].mxu0
        %5841 = vmatprep.mubr.bf16.mxu0 0
        %5842 = vmatmul.mubr.bf16.gmra.mrb[0].mxu0 %v5659
        %v5843 = vpop.f32.mrb[0].mxu0
        %v5844 = vadd.f32 0.0, %v5843
        %v5845 = vpop.f32.mrb[0].mxu0
        %v5846 = vpop.f32.mrb[0].mxu0
        %v5847 = vadd.f32 0.0, %v5846
        %v5848 = vpop.f32.mrb[0].mxu0
        %5849 = vmatprep.mubr.bf16.mxu0 0
        %5850 = vmatmul.mubr.bf16.gmra.mrb[0].mxu0 %v5660
        %v5851 = vpop.f32.mrb[0].mxu0
        %v5852 = vadd.f32 0.0, %v5851
        %v5853 = vpop.f32.mrb[0].mxu0
        %v5854 = vpop.f32.mrb[0].mxu0
        %v5855 = vadd.f32 0.0, %v5854
        %v5856 = vpop.f32.mrb[0].mxu0
        %5857 = vmatprep.mubr.bf16.mxu0 0
        %5858 = vmatmul.mubr.bf16.gmra.mrb[0].mxu0 %v5661
        %v5859 = vpop.f32.mrb[0].mxu0
        %v5860 = vadd.f32 0.0, %v5859
        %v5861 = vpop.f32.mrb[0].mxu0
        %v5862 = vpop.f32.mrb[0].mxu0
        %v5863 = vadd.f32 0.0, %v5862
        %v5864 = vpop.f32.mrb[0].mxu0
        %5865 = vmatprep.mubr.bf16.mxu0 0
        %5866 = vmatmul.mubr.bf16.gmra.mrb[0].mxu0 %v5662
        %v5867 = vpop.f32.mrb[0].mxu0
        %v5868 = vadd.f32 0.0, %v5867
        %v5869 = vpop.f32.mrb[0].mxu0
        %v5870 = vpop.f32.mrb[0].mxu0
        %v5871 = vadd.f32 0.0, %v5870
        %v5872 = vpop.f32.mrb[0].mxu0
        %5873 = vmatprep.mubr.bf16.mxu0 0
        %5874 = vmatmul.mubr.bf16.gmra.mrb[0].mxu0 %v5663
        %v5875 = vpop.f32.mrb[0].mxu0
        %v5876 = vadd.f32 0.0, %v5875
        %v5877 = vpop.f32.mrb[0].mxu0
        %v5878 = vpop.f32.mrb[0].mxu0
        %v5879 = vadd.f32 0.0, %v5878
        %v5880 = vpop.f32.mrb[0].mxu0
        %5881 = vmatprep.mubr.bf16.mxu0 0
        %5882 = vmatmul.mubr.bf16.gmra.mrb[0].mxu0 %v5664
        %v5883 = vpop.f32.mrb[0].mxu0
        %v5884 = vadd.f32 0.0, %v5883
        %v5885 = vpop.f32.mrb[0].mxu0
        %v5886 = vpop.f32.mrb[0].mxu0
        %v5887 = vadd.f32 0.0, %v5886
        %v5888 = vpop.f32.mrb[0].mxu0
        %5889 = vdwg.mxu0
        %v5890 = vadd.f32 %v5136, %v5764
        %v5891 = vadd.f32 %v5137, %v5767
        %v5892 = vadd.f32 %v5138, %v5772
        %v5893 = vadd.f32 %v5139, %v5775
        %v5894 = vadd.f32 %v5140, %v5780
        %v5895 = vadd.f32 %v5141, %v5783
        %v5896 = vadd.f32 %v5142, %v5788
        %v5897 = vadd.f32 %v5143, %v5791
        %v5898 = vadd.f32 %v5144, %v5796
        %v5899 = vadd.f32 %v5145, %v5799
        %v5900 = vadd.f32 %v5146, %v5804
        %v5901 = vadd.f32 %v5147, %v5807
        %v5902 = vadd.f32 %v5148, %v5812
        %v5903 = vadd.f32 %v5149, %v5815
        %v5904 = vadd.f32 %v5150, %v5820
        %v5905 = vadd.f32 %v5151, %v5823
        %v5906 = vadd.f32 %v5152, %v5828
        %v5907 = vadd.f32 %v5153, %v5831
        %v5908 = vadd.f32 %v5154, %v5836
        %v5909 = vadd.f32 %v5155, %v5839
        %v5910 = vadd.f32 %v5156, %v5844
        %v5911 = vadd.f32 %v5157, %v5847
        %v5912 = vadd.f32 %v5158, %v5852
        %v5913 = vadd.f32 %v5159, %v5855
        %v5914 = vadd.f32 %v5160, %v5860
        %v5915 = vadd.f32 %v5161, %v5863
        %v5916 = vadd.f32 %v5162, %v5868
        %v5917 = vadd.f32 %v5163, %v5871
        %v5918 = vadd.f32 %v5164, %v5876
        %v5919 = vadd.f32 %v5165, %v5879
        %v5920 = vadd.f32 %v5166, %v5884
        %v5921 = vadd.f32 %v5167, %v5887
        %v5922 = vld [vmem:[%s4781] sm:$0xe]
        %v5923 = vld [vmem:[%s4781 + $0xc] sm:$0xe]
        %v5924 = vld [vmem:[%s4781 + $0x18] sm:$0xe]
        %v5925 = vld [vmem:[%s4781 + $0x24] sm:$0xe]
        %v5926 = vld [vmem:[%s4781 + $0x30] sm:$0xe]
        %v5927 = vld [vmem:[%s4781 + $0x3c] sm:$0xe]
        %v5928 = vld [vmem:[%s4781 + $0x48] sm:$0xe]
        %v5929 = vld [vmem:[%s4781 + $0x54] sm:$0xe]
        %v5930 = vld [vmem:[%s4781 + $0x60] sm:$0xe]
        %v5931 = vld [vmem:[%s4781 + $0x6c] sm:$0xe]
        %v5932 = vld [vmem:[%s4781 + $0x78] sm:$0xe]
        %v5933 = vld [vmem:[%s4781 + $0x84] sm:$0xe]
        %v5934 = vld [vmem:[%s4781 + $0x90] sm:$0xe]
        %v5935 = vld [vmem:[%s4781 + $0x9c] sm:$0xe]
        %v5936 = vld [vmem:[%s4781 + $0xa8] sm:$0xe]
        %v5937 = vld [vmem:[%s4781 + $0xb4] sm:$0xe]
        %v5986 = vrot.slane %v5922, 5
        %v5987 = vrot.slane %v5986, 4
        %v5988 = vrot.slane %v5169, 5
        %v5989 = vsel %vm2707, %v5987, %v5988
        %v5990 = vrot.slane %v5988, 4
        %v5991 = vrot.slane %v5170, 5
        %v5992 = vsel %vm2707, %v5990, %v5991
        %v5993 = vrot.slane %v5923, 5
        %v5994 = vrot.slane %v5993, 4
        %v5995 = vrot.slane %v5172, 5
        %v5996 = vsel %vm2707, %v5994, %v5995
        %v5997 = vrot.slane %v5995, 4
        %v5998 = vrot.slane %v5173, 5
        %v5999 = vsel %vm2707, %v5997, %v5998
        %v6000 = vrot.slane %v5924, 5
        %v6001 = vrot.slane %v6000, 4
        %v6002 = vrot.slane %v5175, 5
        %v6003 = vsel %vm2707, %v6001, %v6002
        %v6004 = vrot.slane %v6002, 4
        %v6005 = vrot.slane %v5176, 5
        %v6006 = vsel %vm2707, %v6004, %v6005
        %v6007 = vrot.slane %v5925, 5
        %v6008 = vrot.slane %v6007, 4
        %v6009 = vrot.slane %v5178, 5
        %v6010 = vsel %vm2707, %v6008, %v6009
        %v6011 = vrot.slane %v6009, 4
        %v6012 = vrot.slane %v5179, 5
        %v6013 = vsel %vm2707, %v6011, %v6012
        %v6014 = vrot.slane %v5926, 5
        %v6015 = vrot.slane %v6014, 4
        %v6016 = vrot.slane %v5181, 5
        %v6017 = vsel %vm2707, %v6015, %v6016
        %v6018 = vrot.slane %v6016, 4
        %v6019 = vrot.slane %v5182, 5
        %v6020 = vsel %vm2707, %v6018, %v6019
        %v6021 = vrot.slane %v5927, 5
        %v6022 = vrot.slane %v6021, 4
        %v6023 = vrot.slane %v5184, 5
        %v6024 = vsel %vm2707, %v6022, %v6023
        %v6025 = vrot.slane %v6023, 4
        %v6026 = vrot.slane %v5185, 5
        %v6027 = vsel %vm2707, %v6025, %v6026
        %v6028 = vrot.slane %v5928, 5
        %v6029 = vrot.slane %v6028, 4
        %v6030 = vrot.slane %v5187, 5
        %v6031 = vsel %vm2707, %v6029, %v6030
        %v6032 = vrot.slane %v6030, 4
        %v6033 = vrot.slane %v5188, 5
        %v6034 = vsel %vm2707, %v6032, %v6033
        %v6035 = vrot.slane %v5929, 5
        %v6036 = vrot.slane %v6035, 4
        %v6037 = vrot.slane %v5190, 5
        %v6038 = vsel %vm2707, %v6036, %v6037
        %v6039 = vrot.slane %v6037, 4
        %v6040 = vrot.slane %v5191, 5
        %v6041 = vsel %vm2707, %v6039, %v6040
        %v6042 = vrot.slane %v5930, 5
        %v6043 = vrot.slane %v6042, 4
        %v6044 = vrot.slane %v5193, 5
        %v6045 = vsel %vm2707, %v6043, %v6044
        %v6046 = vrot.slane %v6044, 4
        %v6047 = vrot.slane %v5194, 5
        %v6048 = vsel %vm2707, %v6046, %v6047
        %v6049 = vrot.slane %v5931, 5
        %v6050 = vrot.slane %v6049, 4
        %v6051 = vrot.slane %v5196, 5
        %v6052 = vsel %vm2707, %v6050, %v6051
        %v6053 = vrot.slane %v6051, 4
        %v6054 = vrot.slane %v5197, 5
        %v6055 = vsel %vm2707, %v6053, %v6054
        %v6056 = vrot.slane %v5932, 5
        %v6057 = vrot.slane %v6056, 4
        %v6058 = vrot.slane %v5199, 5
        %v6059 = vsel %vm2707, %v6057, %v6058
        %v6060 = vrot.slane %v6058, 4
        %v6061 = vrot.slane %v5200, 5
        %v6062 = vsel %vm2707, %v6060, %v6061
        %v6063 = vrot.slane %v5933, 5
        %v6064 = vrot.slane %v6063, 4
        %v6065 = vrot.slane %v5202, 5
        %v6066 = vsel %vm2707, %v6064, %v6065
        %v6067 = vrot.slane %v6065, 4
        %v6068 = vrot.slane %v5203, 5
        %v6069 = vsel %vm2707, %v6067, %v6068
        %v6070 = vrot.slane %v5934, 5
        %v6071 = vrot.slane %v6070, 4
        %v6072 = vrot.slane %v5205, 5
        %v6073 = vsel %vm2707, %v6071, %v6072
        %v6074 = vrot.slane %v6072, 4
        %v6075 = vrot.slane %v5206, 5
        %v6076 = vsel %vm2707, %v6074, %v6075
        %v6077 = vrot.slane %v5935, 5
        %v6078 = vrot.slane %v6077, 4
        %v6079 = vrot.slane %v5208, 5
        %v6080 = vsel %vm2707, %v6078, %v6079
        %v6081 = vrot.slane %v6079, 4
        %v6082 = vrot.slane %v5209, 5
        %v6083 = vsel %vm2707, %v6081, %v6082
        %v6084 = vrot.slane %v5936, 5
        %v6085 = vrot.slane %v6084, 4
        %v6086 = vrot.slane %v5211, 5
        %v6087 = vsel %vm2707, %v6085, %v6086
        %v6088 = vrot.slane %v6086, 4
        %v6089 = vrot.slane %v5212, 5
        %v6090 = vsel %vm2707, %v6088, %v6089
        %v6091 = vrot.slane %v5937, 5
        %v6092 = vrot.slane %v6091, 4
        %v6093 = vrot.slane %v5214, 5
        %v6094 = vsel %vm2707, %v6092, %v6093
        %v6095 = vrot.slane %v6093, 4
        %v6096 = vrot.slane %v5215, 5
        %v6097 = vsel %vm2707, %v6095, %v6096
        %s6098 = scalar_lea.vmem [#allocation8], 512
        %v6099 = vld [vmem:[%s6098] sm:$0xf]
        %v6100 = vld [vmem:[%s6098 + $0x4] sm:$0xf]
        %v6101 = vld [vmem:[%s6098 + $0x8] sm:$0xf]
        %v6102 = vld [vmem:[%s6098 + $0xc] sm:$0xf]
        %v6103 = vld [vmem:[%s6098 + $0x10] sm:$0xf]
        %v6104 = vld [vmem:[%s6098 + $0x14] sm:$0xf]
        %v6105 = vld [vmem:[%s6098 + $0x18] sm:$0xf]
        %v6106 = vld [vmem:[%s6098 + $0x1c] sm:$0xf]
        %v6107 = vld [vmem:[%s6098 + $0x20] sm:$0xf]
        %v6108 = vld [vmem:[%s6098 + $0x24] sm:$0xf]
        %v6109 = vld [vmem:[%s6098 + $0x28] sm:$0xf]
        %v6110 = vld [vmem:[%s6098 + $0x2c] sm:$0xf]
        %v6111 = vld [vmem:[%s6098 + $0x30] sm:$0xf]
        %v6112 = vld [vmem:[%s6098 + $0x34] sm:$0xf]
        %v6113 = vld [vmem:[%s6098 + $0x38] sm:$0xf]
        %v6114 = vld [vmem:[%s6098 + $0x3c] sm:$0xf]
        %v6115 = vunpack.c.l.b16 %v5989
        %v6116 = vunpack.c.l.b16 %v5992
        %v6117 = vunpack.c.l.b16 %v5996
        %v6118 = vunpack.c.l.b16 %v5999
        %v6119 = vunpack.c.l.b16 %v6003
        %v6120 = vunpack.c.l.b16 %v6006
        %v6121 = vunpack.c.l.b16 %v6010
        %v6122 = vunpack.c.l.b16 %v6013
        %v6123 = vunpack.c.l.b16 %v6017
        %v6124 = vunpack.c.l.b16 %v6020
        %v6125 = vunpack.c.l.b16 %v6024
        %v6126 = vunpack.c.l.b16 %v6027
        %v6127 = vunpack.c.l.b16 %v6031
        %v6128 = vunpack.c.l.b16 %v6034
        %v6129 = vunpack.c.l.b16 %v6038
        %v6130 = vunpack.c.l.b16 %v6041
        %v6131 = vunpack.c.l.b16 %v6045
        %v6132 = vunpack.c.l.b16 %v6048
        %v6133 = vunpack.c.l.b16 %v6052
        %v6134 = vunpack.c.l.b16 %v6055
        %v6135 = vunpack.c.l.b16 %v6059
        %v6136 = vunpack.c.l.b16 %v6062
        %v6137 = vunpack.c.l.b16 %v6066
        %v6138 = vunpack.c.l.b16 %v6069
        %v6139 = vunpack.c.l.b16 %v6073
        %v6140 = vunpack.c.l.b16 %v6076
        %v6141 = vunpack.c.l.b16 %v6080
        %v6142 = vunpack.c.l.b16 %v6083
        %v6143 = vunpack.c.l.b16 %v6087
        %v6144 = vunpack.c.l.b16 %v6090
        %v6145 = vunpack.c.l.b16 %v6094
        %v6146 = vunpack.c.l.b16 %v6097
        %v6147 = vpack.c.b16 %v6116, %v6115
        %v6148 = vpack.c.b16 %v6118, %v6117
        %v6149 = vpack.c.b16 %v6120, %v6119
        %v6150 = vpack.c.b16 %v6122, %v6121
        %v6151 = vpack.c.b16 %v6124, %v6123
        %v6152 = vpack.c.b16 %v6126, %v6125
        %v6153 = vpack.c.b16 %v6128, %v6127
        %v6154 = vpack.c.b16 %v6130, %v6129
        %v6155 = vpack.c.b16 %v6132, %v6131
        %v6156 = vpack.c.b16 %v6134, %v6133
        %v6157 = vpack.c.b16 %v6136, %v6135
        %v6158 = vpack.c.b16 %v6138, %v6137
        %v6159 = vpack.c.b16 %v6140, %v6139
        %v6160 = vpack.c.b16 %v6142, %v6141
        %v6161 = vpack.c.b16 %v6144, %v6143
        %v6162 = vpack.c.b16 %v6146, %v6145
        %v6195 = vunpack.c.l.b16 %v6099
        %v6196 = vunpack.c.l.b16 %v6100
        %v6197 = vunpack.c.l.b16 %v6101
        %v6198 = vunpack.c.l.b16 %v6102
        %v6199 = vunpack.c.l.b16 %v6103
        %v6200 = vunpack.c.l.b16 %v6104
        %v6201 = vunpack.c.l.b16 %v6105
        %v6202 = vunpack.c.l.b16 %v6106
        %v6203 = vunpack.c.l.b16 %v6107
        %v6204 = vunpack.c.l.b16 %v6108
        %v6205 = vunpack.c.l.b16 %v6109
        %v6206 = vunpack.c.l.b16 %v6110
        %v6207 = vunpack.c.l.b16 %v6111
        %v6208 = vunpack.c.l.b16 %v6112
        %v6209 = vunpack.c.l.b16 %v6113
        %v6210 = vunpack.c.l.b16 %v6114
        %v6211 = vpack.c.b16 %v6196, %v6195
        %v6212 = vpack.c.b16 %v6198, %v6197
        %v6213 = vpack.c.b16 %v6200, %v6199
        %v6214 = vpack.c.b16 %v6202, %v6201
        %v6215 = vpack.c.b16 %v6204, %v6203
        %v6216 = vpack.c.b16 %v6206, %v6205
        %v6217 = vpack.c.b16 %v6208, %v6207
        %v6218 = vpack.c.b16 %v6210, %v6209
        %6227 = vmatprep.subr.bf16.mxu0 0
        %6228 = vmatpush1.bf16.msra.mxu0 %v6211
        %6229 = vmatprep.subr.bf16.mxu0 0
        %6230 = vmatpush1.bf16.msra.mxu0 %v6212
        %6231 = vmatprep.subr.bf16.mxu0 0
        %6232 = vmatpush1.bf16.msra.mxu0 %v6213
        %6233 = vmatprep.subr.bf16.mxu0 0
        %6234 = vmatpush1.bf16.msra.mxu0 %v6214
        %6235 = vmatprep.subr.bf16.mxu0 0
        %6236 = vmatpush1.bf16.msra.mxu0 %v6215
        %6237 = vmatprep.subr.bf16.mxu0 0
        %6238 = vmatpush1.bf16.msra.mxu0 %v6216
        %6239 = vmatprep.subr.bf16.mxu0 0
        %6240 = vmatpush1.bf16.msra.mxu0 %v6217
        %6241 = vmatprep.subr.bf16.mxu0 0
        %6242 = vmatpush1.bf16.msra.mxu0 %v6218
        %6243 = vmatprep.subr.bf16.mxu0 0
        %6244 = vmatpush1.bf16.msra.mxu0 0
        %6245 = vmatprep.subr.bf16.mxu0 0
        %6246 = vmatpush1.bf16.msra.mxu0 0
        %6247 = vmatprep.subr.bf16.mxu0 0
        %6248 = vmatpush1.bf16.msra.mxu0 0
        %6249 = vmatprep.subr.bf16.mxu0 0
        %6250 = vmatpush1.bf16.msra.mxu0 0
        %6251 = vmatprep.subr.bf16.mxu0 0
        %6252 = vmatpush1.bf16.msra.mxu0 0
        %6253 = vmatprep.subr.bf16.mxu0 0
        %6254 = vmatpush1.bf16.msra.mxu0 0
        %6255 = vmatprep.subr.bf16.mxu0 0
        %6256 = vmatpush1.bf16.msra.mxu0 0
        %6257 = vmatprep.subr.bf16.mxu0 0
        %6258 = vmatpush1.bf16.msra.mxu0 0
        %6259 = vmatprep.mubr.bf16.mxu0 0
        %6260 = vmatmul.mubr.bf16.gmra.mrb[0].mxu0 %v6147
        %v6261 = vpop.f32.mrb[0].mxu0
        %v6262 = vadd.f32 0.0, %v6261
        %v6263 = vpop.f32.mrb[0].mxu0
        %v6264 = vpop.f32.mrb[0].mxu0
        %v6265 = vadd.f32 0.0, %v6264
        %v6266 = vpop.f32.mrb[0].mxu0
        %6267 = vmatprep.mubr.bf16.mxu0 0
        %6268 = vmatmul.mubr.bf16.gmra.mrb[0].mxu0 %v6148
        %v6269 = vpop.f32.mrb[0].mxu0
        %v6270 = vadd.f32 0.0, %v6269
        %v6271 = vpop.f32.mrb[0].mxu0
        %v6272 = vpop.f32.mrb[0].mxu0
        %v6273 = vadd.f32 0.0, %v6272
        %v6274 = vpop.f32.mrb[0].mxu0
        %6275 = vmatprep.mubr.bf16.mxu0 0
        %6276 = vmatmul.mubr.bf16.gmra.mrb[0].mxu0 %v6149
        %v6277 = vpop.f32.mrb[0].mxu0
        %v6278 = vadd.f32 0.0, %v6277
        %v6279 = vpop.f32.mrb[0].mxu0
        %v6280 = vpop.f32.mrb[0].mxu0
        %v6281 = vadd.f32 0.0, %v6280
        %v6282 = vpop.f32.mrb[0].mxu0
        %6283 = vmatprep.mubr.bf16.mxu0 0
        %6284 = vmatmul.mubr.bf16.gmra.mrb[0].mxu0 %v6150
        %v6285 = vpop.f32.mrb[0].mxu0
        %v6286 = vadd.f32 0.0, %v6285
        %v6287 = vpop.f32.mrb[0].mxu0
        %v6288 = vpop.f32.mrb[0].mxu0
        %v6289 = vadd.f32 0.0, %v6288
        %v6290 = vpop.f32.mrb[0].mxu0
        %6291 = vmatprep.mubr.bf16.mxu0 0
        %6292 = vmatmul.mubr.bf16.gmra.mrb[0].mxu0 %v6151
        %v6293 = vpop.f32.mrb[0].mxu0
        %v6294 = vadd.f32 0.0, %v6293
        %v6295 = vpop.f32.mrb[0].mxu0
        %v6296 = vpop.f32.mrb[0].mxu0
        %v6297 = vadd.f32 0.0, %v6296
        %v6298 = vpop.f32.mrb[0].mxu0
        %6299 = vmatprep.mubr.bf16.mxu0 0
        %6300 = vmatmul.mubr.bf16.gmra.mrb[0].mxu0 %v6152
        %v6301 = vpop.f32.mrb[0].mxu0
        %v6302 = vadd.f32 0.0, %v6301
        %v6303 = vpop.f32.mrb[0].mxu0
        %v6304 = vpop.f32.mrb[0].mxu0
        %v6305 = vadd.f32 0.0, %v6304
        %v6306 = vpop.f32.mrb[0].mxu0
        %6307 = vmatprep.mubr.bf16.mxu0 0
        %6308 = vmatmul.mubr.bf16.gmra.mrb[0].mxu0 %v6153
        %v6309 = vpop.f32.mrb[0].mxu0
        %v6310 = vadd.f32 0.0, %v6309
        %v6311 = vpop.f32.mrb[0].mxu0
        %v6312 = vpop.f32.mrb[0].mxu0
        %v6313 = vadd.f32 0.0, %v6312
        %v6314 = vpop.f32.mrb[0].mxu0
        %6315 = vmatprep.mubr.bf16.mxu0 0
        %6316 = vmatmul.mubr.bf16.gmra.mrb[0].mxu0 %v6154
        %v6317 = vpop.f32.mrb[0].mxu0
        %v6318 = vadd.f32 0.0, %v6317
        %v6319 = vpop.f32.mrb[0].mxu0
        %v6320 = vpop.f32.mrb[0].mxu0
        %v6321 = vadd.f32 0.0, %v6320
        %v6322 = vpop.f32.mrb[0].mxu0
        %6323 = vmatprep.mubr.bf16.mxu0 0
        %6324 = vmatmul.mubr.bf16.gmra.mrb[0].mxu0 %v6155
        %v6325 = vpop.f32.mrb[0].mxu0
        %v6326 = vadd.f32 0.0, %v6325
        %v6327 = vpop.f32.mrb[0].mxu0
        %v6328 = vpop.f32.mrb[0].mxu0
        %v6329 = vadd.f32 0.0, %v6328
        %v6330 = vpop.f32.mrb[0].mxu0
        %6331 = vmatprep.mubr.bf16.mxu0 0
        %6332 = vmatmul.mubr.bf16.gmra.mrb[0].mxu0 %v6156
        %v6333 = vpop.f32.mrb[0].mxu0
        %v6334 = vadd.f32 0.0, %v6333
        %v6335 = vpop.f32.mrb[0].mxu0
        %v6336 = vpop.f32.mrb[0].mxu0
        %v6337 = vadd.f32 0.0, %v6336
        %v6338 = vpop.f32.mrb[0].mxu0
        %6339 = vmatprep.mubr.bf16.mxu0 0
        %6340 = vmatmul.mubr.bf16.gmra.mrb[0].mxu0 %v6157
        %v6341 = vpop.f32.mrb[0].mxu0
        %v6342 = vadd.f32 0.0, %v6341
        %v6343 = vpop.f32.mrb[0].mxu0
        %v6344 = vpop.f32.mrb[0].mxu0
        %v6345 = vadd.f32 0.0, %v6344
        %v6346 = vpop.f32.mrb[0].mxu0
        %6347 = vmatprep.mubr.bf16.mxu0 0
        %6348 = vmatmul.mubr.bf16.gmra.mrb[0].mxu0 %v6158
        %v6349 = vpop.f32.mrb[0].mxu0
        %v6350 = vadd.f32 0.0, %v6349
        %v6351 = vpop.f32.mrb[0].mxu0
        %v6352 = vpop.f32.mrb[0].mxu0
        %v6353 = vadd.f32 0.0, %v6352
        %v6354 = vpop.f32.mrb[0].mxu0
        %6355 = vmatprep.mubr.bf16.mxu0 0
        %6356 = vmatmul.mubr.bf16.gmra.mrb[0].mxu0 %v6159
        %v6357 = vpop.f32.mrb[0].mxu0
        %v6358 = vadd.f32 0.0, %v6357
        %v6359 = vpop.f32.mrb[0].mxu0
        %v6360 = vpop.f32.mrb[0].mxu0
        %v6361 = vadd.f32 0.0, %v6360
        %v6362 = vpop.f32.mrb[0].mxu0
        %6363 = vmatprep.mubr.bf16.mxu0 0
        %6364 = vmatmul.mubr.bf16.gmra.mrb[0].mxu0 %v6160
        %v6365 = vpop.f32.mrb[0].mxu0
        %v6366 = vadd.f32 0.0, %v6365
        %v6367 = vpop.f32.mrb[0].mxu0
        %v6368 = vpop.f32.mrb[0].mxu0
        %v6369 = vadd.f32 0.0, %v6368
        %v6370 = vpop.f32.mrb[0].mxu0
        %6371 = vmatprep.mubr.bf16.mxu0 0
        %6372 = vmatmul.mubr.bf16.gmra.mrb[0].mxu0 %v6161
        %v6373 = vpop.f32.mrb[0].mxu0
        %v6374 = vadd.f32 0.0, %v6373
        %v6375 = vpop.f32.mrb[0].mxu0
        %v6376 = vpop.f32.mrb[0].mxu0
        %v6377 = vadd.f32 0.0, %v6376
        %v6378 = vpop.f32.mrb[0].mxu0
        %6379 = vmatprep.mubr.bf16.mxu0 0
        %6380 = vmatmul.mubr.bf16.gmra.mrb[0].mxu0 %v6162
        %v6381 = vpop.f32.mrb[0].mxu0
        %v6382 = vadd.f32 0.0, %v6381
        %v6383 = vpop.f32.mrb[0].mxu0
        %v6384 = vpop.f32.mrb[0].mxu0
        %v6385 = vadd.f32 0.0, %v6384
        %v6386 = vpop.f32.mrb[0].mxu0
        %6387 = vdwg.mxu0
        %v6388 = vadd.f32 %v5890, %v6262
        %v6389 = vadd.f32 %v5891, %v6265
        %v6390 = vadd.f32 %v5892, %v6270
        %v6391 = vadd.f32 %v5893, %v6273
        %v6392 = vadd.f32 %v5894, %v6278
        %v6393 = vadd.f32 %v5895, %v6281
        %v6394 = vadd.f32 %v5896, %v6286
        %v6395 = vadd.f32 %v5897, %v6289
        %v6396 = vadd.f32 %v5898, %v6294
        %v6397 = vadd.f32 %v5899, %v6297
        %v6398 = vadd.f32 %v5900, %v6302
        %v6399 = vadd.f32 %v5901, %v6305
        %v6400 = vadd.f32 %v5902, %v6310
        %v6401 = vadd.f32 %v5903, %v6313
        %v6402 = vadd.f32 %v5904, %v6318
        %v6403 = vadd.f32 %v5905, %v6321
        %v6404 = vadd.f32 %v5906, %v6326
        %v6405 = vadd.f32 %v5907, %v6329
        %v6406 = vadd.f32 %v5908, %v6334
        %v6407 = vadd.f32 %v5909, %v6337
        %v6408 = vadd.f32 %v5910, %v6342
        %v6409 = vadd.f32 %v5911, %v6345
        %v6410 = vadd.f32 %v5912, %v6350
        %v6411 = vadd.f32 %v5913, %v6353
        %v6412 = vadd.f32 %v5914, %v6358
        %v6413 = vadd.f32 %v5915, %v6361
        %v6414 = vadd.f32 %v5916, %v6366
        %v6415 = vadd.f32 %v5917, %v6369
        %v6416 = vadd.f32 %v5918, %v6374
        %v6417 = vadd.f32 %v5919, %v6377
        %v6418 = vadd.f32 %v5920, %v6382
        %v6419 = vadd.f32 %v5921, %v6385
        %v6420 = vld [vmem:[%s4] sm:$0x1]
        %v6422 = vlaneseq
        %v6423 = vshrl.u32 %v6422, 7
        %v6424 = vsub.s32 0, %v6423
        %v6425 = vrot.slane %v6420, %v6424
        %v6427 = vadd.f32 %v6388, %v6425
        %v6428 = vadd.f32 %v6389, %v6425
        %v6429 = vadd.f32 %v6390, %v6425
        %v6430 = vadd.f32 %v6391, %v6425
        %v6431 = vadd.f32 %v6392, %v6425
        %v6432 = vadd.f32 %v6393, %v6425
        %v6433 = vadd.f32 %v6394, %v6425
        %v6434 = vadd.f32 %v6395, %v6425
        %v6435 = vadd.f32 %v6396, %v6425
        %v6436 = vadd.f32 %v6397, %v6425
        %v6437 = vadd.f32 %v6398, %v6425
        %v6438 = vadd.f32 %v6399, %v6425
        %v6439 = vadd.f32 %v6400, %v6425
        %v6440 = vadd.f32 %v6401, %v6425
        %v6441 = vadd.f32 %v6402, %v6425
        %v6442 = vadd.f32 %v6403, %v6425
        %v6443 = vadd.f32 %v6404, %v6425
        %v6444 = vadd.f32 %v6405, %v6425
        %v6445 = vadd.f32 %v6406, %v6425
        %v6446 = vadd.f32 %v6407, %v6425
        %v6447 = vadd.f32 %v6408, %v6425
        %v6448 = vadd.f32 %v6409, %v6425
        %v6449 = vadd.f32 %v6410, %v6425
        %v6450 = vadd.f32 %v6411, %v6425
        %v6451 = vadd.f32 %v6412, %v6425
        %v6452 = vadd.f32 %v6413, %v6425
        %v6453 = vadd.f32 %v6414, %v6425
        %v6454 = vadd.f32 %v6415, %v6425
        %v6455 = vadd.f32 %v6416, %v6425
        %v6456 = vadd.f32 %v6417, %v6425
        %v6457 = vadd.f32 %v6418, %v6425
        %v6458 = vadd.f32 %v6419, %v6425
        %v6459 = vmax.f32 %v6427, 0.0
        %v6460 = vmax.f32 %v6428, 0.0
        %v6461 = vmax.f32 %v6429, 0.0
        %v6462 = vmax.f32 %v6430, 0.0
        %v6463 = vmax.f32 %v6431, 0.0
        %v6464 = vmax.f32 %v6432, 0.0
        %v6465 = vmax.f32 %v6433, 0.0
        %v6466 = vmax.f32 %v6434, 0.0
        %v6467 = vmax.f32 %v6435, 0.0
        %v6468 = vmax.f32 %v6436, 0.0
        %v6469 = vmax.f32 %v6437, 0.0
        %v6470 = vmax.f32 %v6438, 0.0
        %v6471 = vmax.f32 %v6439, 0.0
        %v6472 = vmax.f32 %v6440, 0.0
        %v6473 = vmax.f32 %v6441, 0.0
        %v6474 = vmax.f32 %v6442, 0.0
        %v6475 = vmax.f32 %v6443, 0.0
        %v6476 = vmax.f32 %v6444, 0.0
        %v6477 = vmax.f32 %v6445, 0.0
        %v6478 = vmax.f32 %v6446, 0.0
        %v6479 = vmax.f32 %v6447, 0.0
        %v6480 = vmax.f32 %v6448, 0.0
        %v6481 = vmax.f32 %v6449, 0.0
        %v6482 = vmax.f32 %v6450, 0.0
        %v6483 = vmax.f32 %v6451, 0.0
        %v6484 = vmax.f32 %v6452, 0.0
        %v6485 = vmax.f32 %v6453, 0.0
        %v6486 = vmax.f32 %v6454, 0.0
        %v6487 = vmax.f32 %v6455, 0.0
        %v6488 = vmax.f32 %v6456, 0.0
        %v6489 = vmax.f32 %v6457, 0.0
        %v6490 = vmax.f32 %v6458, 0.0
        %v6491 = vpack.c.bf16 %v6460, %v6459
        %v6492 = vpack.c.bf16 %v6462, %v6461
        %v6493 = vpack.c.bf16 %v6464, %v6463
        %v6494 = vpack.c.bf16 %v6466, %v6465
        %v6495 = vpack.c.bf16 %v6468, %v6467
        %v6496 = vpack.c.bf16 %v6470, %v6469
        %v6497 = vpack.c.bf16 %v6472, %v6471
        %v6498 = vpack.c.bf16 %v6474, %v6473
        %v6499 = vpack.c.bf16 %v6476, %v6475
        %v6500 = vpack.c.bf16 %v6478, %v6477
        %v6501 = vpack.c.bf16 %v6480, %v6479
        %v6502 = vpack.c.bf16 %v6482, %v6481
        %v6503 = vpack.c.bf16 %v6484, %v6483
        %v6504 = vpack.c.bf16 %v6486, %v6485
        %v6505 = vpack.c.bf16 %v6488, %v6487
        %v6506 = vpack.c.bf16 %v6490, %v6489
        %v6507 = vld [vmem:[#allocation9] sm:$0xf]
        %v6508 = vld [vmem:[#allocation9 + $0x4] sm:$0xf]
        %v6509 = vld [vmem:[#allocation9 + $0x8] sm:$0xf]
        %v6510 = vld [vmem:[#allocation9 + $0xc] sm:$0xf]
        %v6511 = vld [vmem:[#allocation9 + $0x10] sm:$0xf]
        %v6512 = vld [vmem:[#allocation9 + $0x14] sm:$0xf]
        %v6513 = vld [vmem:[#allocation9 + $0x18] sm:$0xf]
        %v6514 = vld [vmem:[#allocation9 + $0x1c] sm:$0xf]
        %v6515 = vld [vmem:[#allocation9 + $0x20] sm:$0xf]
        %v6516 = vld [vmem:[#allocation9 + $0x24] sm:$0xf]
        %v6517 = vld [vmem:[#allocation9 + $0x28] sm:$0xf]
        %v6518 = vld [vmem:[#allocation9 + $0x2c] sm:$0xf]
        %v6519 = vld [vmem:[#allocation9 + $0x30] sm:$0xf]
        %v6520 = vld [vmem:[#allocation9 + $0x34] sm:$0xf]
        %v6521 = vld [vmem:[#allocation9 + $0x38] sm:$0xf]
        %v6522 = vld [vmem:[#allocation9 + $0x3c] sm:$0xf]
        %s6523 = scalar_lea.vmem %s316, 24 [#allocation3]
        %v6524 = vld [vmem:[%s6523 + $0x1] sm:$0xff]
        %v6525 = vld [vmem:[%s6523 + $0x9] sm:$0xff]
        %v6526 = vld [vmem:[%s6523 + $0x19] sm:$0xff]
        %v6527 = vld [vmem:[%s6523 + $0x21] sm:$0xff]
        %v6528 = vld [vmem:[%s6523 + $0x31] sm:$0xff]
        %v6529 = vld [vmem:[%s6523 + $0x39] sm:$0xff]
        %v6530 = vld [vmem:[%s6523 + $0x49] sm:$0xff]
        %v6531 = vld [vmem:[%s6523 + $0x51] sm:$0xff]
        %v6532 = vld [vmem:[%s6523 + $0x61] sm:$0xff]
        %v6533 = vld [vmem:[%s6523 + $0x69] sm:$0xff]
        %v6534 = vld [vmem:[%s6523 + $0x79] sm:$0xff]
        %v6535 = vld [vmem:[%s6523 + $0x81] sm:$0xff]
        %v6536 = vld [vmem:[%s6523 + $0x91] sm:$0xff]
        %v6537 = vld [vmem:[%s6523 + $0x99] sm:$0xff]
        %v6538 = vld [vmem:[%s6523 + $0xa9] sm:$0xff]
        %v6539 = vld [vmem:[%s6523 + $0xb1] sm:$0xff]
        %v6540 = vld [vmem:[%s6523 + $0xc1] sm:$0xff]
        %v6541 = vld [vmem:[%s6523 + $0xc9] sm:$0xff]
        %v6542 = vld [vmem:[%s6523 + $0xd9] sm:$0xff]
        %v6543 = vld [vmem:[%s6523 + $0xe1] sm:$0xff]
        %v6544 = vld [vmem:[%s6523 + $0xf1] sm:$0xff]
        %v6545 = vld [vmem:[%s6523 + $0xf9] sm:$0xff]
        %v6546 = vld [vmem:[%s6523 + $0x109] sm:$0xff]
        %v6547 = vld [vmem:[%s6523 + $0x111] sm:$0xff]
        %v6548 = vld [vmem:[%s6523 + $0x121] sm:$0xff]
        %v6549 = vld [vmem:[%s6523 + $0x129] sm:$0xff]
        %v6550 = vld [vmem:[%s6523 + $0x139] sm:$0xff]
        %v6551 = vld [vmem:[%s6523 + $0x141] sm:$0xff]
        %v6552 = vld [vmem:[%s6523 + $0x151] sm:$0xff]
        %v6553 = vld [vmem:[%s6523 + $0x159] sm:$0xff]
        %v6554 = vld [vmem:[%s6523 + $0x169] sm:$0xff]
        %v6555 = vld [vmem:[%s6523 + $0x171] sm:$0xff]
        %v6556 = vld [vmem:[%s6] sm:$0x1]
        %v6558 = vlaneseq
        %v6559 = vshrl.u32 %v6558, 7
        %v6560 = vsub.s32 0, %v6559
        %v6561 = vrot.slane %v6556, %v6560
        %v6579 = vunpack.c.l.b16 %v6507
        %v6580 = vunpack.c.l.b16 %v6508
        %v6581 = vunpack.c.l.b16 %v6509
        %v6582 = vunpack.c.l.b16 %v6510
        %v6583 = vunpack.c.l.b16 %v6511
        %v6584 = vunpack.c.l.b16 %v6512
        %v6585 = vunpack.c.l.b16 %v6513
        %v6586 = vunpack.c.l.b16 %v6514
        %v6587 = vunpack.c.l.b16 %v6515
        %v6588 = vunpack.c.l.b16 %v6516
        %v6589 = vunpack.c.l.b16 %v6517
        %v6590 = vunpack.c.l.b16 %v6518
        %v6591 = vunpack.c.l.b16 %v6519
        %v6592 = vunpack.c.l.b16 %v6520
        %v6593 = vunpack.c.l.b16 %v6521
        %v6594 = vunpack.c.l.b16 %v6522
        %v6595 = vpack.c.b16 %v6580, %v6579
        %v6596 = vpack.c.b16 %v6582, %v6581
        %v6597 = vpack.c.b16 %v6584, %v6583
        %v6598 = vpack.c.b16 %v6586, %v6585
        %v6599 = vpack.c.b16 %v6588, %v6587
        %v6600 = vpack.c.b16 %v6590, %v6589
        %v6601 = vpack.c.b16 %v6592, %v6591
        %v6602 = vpack.c.b16 %v6594, %v6593
        %6611 = vmatprep.subr.bf16.mxu0 0
        %6612 = vmatpush1.bf16.msra.mxu0 %v6595
        %6613 = vmatprep.subr.bf16.mxu0 0
        %6614 = vmatpush1.bf16.msra.mxu0 %v6596
        %6615 = vmatprep.subr.bf16.mxu0 0
        %6616 = vmatpush1.bf16.msra.mxu0 %v6597
        %6617 = vmatprep.subr.bf16.mxu0 0
        %6618 = vmatpush1.bf16.msra.mxu0 %v6598
        %6619 = vmatprep.subr.bf16.mxu0 0
        %6620 = vmatpush1.bf16.msra.mxu0 %v6599
        %6621 = vmatprep.subr.bf16.mxu0 0
        %6622 = vmatpush1.bf16.msra.mxu0 %v6600
        %6623 = vmatprep.subr.bf16.mxu0 0
        %6624 = vmatpush1.bf16.msra.mxu0 %v6601
        %6625 = vmatprep.subr.bf16.mxu0 0
        %6626 = vmatpush1.bf16.msra.mxu0 %v6602
        %6627 = vmatprep.subr.bf16.mxu0 0
        %6628 = vmatpush1.bf16.msra.mxu0 0
        %6629 = vmatprep.subr.bf16.mxu0 0
        %6630 = vmatpush1.bf16.msra.mxu0 0
        %6631 = vmatprep.subr.bf16.mxu0 0
        %6632 = vmatpush1.bf16.msra.mxu0 0
        %6633 = vmatprep.subr.bf16.mxu0 0
        %6634 = vmatpush1.bf16.msra.mxu0 0
        %6635 = vmatprep.subr.bf16.mxu0 0
        %6636 = vmatpush1.bf16.msra.mxu0 0
        %6637 = vmatprep.subr.bf16.mxu0 0
        %6638 = vmatpush1.bf16.msra.mxu0 0
        %6639 = vmatprep.subr.bf16.mxu0 0
        %6640 = vmatpush1.bf16.msra.mxu0 0
        %6641 = vmatprep.subr.bf16.mxu0 0
        %6642 = vmatpush1.bf16.msra.mxu0 0
        %6643 = vmatprep.mubr.bf16.mxu0 0
        %6644 = vmatmul.mubr.bf16.gmra.mrb[0].mxu0 %v6491
        %v6645 = vpop.f32.mrb[0].mxu0
        %v6646 = vadd.f32 %v6561, %v6645
        %v6647 = vpop.f32.mrb[0].mxu0
        %v6648 = vpop.f32.mrb[0].mxu0
        %v6649 = vadd.f32 %v6561, %v6648
        %v6650 = vpop.f32.mrb[0].mxu0
        %6651 = vmatprep.mubr.bf16.mxu0 0
        %6652 = vmatmul.mubr.bf16.gmra.mrb[0].mxu0 %v6492
        %v6653 = vpop.f32.mrb[0].mxu0
        %v6654 = vadd.f32 %v6561, %v6653
        %v6655 = vpop.f32.mrb[0].mxu0
        %v6656 = vpop.f32.mrb[0].mxu0
        %v6657 = vadd.f32 %v6561, %v6656
        %v6658 = vpop.f32.mrb[0].mxu0
        %6659 = vmatprep.mubr.bf16.mxu0 0
        %6660 = vmatmul.mubr.bf16.gmra.mrb[0].mxu0 %v6493
        %v6661 = vpop.f32.mrb[0].mxu0
        %v6662 = vadd.f32 %v6561, %v6661
        %v6663 = vpop.f32.mrb[0].mxu0
        %v6664 = vpop.f32.mrb[0].mxu0
        %v6665 = vadd.f32 %v6561, %v6664
        %v6666 = vpop.f32.mrb[0].mxu0
        %6667 = vmatprep.mubr.bf16.mxu0 0
        %6668 = vmatmul.mubr.bf16.gmra.mrb[0].mxu0 %v6494
        %v6669 = vpop.f32.mrb[0].mxu0
        %v6670 = vadd.f32 %v6561, %v6669
        %v6671 = vpop.f32.mrb[0].mxu0
        %v6672 = vpop.f32.mrb[0].mxu0
        %v6673 = vadd.f32 %v6561, %v6672
        %v6674 = vpop.f32.mrb[0].mxu0
        %6675 = vmatprep.mubr.bf16.mxu0 0
        %6676 = vmatmul.mubr.bf16.gmra.mrb[0].mxu0 %v6495
        %v6677 = vpop.f32.mrb[0].mxu0
        %v6678 = vadd.f32 %v6561, %v6677
        %v6679 = vpop.f32.mrb[0].mxu0
        %v6680 = vpop.f32.mrb[0].mxu0
        %v6681 = vadd.f32 %v6561, %v6680
        %v6682 = vpop.f32.mrb[0].mxu0
        %6683 = vmatprep.mubr.bf16.mxu0 0
        %6684 = vmatmul.mubr.bf16.gmra.mrb[0].mxu0 %v6496
        %v6685 = vpop.f32.mrb[0].mxu0
        %v6686 = vadd.f32 %v6561, %v6685
        %v6687 = vpop.f32.mrb[0].mxu0
        %v6688 = vpop.f32.mrb[0].mxu0
        %v6689 = vadd.f32 %v6561, %v6688
        %v6690 = vpop.f32.mrb[0].mxu0
        %6691 = vmatprep.mubr.bf16.mxu0 0
        %6692 = vmatmul.mubr.bf16.gmra.mrb[0].mxu0 %v6497
        %v6693 = vpop.f32.mrb[0].mxu0
        %v6694 = vadd.f32 %v6561, %v6693
        %v6695 = vpop.f32.mrb[0].mxu0
        %v6696 = vpop.f32.mrb[0].mxu0
        %v6697 = vadd.f32 %v6561, %v6696
        %v6698 = vpop.f32.mrb[0].mxu0
        %6699 = vmatprep.mubr.bf16.mxu0 0
        %6700 = vmatmul.mubr.bf16.gmra.mrb[0].mxu0 %v6498
        %v6701 = vpop.f32.mrb[0].mxu0
        %v6702 = vadd.f32 %v6561, %v6701
        %v6703 = vpop.f32.mrb[0].mxu0
        %v6704 = vpop.f32.mrb[0].mxu0
        %v6705 = vadd.f32 %v6561, %v6704
        %v6706 = vpop.f32.mrb[0].mxu0
        %6707 = vmatprep.mubr.bf16.mxu0 0
        %6708 = vmatmul.mubr.bf16.gmra.mrb[0].mxu0 %v6499
        %v6709 = vpop.f32.mrb[0].mxu0
        %v6710 = vadd.f32 %v6561, %v6709
        %v6711 = vpop.f32.mrb[0].mxu0
        %v6712 = vpop.f32.mrb[0].mxu0
        %v6713 = vadd.f32 %v6561, %v6712
        %v6714 = vpop.f32.mrb[0].mxu0
        %6715 = vmatprep.mubr.bf16.mxu0 0
        %6716 = vmatmul.mubr.bf16.gmra.mrb[0].mxu0 %v6500
        %v6717 = vpop.f32.mrb[0].mxu0
        %v6718 = vadd.f32 %v6561, %v6717
        %v6719 = vpop.f32.mrb[0].mxu0
        %v6720 = vpop.f32.mrb[0].mxu0
        %v6721 = vadd.f32 %v6561, %v6720
        %v6722 = vpop.f32.mrb[0].mxu0
        %6723 = vmatprep.mubr.bf16.mxu0 0
        %6724 = vmatmul.mubr.bf16.gmra.mrb[0].mxu0 %v6501
        %v6725 = vpop.f32.mrb[0].mxu0
        %v6726 = vadd.f32 %v6561, %v6725
        %v6727 = vpop.f32.mrb[0].mxu0
        %v6728 = vpop.f32.mrb[0].mxu0
        %v6729 = vadd.f32 %v6561, %v6728
        %v6730 = vpop.f32.mrb[0].mxu0
        %6731 = vmatprep.mubr.bf16.mxu0 0
        %6732 = vmatmul.mubr.bf16.gmra.mrb[0].mxu0 %v6502
        %v6733 = vpop.f32.mrb[0].mxu0
        %v6734 = vadd.f32 %v6561, %v6733
        %v6735 = vpop.f32.mrb[0].mxu0
        %v6736 = vpop.f32.mrb[0].mxu0
        %v6737 = vadd.f32 %v6561, %v6736
        %v6738 = vpop.f32.mrb[0].mxu0
        %6739 = vmatprep.mubr.bf16.mxu0 0
        %6740 = vmatmul.mubr.bf16.gmra.mrb[0].mxu0 %v6503
        %v6741 = vpop.f32.mrb[0].mxu0
        %v6742 = vadd.f32 %v6561, %v6741
        %v6743 = vpop.f32.mrb[0].mxu0
        %v6744 = vpop.f32.mrb[0].mxu0
        %v6745 = vadd.f32 %v6561, %v6744
        %v6746 = vpop.f32.mrb[0].mxu0
        %6747 = vmatprep.mubr.bf16.mxu0 0
        %6748 = vmatmul.mubr.bf16.gmra.mrb[0].mxu0 %v6504
        %v6749 = vpop.f32.mrb[0].mxu0
        %v6750 = vadd.f32 %v6561, %v6749
        %v6751 = vpop.f32.mrb[0].mxu0
        %v6752 = vpop.f32.mrb[0].mxu0
        %v6753 = vadd.f32 %v6561, %v6752
        %v6754 = vpop.f32.mrb[0].mxu0
        %6755 = vmatprep.mubr.bf16.mxu0 0
        %6756 = vmatmul.mubr.bf16.gmra.mrb[0].mxu0 %v6505
        %v6757 = vpop.f32.mrb[0].mxu0
        %v6758 = vadd.f32 %v6561, %v6757
        %v6759 = vpop.f32.mrb[0].mxu0
        %v6760 = vpop.f32.mrb[0].mxu0
        %v6761 = vadd.f32 %v6561, %v6760
        %v6762 = vpop.f32.mrb[0].mxu0
        %6763 = vmatprep.mubr.bf16.mxu0 0
        %6764 = vmatmul.mubr.bf16.gmra.mrb[0].mxu0 %v6506
        %v6765 = vpop.f32.mrb[0].mxu0
        %v6766 = vadd.f32 %v6561, %v6765
        %v6767 = vpop.f32.mrb[0].mxu0
        %v6768 = vpop.f32.mrb[0].mxu0
        %v6769 = vadd.f32 %v6561, %v6768
        %v6770 = vpop.f32.mrb[0].mxu0
        %6771 = vdwg.mxu0
        %v6772 = vadd.f32 %v6646, %v6524
        %v6773 = vadd.f32 %v6649, %v6525
        %v6774 = vadd.f32 %v6654, %v6526
        %v6775 = vadd.f32 %v6657, %v6527
        %v6776 = vadd.f32 %v6662, %v6528
        %v6777 = vadd.f32 %v6665, %v6529
        %v6778 = vadd.f32 %v6670, %v6530
        %v6779 = vadd.f32 %v6673, %v6531
        %v6780 = vadd.f32 %v6678, %v6532
        %v6781 = vadd.f32 %v6681, %v6533
        %v6782 = vadd.f32 %v6686, %v6534
        %v6783 = vadd.f32 %v6689, %v6535
        %v6784 = vadd.f32 %v6694, %v6536
        %v6785 = vadd.f32 %v6697, %v6537
        %v6786 = vadd.f32 %v6702, %v6538
        %v6787 = vadd.f32 %v6705, %v6539
        %v6788 = vadd.f32 %v6710, %v6540
        %v6789 = vadd.f32 %v6713, %v6541
        %v6790 = vadd.f32 %v6718, %v6542
        %v6791 = vadd.f32 %v6721, %v6543
        %v6792 = vadd.f32 %v6726, %v6544
        %v6793 = vadd.f32 %v6729, %v6545
        %v6794 = vadd.f32 %v6734, %v6546
        %v6795 = vadd.f32 %v6737, %v6547
        %v6796 = vadd.f32 %v6742, %v6548
        %v6797 = vadd.f32 %v6745, %v6549
        %v6798 = vadd.f32 %v6750, %v6550
        %v6799 = vadd.f32 %v6753, %v6551
        %v6800 = vadd.f32 %v6758, %v6552
        %v6801 = vadd.f32 %v6761, %v6553
        %v6802 = vadd.f32 %v6766, %v6554
        %v6803 = vadd.f32 %v6769, %v6555
        %v6804 = vmax.f32 %v6772, 0.0
        %v6805 = vmax.f32 %v6773, 0.0
        %v6806 = vmax.f32 %v6774, 0.0
        %v6807 = vmax.f32 %v6775, 0.0
        %v6808 = vmax.f32 %v6776, 0.0
        %v6809 = vmax.f32 %v6777, 0.0
        %v6810 = vmax.f32 %v6778, 0.0
        %v6811 = vmax.f32 %v6779, 0.0
        %v6812 = vmax.f32 %v6780, 0.0
        %v6813 = vmax.f32 %v6781, 0.0
        %v6814 = vmax.f32 %v6782, 0.0
        %v6815 = vmax.f32 %v6783, 0.0
        %v6816 = vmax.f32 %v6784, 0.0
        %v6817 = vmax.f32 %v6785, 0.0
        %v6818 = vmax.f32 %v6786, 0.0
        %v6819 = vmax.f32 %v6787, 0.0
        %v6820 = vmax.f32 %v6788, 0.0
        %v6821 = vmax.f32 %v6789, 0.0
        %v6822 = vmax.f32 %v6790, 0.0
        %v6823 = vmax.f32 %v6791, 0.0
        %v6824 = vmax.f32 %v6792, 0.0
        %v6825 = vmax.f32 %v6793, 0.0
        %v6826 = vmax.f32 %v6794, 0.0
        %v6827 = vmax.f32 %v6795, 0.0
        %v6828 = vmax.f32 %v6796, 0.0
        %v6829 = vmax.f32 %v6797, 0.0
        %v6830 = vmax.f32 %v6798, 0.0
        %v6831 = vmax.f32 %v6799, 0.0
        %v6832 = vmax.f32 %v6800, 0.0
        %v6833 = vmax.f32 %v6801, 0.0
        %v6834 = vmax.f32 %v6802, 0.0
        %v6835 = vmax.f32 %v6803, 0.0
        %6836 = vst [vmem:[%s358] sm:$0xff] %v6804
        %6837 = vst [vmem:[%s358 + $0x8] sm:$0xff] %v6805
        %6838 = vst [vmem:[%s358 + $0x10] sm:$0xff] %v6806
        %6839 = vst [vmem:[%s358 + $0x18] sm:$0xff] %v6807
        %6840 = vst [vmem:[%s358 + $0x20] sm:$0xff] %v6808
        %6841 = vst [vmem:[%s358 + $0x28] sm:$0xff] %v6809
        %6842 = vst [vmem:[%s358 + $0x30] sm:$0xff] %v6810
        %6843 = vst [vmem:[%s358 + $0x38] sm:$0xff] %v6811
        %6844 = vst [vmem:[%s358 + $0x40] sm:$0xff] %v6812
        %6845 = vst [vmem:[%s358 + $0x48] sm:$0xff] %v6813
        %6846 = vst [vmem:[%s358 + $0x50] sm:$0xff] %v6814
        %6847 = vst [vmem:[%s358 + $0x58] sm:$0xff] %v6815
        %6848 = vst [vmem:[%s358 + $0x60] sm:$0xff] %v6816
        %6849 = vst [vmem:[%s358 + $0x68] sm:$0xff] %v6817
        %6850 = vst [vmem:[%s358 + $0x70] sm:$0xff] %v6818
        %6851 = vst [vmem:[%s358 + $0x78] sm:$0xff] %v6819
        %6852 = vst [vmem:[%s358 + $0x80] sm:$0xff] %v6820
        %6853 = vst [vmem:[%s358 + $0x88] sm:$0xff] %v6821
        %6854 = vst [vmem:[%s358 + $0x90] sm:$0xff] %v6822
        %6855 = vst [vmem:[%s358 + $0x98] sm:$0xff] %v6823
        %6856 = vst [vmem:[%s358 + $0xa0] sm:$0xff] %v6824
        %6857 = vst [vmem:[%s358 + $0xa8] sm:$0xff] %v6825
        %6858 = vst [vmem:[%s358 + $0xb0] sm:$0xff] %v6826
        %6859 = vst [vmem:[%s358 + $0xb8] sm:$0xff] %v6827
        %6860 = vst [vmem:[%s358 + $0xc0] sm:$0xff] %v6828
        %6861 = vst [vmem:[%s358 + $0xc8] sm:$0xff] %v6829
        %6862 = vst [vmem:[%s358 + $0xd0] sm:$0xff] %v6830
        %6863 = vst [vmem:[%s358 + $0xd8] sm:$0xff] %v6831
        %6864 = vst [vmem:[%s358 + $0xe0] sm:$0xff] %v6832
        %6865 = vst [vmem:[%s358 + $0xe8] sm:$0xff] %v6833
        %6866 = vst [vmem:[%s358 + $0xf0] sm:$0xff] %v6834
        %6867 = vst [vmem:[%s358 + $0xf8] sm:$0xff] %v6835
        %s6868 = sand.u32 %s202, 1
        %s6869 = scalar_lea.sflag [#allocation5], %s6868
        %s6870 = sand.u32 %s202, 1
        %s6871 = smul.addr %s6870, 256
        %s6872 = scalar_lea.vmem [#allocation11], %s6871
        // Predicated region
        $region65: #{tpu_custom_call.1} parent=47 // pred_check
          %p6873 = pneg %p212
        $region66: #{tpu_custom_call.1} parent=47 // pred_check_branch
          %6875 = sbr.rel (%p6873) target = $region68
        $region67: #{tpu_custom_call.1} parent=47 // pred_region
          %s6876 = smul.u32 16, %s31
          %s6878 = ssub.s32 4096, 4096
          %6879 = vsyncadd %s6869, %s6878
          %s6880 = smul.addr %s6876, 2
          %s6881 = smul.addr %s30, 32
          %s6882 = sadd.s32 %s6880, %s6881
          %s6883 = smul.addr %s6882, 128
          %s6884 = scalar_lea.hbm %s7, %s6883
          %s6885 = sshll.u32 %s6872, 4
          %s6886 = int_to_ptr.vmem [resolvable:$true] %s6885
          %6891 = dma.vmem_to_hbm [thread:$0]  %s6886, 4096, %s6884, %s6869, 128, 128, 8
        $region68: #{tpu_custom_call.1} parent=47 // pred_fallthru
          _
      $region48: #{tpu_custom_call.1} parent=5 // pred_fallthru
        _
      %p6892 = scmp.le.s32.totalorder 2, %s21
      // Predicated region
      $region69: #{tpu_custom_call.1} parent=5 // pred_check
        %p6893 = pneg %p6892
      $region70: #{tpu_custom_call.1} parent=5 // pred_check_branch
        %6895 = sbr.rel (%p6893) target = $region72
      $region71: #{tpu_custom_call.1} parent=5 // pred_region
        %s6896 = ssub.s32 %s21, 2
        // Predicated region
        $region73: #{tpu_custom_call.1} parent=71 // pred_check
          %p6897 = pneg %p218
        $region74: #{tpu_custom_call.1} parent=71 // pred_check_branch
          %6899 = sbr.rel (%p6897) target = $region76
        $region75: #{tpu_custom_call.1} parent=71 // pred_region
          %s6900 = sand.u32 %s203, 1
          %s6901 = scalar_lea.sflag [#allocation5], %s6900
          %s6902 = sand.u32 %s203, 1
          %s6903 = smul.addr %s6902, 256
          %s6904 = scalar_lea.vmem [#allocation11], %s6903
          %6905 = dma.done %s6901, 4096
        $region76: #{tpu_custom_call.1} parent=71 // pred_fallthru
          _
      $region72: #{tpu_custom_call.1} parent=5 // pred_fallthru
        _
    $region6: #{tpu_custom_call.1} parent=1 // loop_footer
      %s25 = sadd.s32 1, %s21
    $region7: #{tpu_custom_call.1} parent=1 // loop_footer_branch
      %20 = sbr.rel target = $region3
    $region8: #{tpu_custom_call.1} parent=1 // loop_exit
      _
    %6906 = vsyncpa [#allocation4], 1
    %s6907 = scalar_lea.sflag [#allocation4], 1
    %6908 = vsyncpa %s6907, 1
    %6909 = vsyncpa [#allocation7], 1
    %6910 = vsyncpa [#allocation10], 1
    %6911 = vsyncpa [#allocation5], 1
    %s6912 = scalar_lea.sflag [#allocation5], 1
    %6913 = vsyncpa %s6912, 1

</llo_original>
